<compile_context>
chip_gen: v6e
topology: v6e:2x2x1
jax: 0.10.0
libtpu: 0.0.40
codegen_flags: <defaults>
</compile_context>

<pallas_src>
import functools
import math

import numpy as np

import jax
import jax.numpy as jnp
from jax.experimental import pallas as pl
from jax.experimental.pallas import tpu as pltpu

_COMPUTE = jnp.bfloat16        # MXU operand dtype; accumulation is always f32
_EPS = 1e-5
_NT_DIMS = (((1,), (1,)), ((), ()))   # contract last dims of both operands (q @ k^T)


# ----------------------------------------------------------------------------
# Chip-aware tiling / VMEM budget
# ----------------------------------------------------------------------------
def _vmem_capacity_bytes():
    try:
        info = pltpu.get_tpu_info()
        cap = getattr(info, "vmem_capacity_bytes", None)
        if cap:
            return int(cap)
    except Exception:
        pass
    return 64 * 1024 * 1024           # conservative default (v7x per-TC)


_VMEM_CAP = _vmem_capacity_bytes()
if _VMEM_CAP >= 100 * 1024 * 1024:    # v5e / v6e: 128 MiB physical VMEM
    _ROW_CAP = 1024
    _VMEM_LIMIT = 96 * 1024 * 1024
else:                                 # v7x: 64 MiB per TensorCore
    _ROW_CAP = 256
    _VMEM_LIMIT = 48 * 1024 * 1024

# All grids are 1-D (batch or row tiles) and fully parallel -> both TCs on v7x.
_CP1 = pltpu.CompilerParams(dimension_semantics=("parallel",),
                            vmem_limit_bytes=_VMEM_LIMIT)


def _round_up(x, m):
    return ((x + m - 1) // m) * m


def _choose_tile(rows):
    """Row tile that divides `rows` exactly (no XLA pad/slice around the call).
    Returns None if no exact multiple-of-8 divisor <= cap exists."""
    if rows <= _ROW_CAP:
        return rows                   # single full-extent tile
    for t in range(_ROW_CAP - (_ROW_CAP % 8), 7, -8):
        if rows % t == 0:
            return t
    return None


def _pad_rows(x2, tm):
    r = x2.shape[0]
    rp = _round_up(r, tm)
    if rp != r:
        x2 = jnp.pad(x2, ((0, rp - r), (0, 0)))
    return x2, r, rp


# ----------------------------------------------------------------------------
# In-kernel math helpers (pure jnp/lax; _erf/_gelu use pl.reciprocal -> kernel only)
# ----------------------------------------------------------------------------
def _layernorm_f32(x, g, b):
    mu = jnp.mean(x, axis=-1, keepdims=True)
    var = jnp.mean(jnp.square(x - mu), axis=-1, keepdims=True)
    return (x - mu) * jax.lax.rsqrt(var + _EPS) * g + b


def _erf(x):
    # Abramowitz & Stegun 7.1.26 (|err| < 1.5e-7): exact-GELU parity (PyTorch
    # nn.GELU default).  The divide runs on the EUP slot via pl.reciprocal.
    a1, a2, a3, a4, a5 = 0.254829592, -0.284496736, 1.421413741, -1.453152027, 1.061405429
    p = 0.3275911
    sgn = jnp.where(x < 0.0, -1.0, 1.0)
    ax = jnp.abs(x)
    t = pl.reciprocal(1.0 + p * ax, approx=True)
    poly = ((((a5 * t + a4) * t + a3) * t + a2) * t + a1) * t
    return sgn * (1.0 - poly * jnp.exp(-ax * ax))


def _gelu_exact(x):
    return 0.5 * x * (1.0 + _erf(x * 0.7071067811865476))


def _attn_heads(q, k, v, *, num_heads):
    """q:(Nq,D) (already scaled at weight-fusion time), k,v:(Nk,D) f32 ->
    (Nq,D) f32.  All heads of one batch element in a single grid step; heads
    are unrolled lane slices of the fused projection (no head transposes);
    output is assembled lane-dense before one store."""
    d = q.shape[-1]
    hd = d // num_heads
    qs = q.astype(_COMPUTE)
    ks = k.astype(_COMPUTE)
    vs = v.astype(_COMPUTE)
    outs = []
    for h in range(num_heads):          # static unroll; tiles stay VMEM-resident
        sl = slice(h * hd, (h + 1) * hd)
        s = jax.lax.dot_general(qs[:, sl], ks[:, sl], _NT_DIMS,
                                preferred_element_type=jnp.float32)
        s = s - jnp.max(s, axis=-1, keepdims=True)
        p = jnp.exp(s)
        p = p * pl.reciprocal(jnp.sum(p, axis=-1, keepdims=True), approx=True)
        outs.append(jnp.dot(p.astype(_COMPUTE), vs[:, sl],
                            preferred_element_type=jnp.float32))
    # TODO(synk): MXU under-fill when head_dim < 128/256; head-packing along the
    # PV N dimension is not implemented (attention is not the dominant cost here).
    return jnp.concatenate(outs, axis=-1)


# ----------------------------------------------------------------------------
# Pallas kernels
# ----------------------------------------------------------------------------
def _cross_block_kernel(emb_ref, q_ref, lat_ref, g_ref, b_ref, wkv_ref, bkv_ref,
                        wo_ref, bo_ref, o_ref, *, num_heads):
    # One batch element: LN_kv -> KV projection -> cross-attn -> out-proj + latent
    # residual.  kv / ctx never touch HBM.
    emb = emb_ref[0].astype(jnp.float32)                  # (S, D)
    d = emb.shape[-1]
    en = _layernorm_f32(emb, g_ref[...], b_ref[...])
    kv = jnp.dot(en.astype(_COMPUTE), wkv_ref[...],
                 preferred_element_type=jnp.float32) + bkv_ref[...]
    ctx = _attn_heads(q_ref[...], kv[:, :d], kv[:, d:], num_heads=num_heads)
    a = jnp.dot(ctx.astype(_COMPUTE), wo_ref[...],
                preferred_element_type=jnp.float32) + bo_ref[...]
    o_ref[0] = (lat_ref[...] + a).astype(o_ref.dtype)


def _self_block_kernel(x_ref, g1_ref, b1_ref, wqkv_ref, bqkv_ref, wo_ref, bo_ref,
                       o_ref, *, num_heads):
    # One batch element: LN1 -> fused QKV projection -> attention -> out-proj +
    # residual.  qkv / ctx never touch HBM.
    x = x_ref[0].astype(jnp.float32)                      # (Nl, D)
    d = x.shape[-1]
    xn = _layernorm_f32(x, g1_ref[...], b1_ref[...])
    qkv = jnp.dot(xn.astype(_COMPUTE), wqkv_ref[...],
                  preferred_element_type=jnp.float32) + bqkv_ref[...]
    ctx = _attn_heads(qkv[:, :d], qkv[:, d:2 * d], qkv[:, 2 * d:],
                      num_heads=num_heads)
    a = jnp.dot(ctx.astype(_COMPUTE), wo_ref[...],
                preferred_element_type=jnp.float32) + bo_ref[...]
    o_ref[0] = (x + a).astype(o_ref.dtype)


def _ln_mlp_resid_kernel(x_ref, g_ref, b_ref, w1_ref, b1_ref, w2_ref, b2_ref, o_ref):
    # out = x + W2 @ gelu(W1 @ LayerNorm(x))     (exact-erf GELU)
    x = x_ref[...].astype(jnp.float32)
    xn = _layernorm_f32(x, g_ref[...], b_ref[...])
    h = jnp.dot(xn.astype(_COMPUTE), w1_ref[...],
                preferred_element_type=jnp.float32) + b1_ref[...]
    h = _gelu_exact(h)
    y = jnp.dot(h.astype(_COMPUTE), w2_ref[...],
                preferred_element_type=jnp.float32) + b2_ref[...]
    o_ref[...] = (x + y).astype(o_ref.dtype)


def _dual_decoder_kernel(x_ref,
                         qa_ref, ga_ref, ba_ref, wkva_ref, bkva_ref, woa_ref, boa_ref, wha_ref, bha_ref,
                         qb_ref, gb_ref, bb_ref, wkvb_ref, bkvb_ref, wob_ref, bob_ref, whb_ref, bhb_ref,
                         oa_ref, ob_ref, *, num_heads):
    # Both TaskDecoders (clf + reg) for one batch element in a single kernel:
    # LN(latents) -> KV projection -> 1-query cross-attn -> out-proj -> head.
    x = x_ref[0].astype(jnp.float32)          # (Nl, D)
    d = x.shape[-1]

    def one(q_ref, g_ref, b_ref, wkv_ref, bkv_ref, wo_ref, bo_ref, wh_ref, bh_ref, out_ref):
        xn = _layernorm_f32(x, g_ref[...], b_ref[...])
        kv = jnp.dot(xn.astype(_COMPUTE), wkv_ref[...],
                     preferred_element_type=jnp.float32) + bkv_ref[...]
        ctx = _attn_heads(q_ref[...].astype(jnp.float32), kv[:, :d], kv[:, d:],
                          num_heads=num_heads)                  # (1, D)
        a = jnp.dot(ctx.astype(_COMPUTE), wo_ref[...],
                    preferred_element_type=jnp.float32) + bo_ref[...]
        y = jnp.dot(a.astype(_COMPUTE), wh_ref[...],
                    preferred_element_type=jnp.float32) + bh_ref[...]
        out_ref[0] = y.astype(out_ref.dtype)

    one(qa_ref, ga_ref, ba_ref, wkva_ref, bkva_ref, woa_ref, boa_ref, wha_ref, bha_ref, oa_ref)
    one(qb_ref, gb_ref, bb_ref, wkvb_ref, bkvb_ref, wob_ref, bob_ref, whb_ref, bhb_ref, ob_ref)


# ----------------------------------------------------------------------------
# pallas_call wrappers
# ----------------------------------------------------------------------------
def cross_block(emb, q_lat, latents, pc, *, num_heads):
    """Fused encoder cross-attention block: (B,S,D) emb + (Nl,D) latent queries
    -> (B,Nl,D) residual stream (latents + ctx @ Wo)."""
    B, S, D = emb.shape
    Nl = latents.shape[0]
    return pl.pallas_call(
        functools.partial(_cross_block_kernel, num_heads=num_heads),
        grid=(B,),
        out_shape=jax.ShapeDtypeStruct((B, Nl, D), jnp.float32),
        in_specs=[pl.BlockSpec((1, S, D), lambda b: (b, 0, 0)),
                  pl.BlockSpec((Nl, D), lambda b: (0, 0)),
                  pl.BlockSpec((Nl, D), lambda b: (0, 0)),
                  pl.BlockSpec((1, D), lambda b: (0, 0)),
                  pl.BlockSpec((1, D), lambda b: (0, 0)),
                  pl.BlockSpec((D, 2 * D), lambda b: (0, 0)),
                  pl.BlockSpec((1, 2 * D), lambda b: (0, 0)),
                  pl.BlockSpec((D, D), lambda b: (0, 0)),
                  pl.BlockSpec((1, D), lambda b: (0, 0))],
        out_specs=pl.BlockSpec((1, Nl, D), lambda b: (b, 0, 0)),
        compiler_params=_CP1,
    )(emb, q_lat, latents, pc["ln_kv"][0], pc["ln_kv"][1],
      pc["w_kv"], pc["b_kv"], pc["wo"], pc["bo"])


def self_block(x, lp, *, num_heads):
    """Fused self-attention block: x -> x + attn(LN1(x)) @ Wo, grid over batch."""
    B, Nl, D = x.shape
    return pl.pallas_call(
        functools.partial(_self_block_kernel, num_heads=num_heads),
        grid=(B,),
        out_shape=jax.ShapeDtypeStruct((B, Nl, D), jnp.float32),
        in_specs=[pl.BlockSpec((1, Nl, D), lambda b: (b, 0, 0)),
                  pl.BlockSpec((1, D), lambda b: (0, 0)),
                  pl.BlockSpec((1, D), lambda b: (0, 0)),
                  pl.BlockSpec((D, 3 * D), lambda b: (0, 0)),
                  pl.BlockSpec((1, 3 * D), lambda b: (0, 0)),
                  pl.BlockSpec((D, D), lambda b: (0, 0)),
                  pl.BlockSpec((1, D), lambda b: (0, 0))],
        out_specs=pl.BlockSpec((1, Nl, D), lambda b: (b, 0, 0)),
        compiler_params=_CP1,
    )(x, lp["ln1"][0], lp["ln1"][1], lp["w_qkv"], lp["b_qkv"], lp["wo"], lp["bo"])


def ln_mlp_residual(x, ln, mlp_p):
    """out = x + MLP(LayerNorm(x)), row-tiled over all B*N rows (exact GELU)."""
    g, be = ln
    lead = x.shape[:-1]
    d = x.shape[-1]
    dh = mlp_p["w1"].shape[1]
    x2 = x.reshape(-1, d)
    rows = x2.shape[0]
    tm = _choose_tile(rows)
    if tm is None:                      # fallback only: pad to a tile multiple
        tm = min(_ROW_CAP, _round_up(rows, 8))
        x2, r, rp = _pad_rows(x2, tm)
    else:
        r, rp = rows, rows
    out = pl.pallas_call(
        _ln_mlp_resid_kernel,
        grid=(rp // tm,),
        out_shape=jax.ShapeDtypeStruct((rp, d), jnp.float32),
        in_specs=[pl.BlockSpec((tm, d), lambda i: (i, 0)),
                  pl.BlockSpec((1, d), lambda i: (0, 0)),
                  pl.BlockSpec((1, d), lambda i: (0, 0)),
                  pl.BlockSpec((d, dh), lambda i: (0, 0)),
                  pl.BlockSpec((1, dh), lambda i: (0, 0)),
                  pl.BlockSpec((dh, d), lambda i: (0, 0)),
                  pl.BlockSpec((1, d), lambda i: (0, 0))],
        out_specs=pl.BlockSpec((tm, d), lambda i: (i, 0)),
        compiler_params=_CP1,
    )(x2, g, be, mlp_p["w1"], mlp_p["b1"], mlp_p["w2"], mlp_p["b2"])
    if rp != r:
        out = out[:r]
    return out.reshape(*lead, d)


def _dec_in_specs(d, n_out):
    def full(shape):
        return pl.BlockSpec(shape, lambda b: (0,) * len(shape))
    return [full((1, d)), full((1, d)), full((1, d)),
            full((d, 2 * d)), full((1, 2 * d)),
            full((d, d)), full((1, d)),
            full((d, n_out)), full((1, n_out))]


def decode_both(latents, dec_a, dec_b, *, num_heads):
    """Both TaskDecoders in one fused pallas_call (one batch element per step)."""
    B, Nl, d = latents.shape

    def query_proj(dec):
        # learned (1, D) query: LN + projection are input-independent -> plain JAX;
        # 1/sqrt(head_dim) is already folded into wq / bq.
        q = _layernorm_f32(dec["query"], dec["ln_q"][0], dec["ln_q"][1])
        return q @ dec["wq"] + dec["bq"]          # (1, D) f32

    def dec_args(dec):
        g, be = dec["ln_kv"]
        return (query_proj(dec), g, be, dec["w_kv"], dec["b_kv"],
                dec["wo"], dec["bo"], dec["w_out"], dec["b_out"])

    na = dec_a["w_out"].shape[1]
    nb = dec_b["w_out"].shape[1]
    out_a, out_b = pl.pallas_call(
        functools.partial(_dual_decoder_kernel, num_heads=num_heads),
        grid=(B,),
        out_shape=(jax.ShapeDtypeStruct((B, 1, na), jnp.float32),
                   jax.ShapeDtypeStruct((B, 1, nb), jnp.float32)),
        in_specs=[pl.BlockSpec((1, Nl, d), lambda b: (b, 0, 0))]
                 + _dec_in_specs(d, na) + _dec_in_specs(d, nb),
        out_specs=(pl.BlockSpec((1, 1, na), lambda b: (b, 0, 0)),
                   pl.BlockSpec((1, 1, nb), lambda b: (b, 0, 0))),
        compiler_params=_CP1,
    )(latents, *dec_args(dec_a), *dec_args(dec_b))
    return out_a[:, 0, :], out_b[:, 0, :]


# ----------------------------------------------------------------------------
# Parameter construction (deterministic, mirrors the torch module) + fusion
# ----------------------------------------------------------------------------
def sinusoids(length, channels, max_timescale=512):
    assert channels % 2 == 0
    log_ts = np.log(max_timescale) / (channels // 2 - 1)
    inv = np.exp(-log_ts * np.arange(channels // 2))
    scaled = np.arange(length)[:, None] * inv[None, :]
    return jnp.asarray(np.concatenate([np.sin(scaled), np.cos(scaled)], axis=1),
                       dtype=jnp.float32)


class KeyGen:
    def __init__(self, key):
        self.key = key

    def __call__(self):
        self.key, k = jax.random.split(self.key)
        return k


def _init_attn(kg, d):
    def lin():
        return 0.02 * jax.random.normal(kg(), (d, d), jnp.float32), jnp.zeros((d,), jnp.float32)
    wq, bq = lin(); wk, bk = lin(); wv, bv = lin(); wo, bo = lin()
    return dict(wq=wq, bq=bq, wk=wk, bk=bk, wv=wv, bv=bv, wo=wo, bo=bo)


def _init_mlp(kg, d, dh):
    return dict(
        w1=0.02 * jax.random.normal(kg(), (d, dh), jnp.float32), b1=jnp.zeros((dh,), jnp.float32),
        w2=0.02 * jax.random.normal(kg(), (dh, d), jnp.float32), b2=jnp.zeros((d,), jnp.float32),
    )


def _init_ln(d):
    return (jnp.ones((d,), jnp.float32), jnp.zeros((d,), jnp.float32))


def init_params(key, *, n_bins, seq_len, latent_dim, num_latents, num_heads,
                num_self_layers, mlp_widening, n_clf, n_reg):
    del num_heads
    kg = KeyGen(key)
    d = latent_dim
    dh = mlp_widening * d

    params = dict(
        token_emb=0.02 * jax.random.normal(kg(), (n_bins, d), jnp.float32),
        pos_emb=sinusoids(seq_len, d),
        latents=0.02 * jax.random.normal(kg(), (num_latents, d), jnp.float32),
        enc_cross=dict(ln_q=_init_ln(d), ln_kv=_init_ln(d), attn=_init_attn(kg, d),
                       ln_mlp=_init_ln(d), mlp=_init_mlp(kg, d, dh)),
        enc_self=[dict(ln1=_init_ln(d), attn=_init_attn(kg, d),
                       ln2=_init_ln(d), mlp=_init_mlp(kg, d, dh))
                  for _ in range(num_self_layers)],
    )

    def init_decoder(n_out):
        return dict(
            query=0.02 * jax.random.normal(kg(), (1, d), jnp.float32),
            ln_q=_init_ln(d), ln_kv=_init_ln(d), attn=_init_attn(kg, d),
            w_out=0.02 * jax.random.normal(kg(), (d, n_out), jnp.float32),
            b_out=jnp.zeros((n_out,), jnp.float32),
        )

    params["dec_clf"] = init_decoder(n_clf)
    params["dec_reg"] = init_decoder(n_reg)
    return params


def fuse_params(p, *, num_heads):
    """One-time preprocessing: concat Q|K|V / K|V projection weights, fold the
    1/sqrt(head_dim) query scale into wq/bq, pre-cast matmul weights to bf16,
    reshape biases / LN params to (1, D) rows."""
    bf = lambda w: w.astype(_COMPUTE)
    row = lambda v: v.reshape(1, -1)
    ln = lambda t: (row(t[0]), row(t[1]))
    d = p["latents"].shape[1]
    scale = 1.0 / math.sqrt(d // num_heads)

    def mlp(m):
        return dict(w1=bf(m["w1"]), b1=row(m["b1"]), w2=bf(m["w2"]), b2=row(m["b2"]))

    c = p["enc_cross"]; a = c["attn"]
    enc_cross = dict(
        ln_q=ln(c["ln_q"]), ln_kv=ln(c["ln_kv"]),
        wq=a["wq"] * scale, bq=row(a["bq"] * scale),   # f32, tiny batch-independent JAX path
        w_kv=bf(jnp.concatenate([a["wk"], a["wv"]], axis=1)),
        b_kv=row(jnp.concatenate([a["bk"], a["bv"]])),
        wo=bf(a["wo"]), bo=row(a["bo"]),
        ln_mlp=ln(c["ln_mlp"]), mlp=mlp(c["mlp"]),
    )

    enc_self = []
    for lp in p["enc_self"]:
        a = lp["attn"]
        enc_self.append(dict(
            ln1=ln(lp["ln1"]),
            w_qkv=bf(jnp.concatenate([a["wq"] * scale, a["wk"], a["wv"]], axis=1)),
            b_qkv=row(jnp.concatenate([a["bq"] * scale, a["bk"], a["bv"]])),
            wo=bf(a["wo"]), bo=row(a["bo"]),
            ln2=ln(lp["ln2"]), mlp=mlp(lp["mlp"]),
        ))

    def dec(dp):
        a = dp["attn"]
        return dict(
            query=dp["query"],                 # (1, D) f32; tiny JAX-side path
            ln_q=ln(dp["ln_q"]), wq=a["wq"] * scale, bq=row(a["bq"] * scale),
            ln_kv=ln(dp["ln_kv"]),
            w_kv=bf(jnp.concatenate([a["wk"], a["wv"]], axis=1)),
            b_kv=row(jnp.concatenate([a["bk"], a["bv"]])),
            wo=bf(a["wo"]), bo=row(a["bo"]),
            w_out=bf(dp["w_out"]), b_out=row(dp["b_out"]),
        )

    return dict(
        token_emb=p["token_emb"], pos_emb=p["pos_emb"], latents=p["latents"],
        enc_cross=enc_cross, enc_self=enc_self,
        dec_clf=dec(p["dec_clf"]), dec_reg=dec(p["dec_reg"]),
    )


# ----------------------------------------------------------------------------
# SASPerceiverIO forward
# ----------------------------------------------------------------------------
def sas_perceiver_io_forward(fp, inputs, *, num_heads):
    """inputs: int32 token ids (B, S).  Returns (clf_logits, reg_outputs)."""
    B, S = inputs.shape
    Nl, D = fp["latents"].shape

    # TokenAndPositionEmbedding (gather stays in JAX; torch .squeeze() is a no-op here)
    emb = jnp.take(fp["token_emb"], inputs, axis=0) + fp["pos_emb"][None]

    # ---- PerceiverEncoder: learned latents cross-attend over the embedded input ----
    pc = fp["enc_cross"]
    # latent query path is batch-independent -> computed once, shared across batch
    # (scale already folded into wq/bq)
    q_lat = _layernorm_f32(fp["latents"], pc["ln_q"][0], pc["ln_q"][1]) @ pc["wq"] + pc["bq"]
    x = cross_block(emb, q_lat, fp["latents"], pc, num_heads=num_heads)   # (B, Nl, D)
    x = ln_mlp_residual(x, pc["ln_mlp"], pc["mlp"])

    # ---- self-attention tower over latents ----
    for lp in fp["enc_self"]:
        x = self_block(x, lp, num_heads=num_heads)
        x = ln_mlp_residual(x, lp["ln2"], lp["mlp"])

    # ---- TaskDecoders (clf + reg fused into a single kernel) ----
    clf, reg = decode_both(x, fp["dec_clf"], fp["dec_reg"], num_heads=num_heads)
    return clf, reg
    # TODO(synk): input_mask / query_mask are None in this synthetic run; masked
    # attention (additive bias inside _attn_heads) is not exercised here.


# ----------------------------------------------------------------------------
# Demo
# ----------------------------------------------------------------------------
if __name__ == "__main__":
    # small config consistent with the module (original: n_bins=256, seq_len=511)
    B, S = 2, 8
    N_BINS = 16
    LATENT_DIM = 32
    NUM_LATENTS = 16
    NUM_HEADS = 4
    NUM_SELF_LAYERS = 2
    MLP_WIDENING = 2
    N_CLF, N_REG = 5, 6

    key = jax.random.PRNGKey(0)
    k_params, k_inputs = jax.random.split(key)

    params = init_params(
        k_params, n_bins=N_BINS, seq_len=S, latent_dim=LATENT_DIM,
        num_latents=NUM_LATENTS, num_heads=NUM_HEADS,
        num_self_layers=NUM_SELF_LAYERS, mlp_widening=MLP_WIDENING,
        n_clf=N_CLF, n_reg=N_REG,
    )
    fparams = fuse_params(params, num_heads=NUM_HEADS)   # QKV fusion + scale fold + bf16 cast

    inputs = jax.random.randint(k_inputs, (B, S), 0, N_BINS, dtype=jnp.int32)

    fwd = jax.jit(functools.partial(sas_perceiver_io_forward, num_heads=NUM_HEADS))
    clf_out, reg_out = fwd(fparams, inputs)
    jax.block_until_ready((clf_out, reg_out))

    assert clf_out.shape == (B, N_CLF) and reg_out.shape == (B, N_REG)
    assert bool(jnp.all(jnp.isfinite(clf_out))) and bool(jnp.all(jnp.isfinite(reg_out)))
    print("KERNEL_OK")
</pallas_src>

<mosaic_0001>
module attributes {stable_mosaic.version = 11 : i64} {
  func.func @_self_block_kernel(%arg0: i32, %arg1: memref<1x16x32xf32, #tpu.memory_space<vmem>>, %arg2: memref<1x32xf32, #tpu.memory_space<vmem>>, %arg3: memref<1x32xf32, #tpu.memory_space<vmem>>, %arg4: memref<32x96xbf16, #tpu.memory_space<vmem>>, %arg5: memref<1x96xf32, #tpu.memory_space<vmem>>, %arg6: memref<32x32xbf16, #tpu.memory_space<vmem>>, %arg7: memref<1x32xf32, #tpu.memory_space<vmem>>, %arg8: memref<1x16x32xf32, #tpu.memory_space<vmem>>) attributes {dimension_semantics = [#tpu.dimension_semantics<parallel>], iteration_bounds = array<i64: 2>, scalar_prefetch = 0 : i64, scratch_operands = 0 : i64, tpu.core_type = #tpu.core_type<tc>, window_params = [{transform_indices = @transform_0, window_bounds = array<i64: 1, 16, 32>}, {pipeline_mode = #tpu.pipeline_mode<synchronous>, transform_indices = @transform_1, window_bounds = array<i64: 1, 32>}, {pipeline_mode = #tpu.pipeline_mode<synchronous>, transform_indices = @transform_2, window_bounds = array<i64: 1, 32>}, {pipeline_mode = #tpu.pipeline_mode<synchronous>, transform_indices = @transform_3, window_bounds = array<i64: 32, 96>}, {pipeline_mode = #tpu.pipeline_mode<synchronous>, transform_indices = @transform_4, window_bounds = array<i64: 1, 96>}, {pipeline_mode = #tpu.pipeline_mode<synchronous>, transform_indices = @transform_5, window_bounds = array<i64: 32, 32>}, {pipeline_mode = #tpu.pipeline_mode<synchronous>, transform_indices = @transform_6, window_bounds = array<i64: 1, 32>}, {transform_indices = @transform_7, window_bounds = array<i64: 1, 16, 32>}]} {
    %c0 = arith.constant 0 : index
    %c0_0 = arith.constant 0 : index
    %c0_1 = arith.constant 0 : index
    %0 = vector.load %arg1[%c0, %c0_0, %c0_1] : memref<1x16x32xf32, #tpu.memory_space<vmem>>, vector<1x16x32xf32>
    %1 = vector.shape_cast %0 : vector<1x16x32xf32> to vector<16x32xf32>
    %c0_2 = arith.constant 0 : index
    %c0_3 = arith.constant 0 : index
    %2 = vector.load %arg2[%c0_2, %c0_3] : memref<1x32xf32, #tpu.memory_space<vmem>>, vector<1x32xf32>
    %c0_4 = arith.constant 0 : index
    %c0_5 = arith.constant 0 : index
    %3 = vector.load %arg3[%c0_4, %c0_5] : memref<1x32xf32, #tpu.memory_space<vmem>>, vector<1x32xf32>
    %cst = arith.constant dense<0.000000e+00> : vector<16xf32>
    %4 = vector.multi_reduction <add>, %1, %cst [1] : vector<16x32xf32> to vector<16xf32>
    %5 = vector.shape_cast %4 : vector<16xf32> to vector<16x1xf32>
    %cst_6 = arith.constant 3.200000e+01 : f32
    %6 = vector.broadcast %cst_6 : f32 to vector<16x1xf32>
    %7 = arith.divf %5, %6 : vector<16x1xf32>
    %8 = vector.broadcast %7 : vector<16x1xf32> to vector<16x32xf32>
    %9 = arith.subf %1, %8 : vector<16x32xf32>
    %10 = arith.mulf %9, %9 : vector<16x32xf32>
    %cst_7 = arith.constant dense<0.000000e+00> : vector<16xf32>
    %11 = vector.multi_reduction <add>, %10, %cst_7 [1] : vector<16x32xf32> to vector<16xf32>
    %12 = vector.shape_cast %11 : vector<16xf32> to vector<16x1xf32>
    %cst_8 = arith.constant 3.200000e+01 : f32
    %13 = vector.broadcast %cst_8 : f32 to vector<16x1xf32>
    %14 = arith.divf %12, %13 : vector<16x1xf32>
    %15 = vector.broadcast %7 : vector<16x1xf32> to vector<16x32xf32>
    %16 = arith.subf %1, %15 : vector<16x32xf32>
    %cst_9 = arith.constant 9.99999974E-6 : f32
    %17 = vector.broadcast %cst_9 : f32 to vector<16x1xf32>
    %18 = arith.addf %14, %17 : vector<16x1xf32>
    %19 = math.rsqrt %18 : vector<16x1xf32>
    %20 = vector.broadcast %19 : vector<16x1xf32> to vector<16x32xf32>
    %21 = arith.mulf %16, %20 : vector<16x32xf32>
    %22 = vector.broadcast %2 : vector<1x32xf32> to vector<16x32xf32>
    %23 = arith.mulf %21, %22 : vector<16x32xf32>
    %24 = vector.broadcast %3 : vector<1x32xf32> to vector<16x32xf32>
    %25 = arith.addf %23, %24 : vector<16x32xf32>
    %26 = arith.truncf %25 : vector<16x32xf32> to vector<16x32xbf16>
    %c0_10 = arith.constant 0 : index
    %c0_11 = arith.constant 0 : index
    %27 = vector.load %arg4[%c0_10, %c0_11] : memref<32x96xbf16, #tpu.memory_space<vmem>>, vector<32x96xbf16>
    %cst_12 = arith.constant dense<0.000000e+00> : vector<16x96xf32>
    %28 = tpu.matmul %26, %27, %cst_12 {dimension_numbers = #tpu.dot_dimension_numbers<[1], [0], [0], [1], [0, 0, 1, 1], [], []>} : vector<16x32xbf16>, vector<32x96xbf16>, vector<16x96xf32> -> vector<16x96xf32>
    %c0_13 = arith.constant 0 : index
    %c0_14 = arith.constant 0 : index
    %29 = vector.load %arg5[%c0_13, %c0_14] : memref<1x96xf32, #tpu.memory_space<vmem>>, vector<1x96xf32>
    %30 = vector.broadcast %29 : vector<1x96xf32> to vector<16x96xf32>
    %31 = arith.addf %28, %30 : vector<16x96xf32>
    %32 = vector.extract_strided_slice %31 {offsets = [0, 0], sizes = [16, 32], strides = [1, 1]} : vector<16x96xf32> to vector<16x32xf32>
    %33 = vector.extract_strided_slice %31 {offsets = [0, 32], sizes = [16, 32], strides = [1, 1]} : vector<16x96xf32> to vector<16x32xf32>
    %34 = vector.extract_strided_slice %31 {offsets = [0, 64], sizes = [16, 32], strides = [1, 1]} : vector<16x96xf32> to vector<16x32xf32>
    %35 = arith.truncf %32 : vector<16x32xf32> to vector<16x32xbf16>
    %36 = arith.truncf %33 : vector<16x32xf32> to vector<16x32xbf16>
    %37 = arith.truncf %34 : vector<16x32xf32> to vector<16x32xbf16>
    %38 = vector.extract_strided_slice %35 {offsets = [0, 0], sizes = [16, 8], strides = [1, 1]} : vector<16x32xbf16> to vector<16x8xbf16>
    %39 = vector.extract_strided_slice %36 {offsets = [0, 0], sizes = [16, 8], strides = [1, 1]} : vector<16x32xbf16> to vector<16x8xbf16>
    %cst_15 = arith.constant dense<0.000000e+00> : vector<16x16xf32>
    %40 = tpu.matmul %38, %39, %cst_15 {dimension_numbers = #tpu.dot_dimension_numbers<[1], [1], [0], [0], [0, 0, 1, 0], [], []>} : vector<16x8xbf16>, vector<16x8xbf16>, vector<16x16xf32> -> vector<16x16xf32>
    %cst_16 = arith.constant dense<0xFF800000> : vector<16xf32>
    %41 = vector.multi_reduction <maximumf>, %40, %cst_16 [1] : vector<16x16xf32> to vector<16xf32>
    %42 = vector.shape_cast %41 : vector<16xf32> to vector<16x1xf32>
    %43 = vector.broadcast %42 : vector<16x1xf32> to vector<16x16xf32>
    %44 = arith.subf %40, %43 : vector<16x16xf32>
    %45 = math.exp %44 : vector<16x16xf32>
    %cst_17 = arith.constant dense<0.000000e+00> : vector<16xf32>
    %46 = vector.multi_reduction <add>, %45, %cst_17 [1] : vector<16x16xf32> to vector<16xf32>
    %47 = vector.shape_cast %46 : vector<16xf32> to vector<16x1xf32>
    %48 = tpu.reciprocal %47 {approx = true} : vector<16x1xf32> -> vector<16x1xf32>
    %49 = vector.broadcast %48 : vector<16x1xf32> to vector<16x16xf32>
    %50 = arith.mulf %45, %49 : vector<16x16xf32>
    %51 = arith.truncf %50 : vector<16x16xf32> to vector<16x16xbf16>
    %52 = vector.extract_strided_slice %37 {offsets = [0, 0], sizes = [16, 8], strides = [1, 1]} : vector<16x32xbf16> to vector<16x8xbf16>
    %cst_18 = arith.constant dense<0.000000e+00> : vector<16x8xf32>
    %53 = tpu.matmul %51, %52, %cst_18 {dimension_numbers = #tpu.dot_dimension_numbers<[1], [0], [0], [1], [0, 0, 1, 1], [], []>} : vector<16x16xbf16>, vector<16x8xbf16>, vector<16x8xf32> -> vector<16x8xf32>
    %54 = vector.extract_strided_slice %35 {offsets = [0, 8], sizes = [16, 8], strides = [1, 1]} : vector<16x32xbf16> to vector<16x8xbf16>
    %55 = vector.extract_strided_slice %36 {offsets = [0, 8], sizes = [16, 8], strides = [1, 1]} : vector<16x32xbf16> to vector<16x8xbf16>
    %cst_19 = arith.constant dense<0.000000e+00> : vector<16x16xf32>
    %56 = tpu.matmul %54, %55, %cst_19 {dimension_numbers = #tpu.dot_dimension_numbers<[1], [1], [0], [0], [0, 0, 1, 0], [], []>} : vector<16x8xbf16>, vector<16x8xbf16>, vector<16x16xf32> -> vector<16x16xf32>
    %cst_20 = arith.constant dense<0xFF800000> : vector<16xf32>
    %57 = vector.multi_reduction <maximumf>, %56, %cst_20 [1] : vector<16x16xf32> to vector<16xf32>
    %58 = vector.shape_cast %57 : vector<16xf32> to vector<16x1xf32>
    %59 = vector.broadcast %58 : vector<16x1xf32> to vector<16x16xf32>
    %60 = arith.subf %56, %59 : vector<16x16xf32>
    %61 = math.exp %60 : vector<16x16xf32>
    %cst_21 = arith.constant dense<0.000000e+00> : vector<16xf32>
    %62 = vector.multi_reduction <add>, %61, %cst_21 [1] : vector<16x16xf32> to vector<16xf32>
    %63 = vector.shape_cast %62 : vector<16xf32> to vector<16x1xf32>
    %64 = tpu.reciprocal %63 {approx = true} : vector<16x1xf32> -> vector<16x1xf32>
    %65 = vector.broadcast %64 : vector<16x1xf32> to vector<16x16xf32>
    %66 = arith.mulf %61, %65 : vector<16x16xf32>
    %67 = arith.truncf %66 : vector<16x16xf32> to vector<16x16xbf16>
    %68 = vector.extract_strided_slice %37 {offsets = [0, 8], sizes = [16, 8], strides = [1, 1]} : vector<16x32xbf16> to vector<16x8xbf16>
    %cst_22 = arith.constant dense<0.000000e+00> : vector<16x8xf32>
    %69 = tpu.matmul %67, %68, %cst_22 {dimension_numbers = #tpu.dot_dimension_numbers<[1], [0], [0], [1], [0, 0, 1, 1], [], []>} : vector<16x16xbf16>, vector<16x8xbf16>, vector<16x8xf32> -> vector<16x8xf32>
    %70 = vector.extract_strided_slice %35 {offsets = [0, 16], sizes = [16, 8], strides = [1, 1]} : vector<16x32xbf16> to vector<16x8xbf16>
    %71 = vector.extract_strided_slice %36 {offsets = [0, 16], sizes = [16, 8], strides = [1, 1]} : vector<16x32xbf16> to vector<16x8xbf16>
    %cst_23 = arith.constant dense<0.000000e+00> : vector<16x16xf32>
    %72 = tpu.matmul %70, %71, %cst_23 {dimension_numbers = #tpu.dot_dimension_numbers<[1], [1], [0], [0], [0, 0, 1, 0], [], []>} : vector<16x8xbf16>, vector<16x8xbf16>, vector<16x16xf32> -> vector<16x16xf32>
    %cst_24 = arith.constant dense<0xFF800000> : vector<16xf32>
    %73 = vector.multi_reduction <maximumf>, %72, %cst_24 [1] : vector<16x16xf32> to vector<16xf32>
    %74 = vector.shape_cast %73 : vector<16xf32> to vector<16x1xf32>
    %75 = vector.broadcast %74 : vector<16x1xf32> to vector<16x16xf32>
    %76 = arith.subf %72, %75 : vector<16x16xf32>
    %77 = math.exp %76 : vector<16x16xf32>
    %cst_25 = arith.constant dense<0.000000e+00> : vector<16xf32>
    %78 = vector.multi_reduction <add>, %77, %cst_25 [1] : vector<16x16xf32> to vector<16xf32>
    %79 = vector.shape_cast %78 : vector<16xf32> to vector<16x1xf32>
    %80 = tpu.reciprocal %79 {approx = true} : vector<16x1xf32> -> vector<16x1xf32>
    %81 = vector.broadcast %80 : vector<16x1xf32> to vector<16x16xf32>
    %82 = arith.mulf %77, %81 : vector<16x16xf32>
    %83 = arith.truncf %82 : vector<16x16xf32> to vector<16x16xbf16>
    %84 = vector.extract_strided_slice %37 {offsets = [0, 16], sizes = [16, 8], strides = [1, 1]} : vector<16x32xbf16> to vector<16x8xbf16>
    %cst_26 = arith.constant dense<0.000000e+00> : vector<16x8xf32>
    %85 = tpu.matmul %83, %84, %cst_26 {dimension_numbers = #tpu.dot_dimension_numbers<[1], [0], [0], [1], [0, 0, 1, 1], [], []>} : vector<16x16xbf16>, vector<16x8xbf16>, vector<16x8xf32> -> vector<16x8xf32>
    %86 = vector.extract_strided_slice %35 {offsets = [0, 24], sizes = [16, 8], strides = [1, 1]} : vector<16x32xbf16> to vector<16x8xbf16>
    %87 = vector.extract_strided_slice %36 {offsets = [0, 24], sizes = [16, 8], strides = [1, 1]} : vector<16x32xbf16> to vector<16x8xbf16>
    %cst_27 = arith.constant dense<0.000000e+00> : vector<16x16xf32>
    %88 = tpu.matmul %86, %87, %cst_27 {dimension_numbers = #tpu.dot_dimension_numbers<[1], [1], [0], [0], [0, 0, 1, 0], [], []>} : vector<16x8xbf16>, vector<16x8xbf16>, vector<16x16xf32> -> vector<16x16xf32>
    %cst_28 = arith.constant dense<0xFF800000> : vector<16xf32>
    %89 = vector.multi_reduction <maximumf>, %88, %cst_28 [1] : vector<16x16xf32> to vector<16xf32>
    %90 = vector.shape_cast %89 : vector<16xf32> to vector<16x1xf32>
    %91 = vector.broadcast %90 : vector<16x1xf32> to vector<16x16xf32>
    %92 = arith.subf %88, %91 : vector<16x16xf32>
    %93 = math.exp %92 : vector<16x16xf32>
    %cst_29 = arith.constant dense<0.000000e+00> : vector<16xf32>
    %94 = vector.multi_reduction <add>, %93, %cst_29 [1] : vector<16x16xf32> to vector<16xf32>
    %95 = vector.shape_cast %94 : vector<16xf32> to vector<16x1xf32>
    %96 = tpu.reciprocal %95 {approx = true} : vector<16x1xf32> -> vector<16x1xf32>
    %97 = vector.broadcast %96 : vector<16x1xf32> to vector<16x16xf32>
    %98 = arith.mulf %93, %97 : vector<16x16xf32>
    %99 = arith.truncf %98 : vector<16x16xf32> to vector<16x16xbf16>
    %100 = vector.extract_strided_slice %37 {offsets = [0, 24], sizes = [16, 8], strides = [1, 1]} : vector<16x32xbf16> to vector<16x8xbf16>
    %cst_30 = arith.constant dense<0.000000e+00> : vector<16x8xf32>
    %101 = tpu.matmul %99, %100, %cst_30 {dimension_numbers = #tpu.dot_dimension_numbers<[1], [0], [0], [1], [0, 0, 1, 1], [], []>} : vector<16x16xbf16>, vector<16x8xbf16>, vector<16x8xf32> -> vector<16x8xf32>
    %102 = tpu.concatenate %53, %69, %85, %101 in 1 : vector<16x8xf32>, vector<16x8xf32>, vector<16x8xf32>, vector<16x8xf32> -> vector<16x32xf32>
    %103 = arith.truncf %102 : vector<16x32xf32> to vector<16x32xbf16>
    %c0_31 = arith.constant 0 : index
    %c0_32 = arith.constant 0 : index
    %104 = vector.load %arg6[%c0_31, %c0_32] : memref<32x32xbf16, #tpu.memory_space<vmem>>, vector<32x32xbf16>
    %cst_33 = arith.constant dense<0.000000e+00> : vector<16x32xf32>
    %105 = tpu.matmul %103, %104, %cst_33 {dimension_numbers = #tpu.dot_dimension_numbers<[1], [0], [0], [1], [0, 0, 1, 1], [], []>} : vector<16x32xbf16>, vector<32x32xbf16>, vector<16x32xf32> -> vector<16x32xf32>
    %c0_34 = arith.constant 0 : index
    %c0_35 = arith.constant 0 : index
    %106 = vector.load %arg7[%c0_34, %c0_35] : memref<1x32xf32, #tpu.memory_space<vmem>>, vector<1x32xf32>
    %107 = vector.broadcast %106 : vector<1x32xf32> to vector<16x32xf32>
    %108 = arith.addf %105, %107 : vector<16x32xf32>
    %109 = arith.addf %1, %108 : vector<16x32xf32>
    %c0_36 = arith.constant 0 : index
    %c0_37 = arith.constant 0 : index
    %c0_38 = arith.constant 0 : index
    %110 = vector.load %arg8[%c0_36, %c0_37, %c0_38] : memref<1x16x32xf32, #tpu.memory_space<vmem>>, vector<1x16x32xf32>
    %111 = vector.shape_cast %110 : vector<1x16x32xf32> to vector<16x32xf32>
    %112 = vector.shape_cast %109 : vector<16x32xf32> to vector<1x16x32xf32>
    tpu.vector_store %arg8[%c0_36, %c0_37, %c0_38], %112 {strides = array<i32>} : memref<1x16x32xf32, #tpu.memory_space<vmem>>, vector<1x16x32xf32>,
    return
  }
  func.func @transform_0(%arg0: i32) -> (i32, i32, i32) {
    %c0_i32 = arith.constant 0 : i32
    %c0_i32_0 = arith.constant 0 : i32
    %c0_i32_1 = arith.constant 0 : i32
    return %arg0, %c0_i32, %c0_i32_0 : i32, i32, i32
  }
  func.func @transform_1(%arg0: i32) -> (i32, i32) {
    %c0_i32 = arith.constant 0 : i32
    %c0_i32_0 = arith.constant 0 : i32
    %c0_i32_1 = arith.constant 0 : i32
    return %c0_i32, %c0_i32_0 : i32, i32
  }
  func.func @transform_2(%arg0: i32) -> (i32, i32) {
    %c0_i32 = arith.constant 0 : i32
    %c0_i32_0 = arith.constant 0 : i32
    %c0_i32_1 = arith.constant 0 : i32
    return %c0_i32, %c0_i32_0 : i32, i32
  }
  func.func @transform_3(%arg0: i32) -> (i32, i32) {
    %c0_i32 = arith.constant 0 : i32
    %c0_i32_0 = arith.constant 0 : i32
    %c0_i32_1 = arith.constant 0 : i32
    return %c0_i32, %c0_i32_0 : i32, i32
  }
  func.func @transform_4(%arg0: i32) -> (i32, i32) {
    %c0_i32 = arith.constant 0 : i32
    %c0_i32_0 = arith.constant 0 : i32
    %c0_i32_1 = arith.constant 0 : i32
    return %c0_i32, %c0_i32_0 : i32, i32
  }
  func.func @transform_5(%arg0: i32) -> (i32, i32) {
    %c0_i32 = arith.constant 0 : i32
    %c0_i32_0 = arith.constant 0 : i32
    %c0_i32_1 = arith.constant 0 : i32
    return %c0_i32, %c0_i32_0 : i32, i32
  }
  func.func @transform_6(%arg0: i32) -> (i32, i32) {
    %c0_i32 = arith.constant 0 : i32
    %c0_i32_0 = arith.constant 0 : i32
    %c0_i32_1 = arith.constant 0 : i32
    return %c0_i32, %c0_i32_0 : i32, i32
  }
  func.func @transform_7(%arg0: i32) -> (i32, i32, i32) {
    %c0_i32 = arith.constant 0 : i32
    %c0_i32_0 = arith.constant 0 : i32
    %c0_i32_1 = arith.constant 0 : i32
    return %arg0, %c0_i32, %c0_i32_0 : i32, i32, i32
  }
}

module attributes {stable_mosaic.version = 11 : i64} {
  func.func @_ln_mlp_resid_kernel(%arg0: i32, %arg1: memref<32x32xf32, #tpu.memory_space<vmem>>, %arg2: memref<1x32xf32, #tpu.memory_space<vmem>>, %arg3: memref<1x32xf32, #tpu.memory_space<vmem>>, %arg4: memref<32x64xbf16, #tpu.memory_space<vmem>>, %arg5: memref<1x64xf32, #tpu.memory_space<vmem>>, %arg6: memref<64x32xbf16, #tpu.memory_space<vmem>>, %arg7: memref<1x32xf32, #tpu.memory_space<vmem>>, %arg8: memref<32x32xf32, #tpu.memory_space<vmem>>) attributes {dimension_semantics = [#tpu.dimension_semantics<parallel>], iteration_bounds = array<i64: 1>, scalar_prefetch = 0 : i64, scratch_operands = 0 : i64, tpu.core_type = #tpu.core_type<tc>, window_params = [{transform_indices = @transform_0, window_bounds = array<i64: 32, 32>}, {pipeline_mode = #tpu.pipeline_mode<synchronous>, transform_indices = @transform_1, window_bounds = array<i64: 1, 32>}, {pipeline_mode = #tpu.pipeline_mode<synchronous>, transform_indices = @transform_2, window_bounds = array<i64: 1, 32>}, {pipeline_mode = #tpu.pipeline_mode<synchronous>, transform_indices = @transform_3, window_bounds = array<i64: 32, 64>}, {pipeline_mode = #tpu.pipeline_mode<synchronous>, transform_indices = @transform_4, window_bounds = array<i64: 1, 64>}, {pipeline_mode = #tpu.pipeline_mode<synchronous>, transform_indices = @transform_5, window_bounds = array<i64: 64, 32>}, {pipeline_mode = #tpu.pipeline_mode<synchronous>, transform_indices = @transform_6, window_bounds = array<i64: 1, 32>}, {transform_indices = @transform_7, window_bounds = array<i64: 32, 32>}]} {
    %c0 = arith.constant 0 : index
    %c0_0 = arith.constant 0 : index
    %0 = vector.load %arg1[%c0, %c0_0] : memref<32x32xf32, #tpu.memory_space<vmem>>, vector<32x32xf32>
    %c0_1 = arith.constant 0 : index
    %c0_2 = arith.constant 0 : index
    %1 = vector.load %arg2[%c0_1, %c0_2] : memref<1x32xf32, #tpu.memory_space<vmem>>, vector<1x32xf32>
    %c0_3 = arith.constant 0 : index
    %c0_4 = arith.constant 0 : index
    %2 = vector.load %arg3[%c0_3, %c0_4] : memref<1x32xf32, #tpu.memory_space<vmem>>, vector<1x32xf32>
    %cst = arith.constant dense<0.000000e+00> : vector<32xf32>
    %3 = vector.multi_reduction <add>, %0, %cst [1] : vector<32x32xf32> to vector<32xf32>
    %4 = vector.shape_cast %3 : vector<32xf32> to vector<32x1xf32>
    %cst_5 = arith.constant 3.200000e+01 : f32
    %5 = vector.broadcast %cst_5 : f32 to vector<32x1xf32>
    %6 = arith.divf %4, %5 : vector<32x1xf32>
    %7 = vector.broadcast %6 : vector<32x1xf32> to vector<32x32xf32>
    %8 = arith.subf %0, %7 : vector<32x32xf32>
    %9 = arith.mulf %8, %8 : vector<32x32xf32>
    %cst_6 = arith.constant dense<0.000000e+00> : vector<32xf32>
    %10 = vector.multi_reduction <add>, %9, %cst_6 [1] : vector<32x32xf32> to vector<32xf32>
    %11 = vector.shape_cast %10 : vector<32xf32> to vector<32x1xf32>
    %cst_7 = arith.constant 3.200000e+01 : f32
    %12 = vector.broadcast %cst_7 : f32 to vector<32x1xf32>
    %13 = arith.divf %11, %12 : vector<32x1xf32>
    %14 = vector.broadcast %6 : vector<32x1xf32> to vector<32x32xf32>
    %15 = arith.subf %0, %14 : vector<32x32xf32>
    %cst_8 = arith.constant 9.99999974E-6 : f32
    %16 = vector.broadcast %cst_8 : f32 to vector<32x1xf32>
    %17 = arith.addf %13, %16 : vector<32x1xf32>
    %18 = math.rsqrt %17 : vector<32x1xf32>
    %19 = vector.broadcast %18 : vector<32x1xf32> to vector<32x32xf32>
    %20 = arith.mulf %15, %19 : vector<32x32xf32>
    %21 = vector.broadcast %1 : vector<1x32xf32> to vector<32x32xf32>
    %22 = arith.mulf %20, %21 : vector<32x32xf32>
    %23 = vector.broadcast %2 : vector<1x32xf32> to vector<32x32xf32>
    %24 = arith.addf %22, %23 : vector<32x32xf32>
    %25 = arith.truncf %24 : vector<32x32xf32> to vector<32x32xbf16>
    %c0_9 = arith.constant 0 : index
    %c0_10 = arith.constant 0 : index
    %26 = vector.load %arg4[%c0_9, %c0_10] : memref<32x64xbf16, #tpu.memory_space<vmem>>, vector<32x64xbf16>
    %cst_11 = arith.constant dense<0.000000e+00> : vector<32x64xf32>
    %27 = tpu.matmul %25, %26, %cst_11 {dimension_numbers = #tpu.dot_dimension_numbers<[1], [0], [0], [1], [0, 0, 1, 1], [], []>} : vector<32x32xbf16>, vector<32x64xbf16>, vector<32x64xf32> -> vector<32x64xf32>
    %c0_12 = arith.constant 0 : index
    %c0_13 = arith.constant 0 : index
    %28 = vector.load %arg5[%c0_12, %c0_13] : memref<1x64xf32, #tpu.memory_space<vmem>>, vector<1x64xf32>
    %29 = vector.broadcast %28 : vector<1x64xf32> to vector<32x64xf32>
    %30 = arith.addf %27, %29 : vector<32x64xf32>
    %cst_14 = arith.constant 5.000000e-01 : f32
    %31 = vector.broadcast %cst_14 : f32 to vector<32x64xf32>
    %32 = arith.mulf %31, %30 : vector<32x64xf32>
    %cst_15 = arith.constant 0.707106769 : f32
    %33 = vector.broadcast %cst_15 : f32 to vector<32x64xf32>
    %34 = arith.mulf %30, %33 : vector<32x64xf32>
    %cst_16 = arith.constant 0.000000e+00 : f32
    %35 = vector.broadcast %cst_16 : f32 to vector<32x64xf32>
    %36 = arith.cmpf olt, %34, %35 : vector<32x64xf32>
    %cst_17 = arith.constant -1.000000e+00 : f32
    %cst_18 = arith.constant 1.000000e+00 : f32
    %37 = vector.broadcast %cst_17 : f32 to vector<32x64xf32>
    %38 = vector.broadcast %cst_18 : f32 to vector<32x64xf32>
    %39 = arith.select %36, %37, %38 : vector<32x64xi1>, vector<32x64xf32>
    %40 = math.absf %34 : vector<32x64xf32>
    %cst_19 = arith.constant 0.327591091 : f32
    %41 = vector.broadcast %cst_19 : f32 to vector<32x64xf32>
    %42 = arith.mulf %41, %40 : vector<32x64xf32>
    %cst_20 = arith.constant 1.000000e+00 : f32
    %43 = vector.broadcast %cst_20 : f32 to vector<32x64xf32>
    %44 = arith.addf %43, %42 : vector<32x64xf32>
    %45 = tpu.reciprocal %44 {approx = true} : vector<32x64xf32> -> vector<32x64xf32>
    %cst_21 = arith.constant 1.06140542 : f32
    %46 = vector.broadcast %cst_21 : f32 to vector<32x64xf32>
    %47 = arith.mulf %46, %45 : vector<32x64xf32>
    %cst_22 = arith.constant -1.45315206 : f32
    %48 = vector.broadcast %cst_22 : f32 to vector<32x64xf32>
    %49 = arith.addf %47, %48 : vector<32x64xf32>
    %50 = arith.mulf %49, %45 : vector<32x64xf32>
    %cst_23 = arith.constant 1.42141378 : f32
    %51 = vector.broadcast %cst_23 : f32 to vector<32x64xf32>
    %52 = arith.addf %50, %51 : vector<32x64xf32>
    %53 = arith.mulf %52, %45 : vector<32x64xf32>
    %cst_24 = arith.constant -0.284496725 : f32
    %54 = vector.broadcast %cst_24 : f32 to vector<32x64xf32>
    %55 = arith.addf %53, %54 : vector<32x64xf32>
    %56 = arith.mulf %55, %45 : vector<32x64xf32>
    %cst_25 = arith.constant 0.254829586 : f32
    %57 = vector.broadcast %cst_25 : f32 to vector<32x64xf32>
    %58 = arith.addf %56, %57 : vector<32x64xf32>
    %59 = arith.mulf %58, %45 : vector<32x64xf32>
    %cst_26 = arith.constant 0.000000e+00 : f32
    %60 = vector.broadcast %cst_26 : f32 to vector<32x64xf32>
    %61 = arith.subf %60, %40 : vector<32x64xf32>
    %62 = arith.mulf %61, %40 : vector<32x64xf32>
    %63 = math.exp %62 : vector<32x64xf32>
    %64 = arith.mulf %59, %63 : vector<32x64xf32>
    %cst_27 = arith.constant 1.000000e+00 : f32
    %65 = vector.broadcast %cst_27 : f32 to vector<32x64xf32>
    %66 = arith.subf %65, %64 : vector<32x64xf32>
    %67 = arith.mulf %39, %66 : vector<32x64xf32>
    %cst_28 = arith.constant 1.000000e+00 : f32
    %68 = vector.broadcast %cst_28 : f32 to vector<32x64xf32>
    %69 = arith.addf %68, %67 : vector<32x64xf32>
    %70 = arith.mulf %32, %69 : vector<32x64xf32>
    %71 = arith.truncf %70 : vector<32x64xf32> to vector<32x64xbf16>
    %c0_29 = arith.constant 0 : index
    %c0_30 = arith.constant 0 : index
    %72 = vector.load %arg6[%c0_29, %c0_30] : memref<64x32xbf16, #tpu.memory_space<vmem>>, vector<64x32xbf16>
    %cst_31 = arith.constant dense<0.000000e+00> : vector<32x32xf32>
    %73 = tpu.matmul %71, %72, %cst_31 {dimension_numbers = #tpu.dot_dimension_numbers<[1], [0], [0], [1], [0, 0, 1, 1], [], []>} : vector<32x64xbf16>, vector<64x32xbf16>, vector<32x32xf32> -> vector<32x32xf32>
    %c0_32 = arith.constant 0 : index
    %c0_33 = arith.constant 0 : index
    %74 = vector.load %arg7[%c0_32, %c0_33] : memref<1x32xf32, #tpu.memory_space<vmem>>, vector<1x32xf32>
    %75 = vector.broadcast %74 : vector<1x32xf32> to vector<32x32xf32>
    %76 = arith.addf %73, %75 : vector<32x32xf32>
    %77 = arith.addf %0, %76 : vector<32x32xf32>
    %c0_34 = arith.constant 0 : index
    %c0_35 = arith.constant 0 : index
    %78 = vector.load %arg8[%c0_34, %c0_35] : memref<32x32xf32, #tpu.memory_space<vmem>>, vector<32x32xf32>
    tpu.vector_store %arg8[%c0_34, %c0_35], %77 {strides = array<i32>} : memref<32x32xf32, #tpu.memory_space<vmem>>, vector<32x32xf32>,
    return
  }
  func.func @transform_0(%arg0: i32) -> (i32, i32) {
    %c0_i32 = arith.constant 0 : i32
    %c0_i32_0 = arith.constant 0 : i32
    return %arg0, %c0_i32 : i32, i32
  }
  func.func @transform_1(%arg0: i32) -> (i32, i32) {
    %c0_i32 = arith.constant 0 : i32
    %c0_i32_0 = arith.constant 0 : i32
    %c0_i32_1 = arith.constant 0 : i32
    return %c0_i32, %c0_i32_0 : i32, i32
  }
  func.func @transform_2(%arg0: i32) -> (i32, i32) {
    %c0_i32 = arith.constant 0 : i32
    %c0_i32_0 = arith.constant 0 : i32
    %c0_i32_1 = arith.constant 0 : i32
    return %c0_i32, %c0_i32_0 : i32, i32
  }
  func.func @transform_3(%arg0: i32) -> (i32, i32) {
    %c0_i32 = arith.constant 0 : i32
    %c0_i32_0 = arith.constant 0 : i32
    %c0_i32_1 = arith.constant 0 : i32
    return %c0_i32, %c0_i32_0 : i32, i32
  }
  func.func @transform_4(%arg0: i32) -> (i32, i32) {
    %c0_i32 = arith.constant 0 : i32
    %c0_i32_0 = arith.constant 0 : i32
    %c0_i32_1 = arith.constant 0 : i32
    return %c0_i32, %c0_i32_0 : i32, i32
  }
  func.func @transform_5(%arg0: i32) -> (i32, i32) {
    %c0_i32 = arith.constant 0 : i32
    %c0_i32_0 = arith.constant 0 : i32
    %c0_i32_1 = arith.constant 0 : i32
    return %c0_i32, %c0_i32_0 : i32, i32
  }
  func.func @transform_6(%arg0: i32) -> (i32, i32) {
    %c0_i32 = arith.constant 0 : i32
    %c0_i32_0 = arith.constant 0 : i32
    %c0_i32_1 = arith.constant 0 : i32
    return %c0_i32, %c0_i32_0 : i32, i32
  }
  func.func @transform_7(%arg0: i32) -> (i32, i32) {
    %c0_i32 = arith.constant 0 : i32
    %c0_i32_0 = arith.constant 0 : i32
    return %arg0, %c0_i32 : i32, i32
  }
}

module attributes {stable_mosaic.version = 11 : i64} {
  func.func @_cross_block_kernel(%arg0: i32, %arg1: memref<1x8x32xf32, #tpu.memory_space<vmem>>, %arg2: memref<16x32xf32, #tpu.memory_space<vmem>>, %arg3: memref<16x32xf32, #tpu.memory_space<vmem>>, %arg4: memref<1x32xf32, #tpu.memory_space<vmem>>, %arg5: memref<1x32xf32, #tpu.memory_space<vmem>>, %arg6: memref<32x64xbf16, #tpu.memory_space<vmem>>, %arg7: memref<1x64xf32, #tpu.memory_space<vmem>>, %arg8: memref<32x32xbf16, #tpu.memory_space<vmem>>, %arg9: memref<1x32xf32, #tpu.memory_space<vmem>>, %arg10: memref<1x16x32xf32, #tpu.memory_space<vmem>>) attributes {dimension_semantics = [#tpu.dimension_semantics<parallel>], iteration_bounds = array<i64: 2>, scalar_prefetch = 0 : i64, scratch_operands = 0 : i64, tpu.core_type = #tpu.core_type<tc>, window_params = [{transform_indices = @transform_0, window_bounds = array<i64: 1, 8, 32>}, {pipeline_mode = #tpu.pipeline_mode<synchronous>, transform_indices = @transform_1, window_bounds = array<i64: 16, 32>}, {pipeline_mode = #tpu.pipeline_mode<synchronous>, transform_indices = @transform_2, window_bounds = array<i64: 16, 32>}, {pipeline_mode = #tpu.pipeline_mode<synchronous>, transform_indices = @transform_3, window_bounds = array<i64: 1, 32>}, {pipeline_mode = #tpu.pipeline_mode<synchronous>, transform_indices = @transform_4, window_bounds = array<i64: 1, 32>}, {pipeline_mode = #tpu.pipeline_mode<synchronous>, transform_indices = @transform_5, window_bounds = array<i64: 32, 64>}, {pipeline_mode = #tpu.pipeline_mode<synchronous>, transform_indices = @transform_6, window_bounds = array<i64: 1, 64>}, {pipeline_mode = #tpu.pipeline_mode<synchronous>, transform_indices = @transform_7, window_bounds = array<i64: 32, 32>}, {pipeline_mode = #tpu.pipeline_mode<synchronous>, transform_indices = @transform_8, window_bounds = array<i64: 1, 32>}, {transform_indices = @transform_9, window_bounds = array<i64: 1, 16, 32>}]} {
    %c0 = arith.constant 0 : index
    %c0_0 = arith.constant 0 : index
    %c0_1 = arith.constant 0 : index
    %0 = vector.load %arg1[%c0, %c0_0, %c0_1] : memref<1x8x32xf32, #tpu.memory_space<vmem>>, vector<1x8x32xf32>
    %1 = vector.shape_cast %0 : vector<1x8x32xf32> to vector<8x32xf32>
    %c0_2 = arith.constant 0 : index
    %c0_3 = arith.constant 0 : index
    %2 = vector.load %arg4[%c0_2, %c0_3] : memref<1x32xf32, #tpu.memory_space<vmem>>, vector<1x32xf32>
    %c0_4 = arith.constant 0 : index
    %c0_5 = arith.constant 0 : index
    %3 = vector.load %arg5[%c0_4, %c0_5] : memref<1x32xf32, #tpu.memory_space<vmem>>, vector<1x32xf32>
    %cst = arith.constant dense<0.000000e+00> : vector<8xf32>
    %4 = vector.multi_reduction <add>, %1, %cst [1] : vector<8x32xf32> to vector<8xf32>
    %5 = vector.shape_cast %4 : vector<8xf32> to vector<8x1xf32>
    %cst_6 = arith.constant 3.200000e+01 : f32
    %6 = vector.broadcast %cst_6 : f32 to vector<8x1xf32>
    %7 = arith.divf %5, %6 : vector<8x1xf32>
    %8 = vector.broadcast %7 : vector<8x1xf32> to vector<8x32xf32>
    %9 = arith.subf %1, %8 : vector<8x32xf32>
    %10 = arith.mulf %9, %9 : vector<8x32xf32>
    %cst_7 = arith.constant dense<0.000000e+00> : vector<8xf32>
    %11 = vector.multi_reduction <add>, %10, %cst_7 [1] : vector<8x32xf32> to vector<8xf32>
    %12 = vector.shape_cast %11 : vector<8xf32> to vector<8x1xf32>
    %cst_8 = arith.constant 3.200000e+01 : f32
    %13 = vector.broadcast %cst_8 : f32 to vector<8x1xf32>
    %14 = arith.divf %12, %13 : vector<8x1xf32>
    %15 = vector.broadcast %7 : vector<8x1xf32> to vector<8x32xf32>
    %16 = arith.subf %1, %15 : vector<8x32xf32>
    %cst_9 = arith.constant 9.99999974E-6 : f32
    %17 = vector.broadcast %cst_9 : f32 to vector<8x1xf32>
    %18 = arith.addf %14, %17 : vector<8x1xf32>
    %19 = math.rsqrt %18 : vector<8x1xf32>
    %20 = vector.broadcast %19 : vector<8x1xf32> to vector<8x32xf32>
    %21 = arith.mulf %16, %20 : vector<8x32xf32>
    %22 = vector.broadcast %2 : vector<1x32xf32> to vector<8x32xf32>
    %23 = arith.mulf %21, %22 : vector<8x32xf32>
    %24 = vector.broadcast %3 : vector<1x32xf32> to vector<8x32xf32>
    %25 = arith.addf %23, %24 : vector<8x32xf32>
    %26 = arith.truncf %25 : vector<8x32xf32> to vector<8x32xbf16>
    %c0_10 = arith.constant 0 : index
    %c0_11 = arith.constant 0 : index
    %27 = vector.load %arg6[%c0_10, %c0_11] : memref<32x64xbf16, #tpu.memory_space<vmem>>, vector<32x64xbf16>
    %cst_12 = arith.constant dense<0.000000e+00> : vector<8x64xf32>
    %28 = tpu.matmul %26, %27, %cst_12 {dimension_numbers = #tpu.dot_dimension_numbers<[1], [0], [0], [1], [0, 0, 1, 1], [], []>} : vector<8x32xbf16>, vector<32x64xbf16>, vector<8x64xf32> -> vector<8x64xf32>
    %c0_13 = arith.constant 0 : index
    %c0_14 = arith.constant 0 : index
    %29 = vector.load %arg7[%c0_13, %c0_14] : memref<1x64xf32, #tpu.memory_space<vmem>>, vector<1x64xf32>
    %30 = vector.broadcast %29 : vector<1x64xf32> to vector<8x64xf32>
    %31 = arith.addf %28, %30 : vector<8x64xf32>
    %c0_15 = arith.constant 0 : index
    %c0_16 = arith.constant 0 : index
    %32 = vector.load %arg2[%c0_15, %c0_16] : memref<16x32xf32, #tpu.memory_space<vmem>>, vector<16x32xf32>
    %33 = vector.extract_strided_slice %31 {offsets = [0, 0], sizes = [8, 32], strides = [1, 1]} : vector<8x64xf32> to vector<8x32xf32>
    %34 = vector.extract_strided_slice %31 {offsets = [0, 32], sizes = [8, 32], strides = [1, 1]} : vector<8x64xf32> to vector<8x32xf32>
    %35 = arith.truncf %32 : vector<16x32xf32> to vector<16x32xbf16>
    %36 = arith.truncf %33 : vector<8x32xf32> to vector<8x32xbf16>
    %37 = arith.truncf %34 : vector<8x32xf32> to vector<8x32xbf16>
    %38 = vector.extract_strided_slice %35 {offsets = [0, 0], sizes = [16, 8], strides = [1, 1]} : vector<16x32xbf16> to vector<16x8xbf16>
    %39 = vector.extract_strided_slice %36 {offsets = [0, 0], sizes = [8, 8], strides = [1, 1]} : vector<8x32xbf16> to vector<8x8xbf16>
    %cst_17 = arith.constant dense<0.000000e+00> : vector<16x8xf32>
    %40 = tpu.matmul %38, %39, %cst_17 {dimension_numbers = #tpu.dot_dimension_numbers<[1], [1], [0], [0], [0, 0, 1, 0], [], []>} : vector<16x8xbf16>, vector<8x8xbf16>, vector<16x8xf32> -> vector<16x8xf32>
    %cst_18 = arith.constant dense<0xFF800000> : vector<16xf32>
    %41 = vector.multi_reduction <maximumf>, %40, %cst_18 [1] : vector<16x8xf32> to vector<16xf32>
    %42 = vector.shape_cast %41 : vector<16xf32> to vector<16x1xf32>
    %43 = vector.broadcast %42 : vector<16x1xf32> to vector<16x8xf32>
    %44 = arith.subf %40, %43 : vector<16x8xf32>
    %45 = math.exp %44 : vector<16x8xf32>
    %cst_19 = arith.constant dense<0.000000e+00> : vector<16xf32>
    %46 = vector.multi_reduction <add>, %45, %cst_19 [1] : vector<16x8xf32> to vector<16xf32>
    %47 = vector.shape_cast %46 : vector<16xf32> to vector<16x1xf32>
    %48 = tpu.reciprocal %47 {approx = true} : vector<16x1xf32> -> vector<16x1xf32>
    %49 = vector.broadcast %48 : vector<16x1xf32> to vector<16x8xf32>
    %50 = arith.mulf %45, %49 : vector<16x8xf32>
    %51 = arith.truncf %50 : vector<16x8xf32> to vector<16x8xbf16>
    %52 = vector.extract_strided_slice %37 {offsets = [0, 0], sizes = [8, 8], strides = [1, 1]} : vector<8x32xbf16> to vector<8x8xbf16>
    %cst_20 = arith.constant dense<0.000000e+00> : vector<16x8xf32>
    %53 = tpu.matmul %51, %52, %cst_20 {dimension_numbers = #tpu.dot_dimension_numbers<[1], [0], [0], [1], [0, 0, 1, 1], [], []>} : vector<16x8xbf16>, vector<8x8xbf16>, vector<16x8xf32> -> vector<16x8xf32>
    %54 = vector.extract_strided_slice %35 {offsets = [0, 8], sizes = [16, 8], strides = [1, 1]} : vector<16x32xbf16> to vector<16x8xbf16>
    %55 = vector.extract_strided_slice %36 {offsets = [0, 8], sizes = [8, 8], strides = [1, 1]} : vector<8x32xbf16> to vector<8x8xbf16>
    %cst_21 = arith.constant dense<0.000000e+00> : vector<16x8xf32>
    %56 = tpu.matmul %54, %55, %cst_21 {dimension_numbers = #tpu.dot_dimension_numbers<[1], [1], [0], [0], [0, 0, 1, 0], [], []>} : vector<16x8xbf16>, vector<8x8xbf16>, vector<16x8xf32> -> vector<16x8xf32>
    %cst_22 = arith.constant dense<0xFF800000> : vector<16xf32>
    %57 = vector.multi_reduction <maximumf>, %56, %cst_22 [1] : vector<16x8xf32> to vector<16xf32>
    %58 = vector.shape_cast %57 : vector<16xf32> to vector<16x1xf32>
    %59 = vector.broadcast %58 : vector<16x1xf32> to vector<16x8xf32>
    %60 = arith.subf %56, %59 : vector<16x8xf32>
    %61 = math.exp %60 : vector<16x8xf32>
    %cst_23 = arith.constant dense<0.000000e+00> : vector<16xf32>
    %62 = vector.multi_reduction <add>, %61, %cst_23 [1] : vector<16x8xf32> to vector<16xf32>
    %63 = vector.shape_cast %62 : vector<16xf32> to vector<16x1xf32>
    %64 = tpu.reciprocal %63 {approx = true} : vector<16x1xf32> -> vector<16x1xf32>
    %65 = vector.broadcast %64 : vector<16x1xf32> to vector<16x8xf32>
    %66 = arith.mulf %61, %65 : vector<16x8xf32>
    %67 = arith.truncf %66 : vector<16x8xf32> to vector<16x8xbf16>
    %68 = vector.extract_strided_slice %37 {offsets = [0, 8], sizes = [8, 8], strides = [1, 1]} : vector<8x32xbf16> to vector<8x8xbf16>
    %cst_24 = arith.constant dense<0.000000e+00> : vector<16x8xf32>
    %69 = tpu.matmul %67, %68, %cst_24 {dimension_numbers = #tpu.dot_dimension_numbers<[1], [0], [0], [1], [0, 0, 1, 1], [], []>} : vector<16x8xbf16>, vector<8x8xbf16>, vector<16x8xf32> -> vector<16x8xf32>
    %70 = vector.extract_strided_slice %35 {offsets = [0, 16], sizes = [16, 8], strides = [1, 1]} : vector<16x32xbf16> to vector<16x8xbf16>
    %71 = vector.extract_strided_slice %36 {offsets = [0, 16], sizes = [8, 8], strides = [1, 1]} : vector<8x32xbf16> to vector<8x8xbf16>
    %cst_25 = arith.constant dense<0.000000e+00> : vector<16x8xf32>
    %72 = tpu.matmul %70, %71, %cst_25 {dimension_numbers = #tpu.dot_dimension_numbers<[1], [1], [0], [0], [0, 0, 1, 0], [], []>} : vector<16x8xbf16>, vector<8x8xbf16>, vector<16x8xf32> -> vector<16x8xf32>
    %cst_26 = arith.constant dense<0xFF800000> : vector<16xf32>
    %73 = vector.multi_reduction <maximumf>, %72, %cst_26 [1] : vector<16x8xf32> to vector<16xf32>
    %74 = vector.shape_cast %73 : vector<16xf32> to vector<16x1xf32>
    %75 = vector.broadcast %74 : vector<16x1xf32> to vector<16x8xf32>
    %76 = arith.subf %72, %75 : vector<16x8xf32>
    %77 = math.exp %76 : vector<16x8xf32>
    %cst_27 = arith.constant dense<0.000000e+00> : vector<16xf32>
    %78 = vector.multi_reduction <add>, %77, %cst_27 [1] : vector<16x8xf32> to vector<16xf32>
    %79 = vector.shape_cast %78 : vector<16xf32> to vector<16x1xf32>
    %80 = tpu.reciprocal %79 {approx = true} : vector<16x1xf32> -> vector<16x1xf32>
    %81 = vector.broadcast %80 : vector<16x1xf32> to vector<16x8xf32>
    %82 = arith.mulf %77, %81 : vector<16x8xf32>
    %83 = arith.truncf %82 : vector<16x8xf32> to vector<16x8xbf16>
    %84 = vector.extract_strided_slice %37 {offsets = [0, 16], sizes = [8, 8], strides = [1, 1]} : vector<8x32xbf16> to vector<8x8xbf16>
    %cst_28 = arith.constant dense<0.000000e+00> : vector<16x8xf32>
    %85 = tpu.matmul %83, %84, %cst_28 {dimension_numbers = #tpu.dot_dimension_numbers<[1], [0], [0], [1], [0, 0, 1, 1], [], []>} : vector<16x8xbf16>, vector<8x8xbf16>, vector<16x8xf32> -> vector<16x8xf32>
    %86 = vector.extract_strided_slice %35 {offsets = [0, 24], sizes = [16, 8], strides = [1, 1]} : vector<16x32xbf16> to vector<16x8xbf16>
    %87 = vector.extract_strided_slice %36 {offsets = [0, 24], sizes = [8, 8], strides = [1, 1]} : vector<8x32xbf16> to vector<8x8xbf16>
    %cst_29 = arith.constant dense<0.000000e+00> : vector<16x8xf32>
    %88 = tpu.matmul %86, %87, %cst_29 {dimension_numbers = #tpu.dot_dimension_numbers<[1], [1], [0], [0], [0, 0, 1, 0], [], []>} : vector<16x8xbf16>, vector<8x8xbf16>, vector<16x8xf32> -> vector<16x8xf32>
    %cst_30 = arith.constant dense<0xFF800000> : vector<16xf32>
    %89 = vector.multi_reduction <maximumf>, %88, %cst_30 [1] : vector<16x8xf32> to vector<16xf32>
    %90 = vector.shape_cast %89 : vector<16xf32> to vector<16x1xf32>
    %91 = vector.broadcast %90 : vector<16x1xf32> to vector<16x8xf32>
    %92 = arith.subf %88, %91 : vector<16x8xf32>
    %93 = math.exp %92 : vector<16x8xf32>
    %cst_31 = arith.constant dense<0.000000e+00> : vector<16xf32>
    %94 = vector.multi_reduction <add>, %93, %cst_31 [1] : vector<16x8xf32> to vector<16xf32>
    %95 = vector.shape_cast %94 : vector<16xf32> to vector<16x1xf32>
    %96 = tpu.reciprocal %95 {approx = true} : vector<16x1xf32> -> vector<16x1xf32>
    %97 = vector.broadcast %96 : vector<16x1xf32> to vector<16x8xf32>
    %98 = arith.mulf %93, %97 : vector<16x8xf32>
    %99 = arith.truncf %98 : vector<16x8xf32> to vector<16x8xbf16>
    %100 = vector.extract_strided_slice %37 {offsets = [0, 24], sizes = [8, 8], strides = [1, 1]} : vector<8x32xbf16> to vector<8x8xbf16>
    %cst_32 = arith.constant dense<0.000000e+00> : vector<16x8xf32>
    %101 = tpu.matmul %99, %100, %cst_32 {dimension_numbers = #tpu.dot_dimension_numbers<[1], [0], [0], [1], [0, 0, 1, 1], [], []>} : vector<16x8xbf16>, vector<8x8xbf16>, vector<16x8xf32> -> vector<16x8xf32>
    %102 = tpu.concatenate %53, %69, %85, %101 in 1 : vector<16x8xf32>, vector<16x8xf32>, vector<16x8xf32>, vector<16x8xf32> -> vector<16x32xf32>
    %103 = arith.truncf %102 : vector<16x32xf32> to vector<16x32xbf16>
    %c0_33 = arith.constant 0 : index
    %c0_34 = arith.constant 0 : index
    %104 = vector.load %arg8[%c0_33, %c0_34] : memref<32x32xbf16, #tpu.memory_space<vmem>>, vector<32x32xbf16>
    %cst_35 = arith.constant dense<0.000000e+00> : vector<16x32xf32>
    %105 = tpu.matmul %103, %104, %cst_35 {dimension_numbers = #tpu.dot_dimension_numbers<[1], [0], [0], [1], [0, 0, 1, 1], [], []>} : vector<16x32xbf16>, vector<32x32xbf16>, vector<16x32xf32> -> vector<16x32xf32>
    %c0_36 = arith.constant 0 : index
    %c0_37 = arith.constant 0 : index
    %106 = vector.load %arg9[%c0_36, %c0_37] : memref<1x32xf32, #tpu.memory_space<vmem>>, vector<1x32xf32>
    %107 = vector.broadcast %106 : vector<1x32xf32> to vector<16x32xf32>
    %108 = arith.addf %105, %107 : vector<16x32xf32>
    %c0_38 = arith.constant 0 : index
    %c0_39 = arith.constant 0 : index
    %109 = vector.load %arg3[%c0_38, %c0_39] : memref<16x32xf32, #tpu.memory_space<vmem>>, vector<16x32xf32>
    %110 = arith.addf %109, %108 : vector<16x32xf32>
    %c0_40 = arith.constant 0 : index
    %c0_41 = arith.constant 0 : index
    %c0_42 = arith.constant 0 : index
    %111 = vector.load %arg10[%c0_40, %c0_41, %c0_42] : memref<1x16x32xf32, #tpu.memory_space<vmem>>, vector<1x16x32xf32>
    %112 = vector.shape_cast %111 : vector<1x16x32xf32> to vector<16x32xf32>
    %113 = vector.shape_cast %110 : vector<16x32xf32> to vector<1x16x32xf32>
    tpu.vector_store %arg10[%c0_40, %c0_41, %c0_42], %113 {strides = array<i32>} : memref<1x16x32xf32, #tpu.memory_space<vmem>>, vector<1x16x32xf32>,
    return
  }
  func.func @transform_0(%arg0: i32) -> (i32, i32, i32) {
    %c0_i32 = arith.constant 0 : i32
    %c0_i32_0 = arith.constant 0 : i32
    %c0_i32_1 = arith.constant 0 : i32
    return %arg0, %c0_i32, %c0_i32_0 : i32, i32, i32
  }
  func.func @transform_1(%arg0: i32) -> (i32, i32) {
    %c0_i32 = arith.constant 0 : i32
    %c0_i32_0 = arith.constant 0 : i32
    %c0_i32_1 = arith.constant 0 : i32
    return %c0_i32, %c0_i32_0 : i32, i32
  }
  func.func @transform_2(%arg0: i32) -> (i32, i32) {
    %c0_i32 = arith.constant 0 : i32
    %c0_i32_0 = arith.constant 0 : i32
    %c0_i32_1 = arith.constant 0 : i32
    return %c0_i32, %c0_i32_0 : i32, i32
  }
  func.func @transform_3(%arg0: i32) -> (i32, i32) {
    %c0_i32 = arith.constant 0 : i32
    %c0_i32_0 = arith.constant 0 : i32
    %c0_i32_1 = arith.constant 0 : i32
    return %c0_i32, %c0_i32_0 : i32, i32
  }
  func.func @transform_4(%arg0: i32) -> (i32, i32) {
    %c0_i32 = arith.constant 0 : i32
    %c0_i32_0 = arith.constant 0 : i32
    %c0_i32_1 = arith.constant 0 : i32
    return %c0_i32, %c0_i32_0 : i32, i32
  }
  func.func @transform_5(%arg0: i32) -> (i32, i32) {
    %c0_i32 = arith.constant 0 : i32
    %c0_i32_0 = arith.constant 0 : i32
    %c0_i32_1 = arith.constant 0 : i32
    return %c0_i32, %c0_i32_0 : i32, i32
  }
  func.func @transform_6(%arg0: i32) -> (i32, i32) {
    %c0_i32 = arith.constant 0 : i32
    %c0_i32_0 = arith.constant 0 : i32
    %c0_i32_1 = arith.constant 0 : i32
    return %c0_i32, %c0_i32_0 : i32, i32
  }
  func.func @transform_7(%arg0: i32) -> (i32, i32) {
    %c0_i32 = arith.constant 0 : i32
    %c0_i32_0 = arith.constant 0 : i32
    %c0_i32_1 = arith.constant 0 : i32
    return %c0_i32, %c0_i32_0 : i32, i32
  }
  func.func @transform_8(%arg0: i32) -> (i32, i32) {
    %c0_i32 = arith.constant 0 : i32
    %c0_i32_0 = arith.constant 0 : i32
    %c0_i32_1 = arith.constant 0 : i32
    return %c0_i32, %c0_i32_0 : i32, i32
  }
  func.func @transform_9(%arg0: i32) -> (i32, i32, i32) {
    %c0_i32 = arith.constant 0 : i32
    %c0_i32_0 = arith.constant 0 : i32
    %c0_i32_1 = arith.constant 0 : i32
    return %arg0, %c0_i32, %c0_i32_0 : i32, i32, i32
  }
}

module attributes {stable_mosaic.version = 11 : i64} {
  func.func @_dual_decoder_kernel(%arg0: i32, %arg1: memref<1x16x32xf32, #tpu.memory_space<vmem>>, %arg2: memref<1x32xf32, #tpu.memory_space<vmem>>, %arg3: memref<1x32xf32, #tpu.memory_space<vmem>>, %arg4: memref<1x32xf32, #tpu.memory_space<vmem>>, %arg5: memref<32x64xbf16, #tpu.memory_space<vmem>>, %arg6: memref<1x64xf32, #tpu.memory_space<vmem>>, %arg7: memref<32x32xbf16, #tpu.memory_space<vmem>>, %arg8: memref<1x32xf32, #tpu.memory_space<vmem>>, %arg9: memref<32x5xbf16, #tpu.memory_space<vmem>>, %arg10: memref<1x5xf32, #tpu.memory_space<vmem>>, %arg11: memref<1x32xf32, #tpu.memory_space<vmem>>, %arg12: memref<1x32xf32, #tpu.memory_space<vmem>>, %arg13: memref<1x32xf32, #tpu.memory_space<vmem>>, %arg14: memref<32x64xbf16, #tpu.memory_space<vmem>>, %arg15: memref<1x64xf32, #tpu.memory_space<vmem>>, %arg16: memref<32x32xbf16, #tpu.memory_space<vmem>>, %arg17: memref<1x32xf32, #tpu.memory_space<vmem>>, %arg18: memref<32x6xbf16, #tpu.memory_space<vmem>>, %arg19: memref<1x6xf32, #tpu.memory_space<vmem>>, %arg20: memref<1x1x5xf32, #tpu.memory_space<vmem>>, %arg21: memref<1x1x6xf32, #tpu.memory_space<vmem>>) attributes {dimension_semantics = [#tpu.dimension_semantics<parallel>], iteration_bounds = array<i64: 2>, scalar_prefetch = 0 : i64, scratch_operands = 0 : i64, tpu.core_type = #tpu.core_type<tc>, window_params = [{transform_indices = @transform_0, window_bounds = array<i64: 1, 16, 32>}, {pipeline_mode = #tpu.pipeline_mode<synchronous>, transform_indices = @transform_1, window_bounds = array<i64: 1, 32>}, {pipeline_mode = #tpu.pipeline_mode<synchronous>, transform_indices = @transform_2, window_bounds = array<i64: 1, 32>}, {pipeline_mode = #tpu.pipeline_mode<synchronous>, transform_indices = @transform_3, window_bounds = array<i64: 1, 32>}, {pipeline_mode = #tpu.pipeline_mode<synchronous>, transform_indices = @transform_4, window_bounds = array<i64: 32, 64>}, {pipeline_mode = #tpu.pipeline_mode<synchronous>, transform_indices = @transform_5, window_bounds = array<i64: 1, 64>}, {pipeline_mode = #tpu.pipeline_mode<synchronous>, transform_indices = @transform_6, window_bounds = array<i64: 32, 32>}, {pipeline_mode = #tpu.pipeline_mode<synchronous>, transform_indices = @transform_7, window_bounds = array<i64: 1, 32>}, {pipeline_mode = #tpu.pipeline_mode<synchronous>, transform_indices = @transform_8, window_bounds = array<i64: 32, 5>}, {pipeline_mode = #tpu.pipeline_mode<synchronous>, transform_indices = @transform_9, window_bounds = array<i64: 1, 5>}, {pipeline_mode = #tpu.pipeline_mode<synchronous>, transform_indices = @transform_10, window_bounds = array<i64: 1, 32>}, {pipeline_mode = #tpu.pipeline_mode<synchronous>, transform_indices = @transform_11, window_bounds = array<i64: 1, 32>}, {pipeline_mode = #tpu.pipeline_mode<synchronous>, transform_indices = @transform_12, window_bounds = array<i64: 1, 32>}, {pipeline_mode = #tpu.pipeline_mode<synchronous>, transform_indices = @transform_13, window_bounds = array<i64: 32, 64>}, {pipeline_mode = #tpu.pipeline_mode<synchronous>, transform_indices = @transform_14, window_bounds = array<i64: 1, 64>}, {pipeline_mode = #tpu.pipeline_mode<synchronous>, transform_indices = @transform_15, window_bounds = array<i64: 32, 32>}, {pipeline_mode = #tpu.pipeline_mode<synchronous>, transform_indices = @transform_16, window_bounds = array<i64: 1, 32>}, {pipeline_mode = #tpu.pipeline_mode<synchronous>, transform_indices = @transform_17, window_bounds = array<i64: 32, 6>}, {pipeline_mode = #tpu.pipeline_mode<synchronous>, transform_indices = @transform_18, window_bounds = array<i64: 1, 6>}, {transform_indices = @transform_19, window_bounds = array<i64: 1, 1, 5>}, {transform_indices = @transform_20, window_bounds = array<i64: 1, 1, 6>}]} {
    %c0 = arith.constant 0 : index
    %c0_0 = arith.constant 0 : index
    %c0_1 = arith.constant 0 : index
    %0 = vector.load %arg1[%c0, %c0_0, %c0_1] : memref<1x16x32xf32, #tpu.memory_space<vmem>>, vector<1x16x32xf32>
    %1 = vector.shape_cast %0 : vector<1x16x32xf32> to vector<16x32xf32>
    %c0_2 = arith.constant 0 : index
    %c0_3 = arith.constant 0 : index
    %2 = vector.load %arg3[%c0_2, %c0_3] : memref<1x32xf32, #tpu.memory_space<vmem>>, vector<1x32xf32>
    %c0_4 = arith.constant 0 : index
    %c0_5 = arith.constant 0 : index
    %3 = vector.load %arg4[%c0_4, %c0_5] : memref<1x32xf32, #tpu.memory_space<vmem>>, vector<1x32xf32>
    %cst = arith.constant dense<0.000000e+00> : vector<16xf32>
    %4 = vector.multi_reduction <add>, %1, %cst [1] : vector<16x32xf32> to vector<16xf32>
    %5 = vector.shape_cast %4 : vector<16xf32> to vector<16x1xf32>
    %cst_6 = arith.constant 3.200000e+01 : f32
    %6 = vector.broadcast %cst_6 : f32 to vector<16x1xf32>
    %7 = arith.divf %5, %6 : vector<16x1xf32>
    %8 = vector.broadcast %7 : vector<16x1xf32> to vector<16x32xf32>
    %9 = arith.subf %1, %8 : vector<16x32xf32>
    %10 = arith.mulf %9, %9 : vector<16x32xf32>
    %cst_7 = arith.constant dense<0.000000e+00> : vector<16xf32>
    %11 = vector.multi_reduction <add>, %10, %cst_7 [1] : vector<16x32xf32> to vector<16xf32>
    %12 = vector.shape_cast %11 : vector<16xf32> to vector<16x1xf32>
    %cst_8 = arith.constant 3.200000e+01 : f32
    %13 = vector.broadcast %cst_8 : f32 to vector<16x1xf32>
    %14 = arith.divf %12, %13 : vector<16x1xf32>
    %15 = vector.broadcast %7 : vector<16x1xf32> to vector<16x32xf32>
    %16 = arith.subf %1, %15 : vector<16x32xf32>
    %cst_9 = arith.constant 9.99999974E-6 : f32
    %17 = vector.broadcast %cst_9 : f32 to vector<16x1xf32>
    %18 = arith.addf %14, %17 : vector<16x1xf32>
    %19 = math.rsqrt %18 : vector<16x1xf32>
    %20 = vector.broadcast %19 : vector<16x1xf32> to vector<16x32xf32>
    %21 = arith.mulf %16, %20 : vector<16x32xf32>
    %22 = vector.broadcast %2 : vector<1x32xf32> to vector<16x32xf32>
    %23 = arith.mulf %21, %22 : vector<16x32xf32>
    %24 = vector.broadcast %3 : vector<1x32xf32> to vector<16x32xf32>
    %25 = arith.addf %23, %24 : vector<16x32xf32>
    %26 = arith.truncf %25 : vector<16x32xf32> to vector<16x32xbf16>
    %c0_10 = arith.constant 0 : index
    %c0_11 = arith.constant 0 : index
    %27 = vector.load %arg5[%c0_10, %c0_11] : memref<32x64xbf16, #tpu.memory_space<vmem>>, vector<32x64xbf16>
    %cst_12 = arith.constant dense<0.000000e+00> : vector<16x64xf32>
    %28 = tpu.matmul %26, %27, %cst_12 {dimension_numbers = #tpu.dot_dimension_numbers<[1], [0], [0], [1], [0, 0, 1, 1], [], []>} : vector<16x32xbf16>, vector<32x64xbf16>, vector<16x64xf32> -> vector<16x64xf32>
    %c0_13 = arith.constant 0 : index
    %c0_14 = arith.constant 0 : index
    %29 = vector.load %arg6[%c0_13, %c0_14] : memref<1x64xf32, #tpu.memory_space<vmem>>, vector<1x64xf32>
    %30 = vector.broadcast %29 : vector<1x64xf32> to vector<16x64xf32>
    %31 = arith.addf %28, %30 : vector<16x64xf32>
    %c0_15 = arith.constant 0 : index
    %c0_16 = arith.constant 0 : index
    %32 = vector.load %arg2[%c0_15, %c0_16] : memref<1x32xf32, #tpu.memory_space<vmem>>, vector<1x32xf32>
    %33 = vector.extract_strided_slice %31 {offsets = [0, 0], sizes = [16, 32], strides = [1, 1]} : vector<16x64xf32> to vector<16x32xf32>
    %34 = vector.extract_strided_slice %31 {offsets = [0, 32], sizes = [16, 32], strides = [1, 1]} : vector<16x64xf32> to vector<16x32xf32>
    %35 = arith.truncf %32 : vector<1x32xf32> to vector<1x32xbf16>
    %36 = arith.truncf %33 : vector<16x32xf32> to vector<16x32xbf16>
    %37 = arith.truncf %34 : vector<16x32xf32> to vector<16x32xbf16>
    %38 = vector.extract_strided_slice %35 {offsets = [0, 0], sizes = [1, 8], strides = [1, 1]} : vector<1x32xbf16> to vector<1x8xbf16>
    %39 = vector.extract_strided_slice %36 {offsets = [0, 0], sizes = [16, 8], strides = [1, 1]} : vector<16x32xbf16> to vector<16x8xbf16>
    %cst_17 = arith.constant dense<0.000000e+00> : vector<1x16xf32>
    %40 = tpu.matmul %38, %39, %cst_17 {dimension_numbers = #tpu.dot_dimension_numbers<[1], [1], [0], [0], [0, 0, 1, 0], [], []>} : vector<1x8xbf16>, vector<16x8xbf16>, vector<1x16xf32> -> vector<1x16xf32>
    %cst_18 = arith.constant dense<0xFF800000> : vector<1xf32>
    %41 = vector.multi_reduction <maximumf>, %40, %cst_18 [1] : vector<1x16xf32> to vector<1xf32>
    %42 = vector.shape_cast %41 : vector<1xf32> to vector<1x1xf32>
    %43 = vector.broadcast %42 : vector<1x1xf32> to vector<1x16xf32>
    %44 = arith.subf %40, %43 : vector<1x16xf32>
    %45 = math.exp %44 : vector<1x16xf32>
    %cst_19 = arith.constant dense<0.000000e+00> : vector<1xf32>
    %46 = vector.multi_reduction <add>, %45, %cst_19 [1] : vector<1x16xf32> to vector<1xf32>
    %47 = vector.shape_cast %46 : vector<1xf32> to vector<1x1xf32>
    %48 = tpu.reciprocal %47 {approx = true} : vector<1x1xf32> -> vector<1x1xf32>
    %49 = vector.broadcast %48 : vector<1x1xf32> to vector<1x16xf32>
    %50 = arith.mulf %45, %49 : vector<1x16xf32>
    %51 = arith.truncf %50 : vector<1x16xf32> to vector<1x16xbf16>
    %52 = vector.extract_strided_slice %37 {offsets = [0, 0], sizes = [16, 8], strides = [1, 1]} : vector<16x32xbf16> to vector<16x8xbf16>
    %cst_20 = arith.constant dense<0.000000e+00> : vector<1x8xf32>
    %53 = tpu.matmul %51, %52, %cst_20 {dimension_numbers = #tpu.dot_dimension_numbers<[1], [0], [0], [1], [0, 0, 1, 1], [], []>} : vector<1x16xbf16>, vector<16x8xbf16>, vector<1x8xf32> -> vector<1x8xf32>
    %54 = vector.extract_strided_slice %35 {offsets = [0, 8], sizes = [1, 8], strides = [1, 1]} : vector<1x32xbf16> to vector<1x8xbf16>
    %55 = vector.extract_strided_slice %36 {offsets = [0, 8], sizes = [16, 8], strides = [1, 1]} : vector<16x32xbf16> to vector<16x8xbf16>
    %cst_21 = arith.constant dense<0.000000e+00> : vector<1x16xf32>
    %56 = tpu.matmul %54, %55, %cst_21 {dimension_numbers = #tpu.dot_dimension_numbers<[1], [1], [0], [0], [0, 0, 1, 0], [], []>} : vector<1x8xbf16>, vector<16x8xbf16>, vector<1x16xf32> -> vector<1x16xf32>
    %cst_22 = arith.constant dense<0xFF800000> : vector<1xf32>
    %57 = vector.multi_reduction <maximumf>, %56, %cst_22 [1] : vector<1x16xf32> to vector<1xf32>
    %58 = vector.shape_cast %57 : vector<1xf32> to vector<1x1xf32>
    %59 = vector.broadcast %58 : vector<1x1xf32> to vector<1x16xf32>
    %60 = arith.subf %56, %59 : vector<1x16xf32>
    %61 = math.exp %60 : vector<1x16xf32>
    %cst_23 = arith.constant dense<0.000000e+00> : vector<1xf32>
    %62 = vector.multi_reduction <add>, %61, %cst_23 [1] : vector<1x16xf32> to vector<1xf32>
    %63 = vector.shape_cast %62 : vector<1xf32> to vector<1x1xf32>
    %64 = tpu.reciprocal %63 {approx = true} : vector<1x1xf32> -> vector<1x1xf32>
    %65 = vector.broadcast %64 : vector<1x1xf32> to vector<1x16xf32>
    %66 = arith.mulf %61, %65 : vector<1x16xf32>
    %67 = arith.truncf %66 : vector<1x16xf32> to vector<1x16xbf16>
    %68 = vector.extract_strided_slice %37 {offsets = [0, 8], sizes = [16, 8], strides = [1, 1]} : vector<16x32xbf16> to vector<16x8xbf16>
    %cst_24 = arith.constant dense<0.000000e+00> : vector<1x8xf32>
    %69 = tpu.matmul %67, %68, %cst_24 {dimension_numbers = #tpu.dot_dimension_numbers<[1], [0], [0], [1], [0, 0, 1, 1], [], []>} : vector<1x16xbf16>, vector<16x8xbf16>, vector<1x8xf32> -> vector<1x8xf32>
    %70 = vector.extract_strided_slice %35 {offsets = [0, 16], sizes = [1, 8], strides = [1, 1]} : vector<1x32xbf16> to vector<1x8xbf16>
    %71 = vector.extract_strided_slice %36 {offsets = [0, 16], sizes = [16, 8], strides = [1, 1]} : vector<16x32xbf16> to vector<16x8xbf16>
    %cst_25 = arith.constant dense<0.000000e+00> : vector<1x16xf32>
    %72 = tpu.matmul %70, %71, %cst_25 {dimension_numbers = #tpu.dot_dimension_numbers<[1], [1], [0], [0], [0, 0, 1, 0], [], []>} : vector<1x8xbf16>, vector<16x8xbf16>, vector<1x16xf32> -> vector<1x16xf32>
    %cst_26 = arith.constant dense<0xFF800000> : vector<1xf32>
    %73 = vector.multi_reduction <maximumf>, %72, %cst_26 [1] : vector<1x16xf32> to vector<1xf32>
    %74 = vector.shape_cast %73 : vector<1xf32> to vector<1x1xf32>
    %75 = vector.broadcast %74 : vector<1x1xf32> to vector<1x16xf32>
    %76 = arith.subf %72, %75 : vector<1x16xf32>
    %77 = math.exp %76 : vector<1x16xf32>
    %cst_27 = arith.constant dense<0.000000e+00> : vector<1xf32>
    %78 = vector.multi_reduction <add>, %77, %cst_27 [1] : vector<1x16xf32> to vector<1xf32>
    %79 = vector.shape_cast %78 : vector<1xf32> to vector<1x1xf32>
    %80 = tpu.reciprocal %79 {approx = true} : vector<1x1xf32> -> vector<1x1xf32>
    %81 = vector.broadcast %80 : vector<1x1xf32> to vector<1x16xf32>
    %82 = arith.mulf %77, %81 : vector<1x16xf32>
    %83 = arith.truncf %82 : vector<1x16xf32> to vector<1x16xbf16>
    %84 = vector.extract_strided_slice %37 {offsets = [0, 16], sizes = [16, 8], strides = [1, 1]} : vector<16x32xbf16> to vector<16x8xbf16>
    %cst_28 = arith.constant dense<0.000000e+00> : vector<1x8xf32>
    %85 = tpu.matmul %83, %84, %cst_28 {dimension_numbers = #tpu.dot_dimension_numbers<[1], [0], [0], [1], [0, 0, 1, 1], [], []>} : vector<1x16xbf16>, vector<16x8xbf16>, vector<1x8xf32> -> vector<1x8xf32>
    %86 = vector.extract_strided_slice %35 {offsets = [0, 24], sizes = [1, 8], strides = [1, 1]} : vector<1x32xbf16> to vector<1x8xbf16>
    %87 = vector.extract_strided_slice %36 {offsets = [0, 24], sizes = [16, 8], strides = [1, 1]} : vector<16x32xbf16> to vector<16x8xbf16>
    %cst_29 = arith.constant dense<0.000000e+00> : vector<1x16xf32>
    %88 = tpu.matmul %86, %87, %cst_29 {dimension_numbers = #tpu.dot_dimension_numbers<[1], [1], [0], [0], [0, 0, 1, 0], [], []>} : vector<1x8xbf16>, vector<16x8xbf16>, vector<1x16xf32> -> vector<1x16xf32>
    %cst_30 = arith.constant dense<0xFF800000> : vector<1xf32>
    %89 = vector.multi_reduction <maximumf>, %88, %cst_30 [1] : vector<1x16xf32> to vector<1xf32>
    %90 = vector.shape_cast %89 : vector<1xf32> to vector<1x1xf32>
    %91 = vector.broadcast %90 : vector<1x1xf32> to vector<1x16xf32>
    %92 = arith.subf %88, %91 : vector<1x16xf32>
    %93 = math.exp %92 : vector<1x16xf32>
    %cst_31 = arith.constant dense<0.000000e+00> : vector<1xf32>
    %94 = vector.multi_reduction <add>, %93, %cst_31 [1] : vector<1x16xf32> to vector<1xf32>
    %95 = vector.shape_cast %94 : vector<1xf32> to vector<1x1xf32>
    %96 = tpu.reciprocal %95 {approx = true} : vector<1x1xf32> -> vector<1x1xf32>
    %97 = vector.broadcast %96 : vector<1x1xf32> to vector<1x16xf32>
    %98 = arith.mulf %93, %97 : vector<1x16xf32>
    %99 = arith.truncf %98 : vector<1x16xf32> to vector<1x16xbf16>
    %100 = vector.extract_strided_slice %37 {offsets = [0, 24], sizes = [16, 8], strides = [1, 1]} : vector<16x32xbf16> to vector<16x8xbf16>
    %cst_32 = arith.constant dense<0.000000e+00> : vector<1x8xf32>
    %101 = tpu.matmul %99, %100, %cst_32 {dimension_numbers = #tpu.dot_dimension_numbers<[1], [0], [0], [1], [0, 0, 1, 1], [], []>} : vector<1x16xbf16>, vector<16x8xbf16>, vector<1x8xf32> -> vector<1x8xf32>
    %102 = tpu.concatenate %53, %69, %85, %101 in 1 : vector<1x8xf32>, vector<1x8xf32>, vector<1x8xf32>, vector<1x8xf32> -> vector<1x32xf32>
    %103 = arith.truncf %102 : vector<1x32xf32> to vector<1x32xbf16>
    %c0_33 = arith.constant 0 : index
    %c0_34 = arith.constant 0 : index
    %104 = vector.load %arg7[%c0_33, %c0_34] : memref<32x32xbf16, #tpu.memory_space<vmem>>, vector<32x32xbf16>
    %cst_35 = arith.constant dense<0.000000e+00> : vector<1x32xf32>
    %105 = tpu.matmul %103, %104, %cst_35 {dimension_numbers = #tpu.dot_dimension_numbers<[1], [0], [0], [1], [0, 0, 1, 1], [], []>} : vector<1x32xbf16>, vector<32x32xbf16>, vector<1x32xf32> -> vector<1x32xf32>
    %c0_36 = arith.constant 0 : index
    %c0_37 = arith.constant 0 : index
    %106 = vector.load %arg8[%c0_36, %c0_37] : memref<1x32xf32, #tpu.memory_space<vmem>>, vector<1x32xf32>
    %107 = arith.addf %105, %106 : vector<1x32xf32>
    %108 = arith.truncf %107 : vector<1x32xf32> to vector<1x32xbf16>
    %c0_38 = arith.constant 0 : index
    %c0_39 = arith.constant 0 : index
    %109 = vector.load %arg9[%c0_38, %c0_39] : memref<32x5xbf16, #tpu.memory_space<vmem>>, vector<32x5xbf16>
    %cst_40 = arith.constant dense<0.000000e+00> : vector<1x5xf32>
    %110 = tpu.matmul %108, %109, %cst_40 {dimension_numbers = #tpu.dot_dimension_numbers<[1], [0], [0], [1], [0, 0, 1, 1], [], []>} : vector<1x32xbf16>, vector<32x5xbf16>, vector<1x5xf32> -> vector<1x5xf32>
    %c0_41 = arith.constant 0 : index
    %c0_42 = arith.constant 0 : index
    %111 = vector.load %arg10[%c0_41, %c0_42] : memref<1x5xf32, #tpu.memory_space<vmem>>, vector<1x5xf32>
    %112 = arith.addf %110, %111 : vector<1x5xf32>
    %c0_43 = arith.constant 0 : index
    %c0_44 = arith.constant 0 : index
    %c0_45 = arith.constant 0 : index
    %113 = vector.load %arg20[%c0_43, %c0_44, %c0_45] : memref<1x1x5xf32, #tpu.memory_space<vmem>>, vector<1x1x5xf32>
    %114 = vector.shape_cast %113 : vector<1x1x5xf32> to vector<1x5xf32>
    %115 = vector.shape_cast %112 : vector<1x5xf32> to vector<1x1x5xf32>
    tpu.vector_store %arg20[%c0_43, %c0_44, %c0_45], %115 {strides = array<i32>} : memref<1x1x5xf32, #tpu.memory_space<vmem>>, vector<1x1x5xf32>,
    %c0_46 = arith.constant 0 : index
    %c0_47 = arith.constant 0 : index
    %116 = vector.load %arg12[%c0_46, %c0_47] : memref<1x32xf32, #tpu.memory_space<vmem>>, vector<1x32xf32>
    %c0_48 = arith.constant 0 : index
    %c0_49 = arith.constant 0 : index
    %117 = vector.load %arg13[%c0_48, %c0_49] : memref<1x32xf32, #tpu.memory_space<vmem>>, vector<1x32xf32>
    %cst_50 = arith.constant dense<0.000000e+00> : vector<16xf32>
    %118 = vector.multi_reduction <add>, %1, %cst_50 [1] : vector<16x32xf32> to vector<16xf32>
    %119 = vector.shape_cast %118 : vector<16xf32> to vector<16x1xf32>
    %cst_51 = arith.constant 3.200000e+01 : f32
    %120 = vector.broadcast %cst_51 : f32 to vector<16x1xf32>
    %121 = arith.divf %119, %120 : vector<16x1xf32>
    %122 = vector.broadcast %121 : vector<16x1xf32> to vector<16x32xf32>
    %123 = arith.subf %1, %122 : vector<16x32xf32>
    %124 = arith.mulf %123, %123 : vector<16x32xf32>
    %cst_52 = arith.constant dense<0.000000e+00> : vector<16xf32>
    %125 = vector.multi_reduction <add>, %124, %cst_52 [1] : vector<16x32xf32> to vector<16xf32>
    %126 = vector.shape_cast %125 : vector<16xf32> to vector<16x1xf32>
    %cst_53 = arith.constant 3.200000e+01 : f32
    %127 = vector.broadcast %cst_53 : f32 to vector<16x1xf32>
    %128 = arith.divf %126, %127 : vector<16x1xf32>
    %129 = vector.broadcast %121 : vector<16x1xf32> to vector<16x32xf32>
    %130 = arith.subf %1, %129 : vector<16x32xf32>
    %cst_54 = arith.constant 9.99999974E-6 : f32
    %131 = vector.broadcast %cst_54 : f32 to vector<16x1xf32>
    %132 = arith.addf %128, %131 : vector<16x1xf32>
    %133 = math.rsqrt %132 : vector<16x1xf32>
    %134 = vector.broadcast %133 : vector<16x1xf32> to vector<16x32xf32>
    %135 = arith.mulf %130, %134 : vector<16x32xf32>
    %136 = vector.broadcast %116 : vector<1x32xf32> to vector<16x32xf32>
    %137 = arith.mulf %135, %136 : vector<16x32xf32>
    %138 = vector.broadcast %117 : vector<1x32xf32> to vector<16x32xf32>
    %139 = arith.addf %137, %138 : vector<16x32xf32>
    %140 = arith.truncf %139 : vector<16x32xf32> to vector<16x32xbf16>
    %c0_55 = arith.constant 0 : index
    %c0_56 = arith.constant 0 : index
    %141 = vector.load %arg14[%c0_55, %c0_56] : memref<32x64xbf16, #tpu.memory_space<vmem>>, vector<32x64xbf16>
    %cst_57 = arith.constant dense<0.000000e+00> : vector<16x64xf32>
    %142 = tpu.matmul %140, %141, %cst_57 {dimension_numbers = #tpu.dot_dimension_numbers<[1], [0], [0], [1], [0, 0, 1, 1], [], []>} : vector<16x32xbf16>, vector<32x64xbf16>, vector<16x64xf32> -> vector<16x64xf32>
    %c0_58 = arith.constant 0 : index
    %c0_59 = arith.constant 0 : index
    %143 = vector.load %arg15[%c0_58, %c0_59] : memref<1x64xf32, #tpu.memory_space<vmem>>, vector<1x64xf32>
    %144 = vector.broadcast %143 : vector<1x64xf32> to vector<16x64xf32>
    %145 = arith.addf %142, %144 : vector<16x64xf32>
    %c0_60 = arith.constant 0 : index
    %c0_61 = arith.constant 0 : index
    %146 = vector.load %arg11[%c0_60, %c0_61] : memref<1x32xf32, #tpu.memory_space<vmem>>, vector<1x32xf32>
    %147 = vector.extract_strided_slice %145 {offsets = [0, 0], sizes = [16, 32], strides = [1, 1]} : vector<16x64xf32> to vector<16x32xf32>
    %148 = vector.extract_strided_slice %145 {offsets = [0, 32], sizes = [16, 32], strides = [1, 1]} : vector<16x64xf32> to vector<16x32xf32>
    %149 = arith.truncf %146 : vector<1x32xf32> to vector<1x32xbf16>
    %150 = arith.truncf %147 : vector<16x32xf32> to vector<16x32xbf16>
    %151 = arith.truncf %148 : vector<16x32xf32> to vector<16x32xbf16>
    %152 = vector.extract_strided_slice %149 {offsets = [0, 0], sizes = [1, 8], strides = [1, 1]} : vector<1x32xbf16> to vector<1x8xbf16>
    %153 = vector.extract_strided_slice %150 {offsets = [0, 0], sizes = [16, 8], strides = [1, 1]} : vector<16x32xbf16> to vector<16x8xbf16>
    %cst_62 = arith.constant dense<0.000000e+00> : vector<1x16xf32>
    %154 = tpu.matmul %152, %153, %cst_62 {dimension_numbers = #tpu.dot_dimension_numbers<[1], [1], [0], [0], [0, 0, 1, 0], [], []>} : vector<1x8xbf16>, vector<16x8xbf16>, vector<1x16xf32> -> vector<1x16xf32>
    %cst_63 = arith.constant dense<0xFF800000> : vector<1xf32>
    %155 = vector.multi_reduction <maximumf>, %154, %cst_63 [1] : vector<1x16xf32> to vector<1xf32>
    %156 = vector.shape_cast %155 : vector<1xf32> to vector<1x1xf32>
    %157 = vector.broadcast %156 : vector<1x1xf32> to vector<1x16xf32>
    %158 = arith.subf %154, %157 : vector<1x16xf32>
    %159 = math.exp %158 : vector<1x16xf32>
    %cst_64 = arith.constant dense<0.000000e+00> : vector<1xf32>
    %160 = vector.multi_reduction <add>, %159, %cst_64 [1] : vector<1x16xf32> to vector<1xf32>
    %161 = vector.shape_cast %160 : vector<1xf32> to vector<1x1xf32>
    %162 = tpu.reciprocal %161 {approx = true} : vector<1x1xf32> -> vector<1x1xf32>
    %163 = vector.broadcast %162 : vector<1x1xf32> to vector<1x16xf32>
    %164 = arith.mulf %159, %163 : vector<1x16xf32>
    %165 = arith.truncf %164 : vector<1x16xf32> to vector<1x16xbf16>
    %166 = vector.extract_strided_slice %151 {offsets = [0, 0], sizes = [16, 8], strides = [1, 1]} : vector<16x32xbf16> to vector<16x8xbf16>
    %cst_65 = arith.constant dense<0.000000e+00> : vector<1x8xf32>
    %167 = tpu.matmul %165, %166, %cst_65 {dimension_numbers = #tpu.dot_dimension_numbers<[1], [0], [0], [1], [0, 0, 1, 1], [], []>} : vector<1x16xbf16>, vector<16x8xbf16>, vector<1x8xf32> -> vector<1x8xf32>
    %168 = vector.extract_strided_slice %149 {offsets = [0, 8], sizes = [1, 8], strides = [1, 1]} : vector<1x32xbf16> to vector<1x8xbf16>
    %169 = vector.extract_strided_slice %150 {offsets = [0, 8], sizes = [16, 8], strides = [1, 1]} : vector<16x32xbf16> to vector<16x8xbf16>
    %cst_66 = arith.constant dense<0.000000e+00> : vector<1x16xf32>
    %170 = tpu.matmul %168, %169, %cst_66 {dimension_numbers = #tpu.dot_dimension_numbers<[1], [1], [0], [0], [0, 0, 1, 0], [], []>} : vector<1x8xbf16>, vector<16x8xbf16>, vector<1x16xf32> -> vector<1x16xf32>
    %cst_67 = arith.constant dense<0xFF800000> : vector<1xf32>
    %171 = vector.multi_reduction <maximumf>, %170, %cst_67 [1] : vector<1x16xf32> to vector<1xf32>
    %172 = vector.shape_cast %171 : vector<1xf32> to vector<1x1xf32>
    %173 = vector.broadcast %172 : vector<1x1xf32> to vector<1x16xf32>
    %174 = arith.subf %170, %173 : vector<1x16xf32>
    %175 = math.exp %174 : vector<1x16xf32>
    %cst_68 = arith.constant dense<0.000000e+00> : vector<1xf32>
    %176 = vector.multi_reduction <add>, %175, %cst_68 [1] : vector<1x16xf32> to vector<1xf32>
    %177 = vector.shape_cast %176 : vector<1xf32> to vector<1x1xf32>
    %178 = tpu.reciprocal %177 {approx = true} : vector<1x1xf32> -> vector<1x1xf32>
    %179 = vector.broadcast %178 : vector<1x1xf32> to vector<1x16xf32>
    %180 = arith.mulf %175, %179 : vector<1x16xf32>
    %181 = arith.truncf %180 : vector<1x16xf32> to vector<1x16xbf16>
    %182 = vector.extract_strided_slice %151 {offsets = [0, 8], sizes = [16, 8], strides = [1, 1]} : vector<16x32xbf16> to vector<16x8xbf16>
    %cst_69 = arith.constant dense<0.000000e+00> : vector<1x8xf32>
    %183 = tpu.matmul %181, %182, %cst_69 {dimension_numbers = #tpu.dot_dimension_numbers<[1], [0], [0], [1], [0, 0, 1, 1], [], []>} : vector<1x16xbf16>, vector<16x8xbf16>, vector<1x8xf32> -> vector<1x8xf32>
    %184 = vector.extract_strided_slice %149 {offsets = [0, 16], sizes = [1, 8], strides = [1, 1]} : vector<1x32xbf16> to vector<1x8xbf16>
    %185 = vector.extract_strided_slice %150 {offsets = [0, 16], sizes = [16, 8], strides = [1, 1]} : vector<16x32xbf16> to vector<16x8xbf16>
    %cst_70 = arith.constant dense<0.000000e+00> : vector<1x16xf32>
    %186 = tpu.matmul %184, %185, %cst_70 {dimension_numbers = #tpu.dot_dimension_numbers<[1], [1], [0], [0], [0, 0, 1, 0], [], []>} : vector<1x8xbf16>, vector<16x8xbf16>, vector<1x16xf32> -> vector<1x16xf32>
    %cst_71 = arith.constant dense<0xFF800000> : vector<1xf32>
    %187 = vector.multi_reduction <maximumf>, %186, %cst_71 [1] : vector<1x16xf32> to vector<1xf32>
    %188 = vector.shape_cast %187 : vector<1xf32> to vector<1x1xf32>
    %189 = vector.broadcast %188 : vector<1x1xf32> to vector<1x16xf32>
    %190 = arith.subf %186, %189 : vector<1x16xf32>
    %191 = math.exp %190 : vector<1x16xf32>
    %cst_72 = arith.constant dense<0.000000e+00> : vector<1xf32>
    %192 = vector.multi_reduction <add>, %191, %cst_72 [1] : vector<1x16xf32> to vector<1xf32>
    %193 = vector.shape_cast %192 : vector<1xf32> to vector<1x1xf32>
    %194 = tpu.reciprocal %193 {approx = true} : vector<1x1xf32> -> vector<1x1xf32>
    %195 = vector.broadcast %194 : vector<1x1xf32> to vector<1x16xf32>
    %196 = arith.mulf %191, %195 : vector<1x16xf32>
    %197 = arith.truncf %196 : vector<1x16xf32> to vector<1x16xbf16>
    %198 = vector.extract_strided_slice %151 {offsets = [0, 16], sizes = [16, 8], strides = [1, 1]} : vector<16x32xbf16> to vector<16x8xbf16>
    %cst_73 = arith.constant dense<0.000000e+00> : vector<1x8xf32>
    %199 = tpu.matmul %197, %198, %cst_73 {dimension_numbers = #tpu.dot_dimension_numbers<[1], [0], [0], [1], [0, 0, 1, 1], [], []>} : vector<1x16xbf16>, vector<16x8xbf16>, vector<1x8xf32> -> vector<1x8xf32>
    %200 = vector.extract_strided_slice %149 {offsets = [0, 24], sizes = [1, 8], strides = [1, 1]} : vector<1x32xbf16> to vector<1x8xbf16>
    %201 = vector.extract_strided_slice %150 {offsets = [0, 24], sizes = [16, 8], strides = [1, 1]} : vector<16x32xbf16> to vector<16x8xbf16>
    %cst_74 = arith.constant dense<0.000000e+00> : vector<1x16xf32>
    %202 = tpu.matmul %200, %201, %cst_74 {dimension_numbers = #tpu.dot_dimension_numbers<[1], [1], [0], [0], [0, 0, 1, 0], [], []>} : vector<1x8xbf16>, vector<16x8xbf16>, vector<1x16xf32> -> vector<1x16xf32>
    %cst_75 = arith.constant dense<0xFF800000> : vector<1xf32>
    %203 = vector.multi_reduction <maximumf>, %202, %cst_75 [1] : vector<1x16xf32> to vector<1xf32>
    %204 = vector.shape_cast %203 : vector<1xf32> to vector<1x1xf32>
    %205 = vector.broadcast %204 : vector<1x1xf32> to vector<1x16xf32>
    %206 = arith.subf %202, %205 : vector<1x16xf32>
    %207 = math.exp %206 : vector<1x16xf32>
    %cst_76 = arith.constant dense<0.000000e+00> : vector<1xf32>
    %208 = vector.multi_reduction <add>, %207, %cst_76 [1] : vector<1x16xf32> to vector<1xf32>
    %209 = vector.shape_cast %208 : vector<1xf32> to vector<1x1xf32>
    %210 = tpu.reciprocal %209 {approx = true} : vector<1x1xf32> -> vector<1x1xf32>
    %211 = vector.broadcast %210 : vector<1x1xf32> to vector<1x16xf32>
    %212 = arith.mulf %207, %211 : vector<1x16xf32>
    %213 = arith.truncf %212 : vector<1x16xf32> to vector<1x16xbf16>
    %214 = vector.extract_strided_slice %151 {offsets = [0, 24], sizes = [16, 8], strides = [1, 1]} : vector<16x32xbf16> to vector<16x8xbf16>
    %cst_77 = arith.constant dense<0.000000e+00> : vector<1x8xf32>
    %215 = tpu.matmul %213, %214, %cst_77 {dimension_numbers = #tpu.dot_dimension_numbers<[1], [0], [0], [1], [0, 0, 1, 1], [], []>} : vector<1x16xbf16>, vector<16x8xbf16>, vector<1x8xf32> -> vector<1x8xf32>
    %216 = tpu.concatenate %167, %183, %199, %215 in 1 : vector<1x8xf32>, vector<1x8xf32>, vector<1x8xf32>, vector<1x8xf32> -> vector<1x32xf32>
    %217 = arith.truncf %216 : vector<1x32xf32> to vector<1x32xbf16>
    %c0_78 = arith.constant 0 : index
    %c0_79 = arith.constant 0 : index
    %218 = vector.load %arg16[%c0_78, %c0_79] : memref<32x32xbf16, #tpu.memory_space<vmem>>, vector<32x32xbf16>
    %cst_80 = arith.constant dense<0.000000e+00> : vector<1x32xf32>
    %219 = tpu.matmul %217, %218, %cst_80 {dimension_numbers = #tpu.dot_dimension_numbers<[1], [0], [0], [1], [0, 0, 1, 1], [], []>} : vector<1x32xbf16>, vector<32x32xbf16>, vector<1x32xf32> -> vector<1x32xf32>
    %c0_81 = arith.constant 0 : index
    %c0_82 = arith.constant 0 : index
    %220 = vector.load %arg17[%c0_81, %c0_82] : memref<1x32xf32, #tpu.memory_space<vmem>>, vector<1x32xf32>
    %221 = arith.addf %219, %220 : vector<1x32xf32>
    %222 = arith.truncf %221 : vector<1x32xf32> to vector<1x32xbf16>
    %c0_83 = arith.constant 0 : index
    %c0_84 = arith.constant 0 : index
    %223 = vector.load %arg18[%c0_83, %c0_84] : memref<32x6xbf16, #tpu.memory_space<vmem>>, vector<32x6xbf16>
    %cst_85 = arith.constant dense<0.000000e+00> : vector<1x6xf32>
    %224 = tpu.matmul %222, %223, %cst_85 {dimension_numbers = #tpu.dot_dimension_numbers<[1], [0], [0], [1], [0, 0, 1, 1], [], []>} : vector<1x32xbf16>, vector<32x6xbf16>, vector<1x6xf32> -> vector<1x6xf32>
    %c0_86 = arith.constant 0 : index
    %c0_87 = arith.constant 0 : index
    %225 = vector.load %arg19[%c0_86, %c0_87] : memref<1x6xf32, #tpu.memory_space<vmem>>, vector<1x6xf32>
    %226 = arith.addf %224, %225 : vector<1x6xf32>
    %c0_88 = arith.constant 0 : index
    %c0_89 = arith.constant 0 : index
    %c0_90 = arith.constant 0 : index
    %227 = vector.load %arg21[%c0_88, %c0_89, %c0_90] : memref<1x1x6xf32, #tpu.memory_space<vmem>>, vector<1x1x6xf32>
    %228 = vector.shape_cast %227 : vector<1x1x6xf32> to vector<1x6xf32>
    %229 = vector.shape_cast %226 : vector<1x6xf32> to vector<1x1x6xf32>
    tpu.vector_store %arg21[%c0_88, %c0_89, %c0_90], %229 {strides = array<i32>} : memref<1x1x6xf32, #tpu.memory_space<vmem>>, vector<1x1x6xf32>,
    return
  }
  func.func @transform_0(%arg0: i32) -> (i32, i32, i32) {
    %c0_i32 = arith.constant 0 : i32
    %c0_i32_0 = arith.constant 0 : i32
    %c0_i32_1 = arith.constant 0 : i32
    return %arg0, %c0_i32, %c0_i32_0 : i32, i32, i32
  }
  func.func @transform_1(%arg0: i32) -> (i32, i32) {
    %c0_i32 = arith.constant 0 : i32
    %c0_i32_0 = arith.constant 0 : i32
    %c0_i32_1 = arith.constant 0 : i32
    return %c0_i32, %c0_i32_0 : i32, i32
  }
  func.func @transform_2(%arg0: i32) -> (i32, i32) {
    %c0_i32 = arith.constant 0 : i32
    %c0_i32_0 = arith.constant 0 : i32
    %c0_i32_1 = arith.constant 0 : i32
    return %c0_i32, %c0_i32_0 : i32, i32
  }
  func.func @transform_3(%arg0: i32) -> (i32, i32) {
    %c0_i32 = arith.constant 0 : i32
    %c0_i32_0 = arith.constant 0 : i32
    %c0_i32_1 = arith.constant 0 : i32
    return %c0_i32, %c0_i32_0 : i32, i32
  }
  func.func @transform_4(%arg0: i32) -> (i32, i32) {
    %c0_i32 = arith.constant 0 : i32
    %c0_i32_0 = arith.constant 0 : i32
    %c0_i32_1 = arith.constant 0 : i32
    return %c0_i32, %c0_i32_0 : i32, i32
  }
  func.func @transform_5(%arg0: i32) -> (i32, i32) {
    %c0_i32 = arith.constant 0 : i32
    %c0_i32_0 = arith.constant 0 : i32
    %c0_i32_1 = arith.constant 0 : i32
    return %c0_i32, %c0_i32_0 : i32, i32
  }
  func.func @transform_6(%arg0: i32) -> (i32, i32) {
    %c0_i32 = arith.constant 0 : i32
    %c0_i32_0 = arith.constant 0 : i32
    %c0_i32_1 = arith.constant 0 : i32
    return %c0_i32, %c0_i32_0 : i32, i32
  }
  func.func @transform_7(%arg0: i32) -> (i32, i32) {
    %c0_i32 = arith.constant 0 : i32
    %c0_i32_0 = arith.constant 0 : i32
    %c0_i32_1 = arith.constant 0 : i32
    return %c0_i32, %c0_i32_0 : i32, i32
  }
  func.func @transform_8(%arg0: i32) -> (i32, i32) {
    %c0_i32 = arith.constant 0 : i32
    %c0_i32_0 = arith.constant 0 : i32
    %c0_i32_1 = arith.constant 0 : i32
    return %c0_i32, %c0_i32_0 : i32, i32
  }
  func.func @transform_9(%arg0: i32) -> (i32, i32) {
    %c0_i32 = arith.constant 0 : i32
    %c0_i32_0 = arith.constant 0 : i32
    %c0_i32_1 = arith.constant 0 : i32
    return %c0_i32, %c0_i32_0 : i32, i32
  }
  func.func @transform_10(%arg0: i32) -> (i32, i32) {
    %c0_i32 = arith.constant 0 : i32
    %c0_i32_0 = arith.constant 0 : i32
    %c0_i32_1 = arith.constant 0 : i32
    return %c0_i32, %c0_i32_0 : i32, i32
  }
  func.func @transform_11(%arg0: i32) -> (i32, i32) {
    %c0_i32 = arith.constant 0 : i32
    %c0_i32_0 = arith.constant 0 : i32
    %c0_i32_1 = arith.constant 0 : i32
    return %c0_i32, %c0_i32_0 : i32, i32
  }
  func.func @transform_12(%arg0: i32) -> (i32, i32) {
    %c0_i32 = arith.constant 0 : i32
    %c0_i32_0 = arith.constant 0 : i32
    %c0_i32_1 = arith.constant 0 : i32
    return %c0_i32, %c0_i32_0 : i32, i32
  }
  func.func @transform_13(%arg0: i32) -> (i32, i32) {
    %c0_i32 = arith.constant 0 : i32
    %c0_i32_0 = arith.constant 0 : i32
    %c0_i32_1 = arith.constant 0 : i32
    return %c0_i32, %c0_i32_0 : i32, i32
  }
  func.func @transform_14(%arg0: i32) -> (i32, i32) {
    %c0_i32 = arith.constant 0 : i32
    %c0_i32_0 = arith.constant 0 : i32
    %c0_i32_1 = arith.constant 0 : i32
    return %c0_i32, %c0_i32_0 : i32, i32
  }
  func.func @transform_15(%arg0: i32) -> (i32, i32) {
    %c0_i32 = arith.constant 0 : i32
    %c0_i32_0 = arith.constant 0 : i32
    %c0_i32_1 = arith.constant 0 : i32
    return %c0_i32, %c0_i32_0 : i32, i32
  }
  func.func @transform_16(%arg0: i32) -> (i32, i32) {
    %c0_i32 = arith.constant 0 : i32
    %c0_i32_0 = arith.constant 0 : i32
    %c0_i32_1 = arith.constant 0 : i32
    return %c0_i32, %c0_i32_0 : i32, i32
  }
  func.func @transform_17(%arg0: i32) -> (i32, i32) {
    %c0_i32 = arith.constant 0 : i32
    %c0_i32_0 = arith.constant 0 : i32
    %c0_i32_1 = arith.constant 0 : i32
    return %c0_i32, %c0_i32_0 : i32, i32
  }
  func.func @transform_18(%arg0: i32) -> (i32, i32) {
    %c0_i32 = arith.constant 0 : i32
    %c0_i32_0 = arith.constant 0 : i32
    %c0_i32_1 = arith.constant 0 : i32
    return %c0_i32, %c0_i32_0 : i32, i32
  }
  func.func @transform_19(%arg0: i32) -> (i32, i32, i32) {
    %c0_i32 = arith.constant 0 : i32
    %c0_i32_0 = arith.constant 0 : i32
    %c0_i32_1 = arith.constant 0 : i32
    return %arg0, %c0_i32, %c0_i32_0 : i32, i32, i32
  }
  func.func @transform_20(%arg0: i32) -> (i32, i32, i32) {
    %c0_i32 = arith.constant 0 : i32
    %c0_i32_0 = arith.constant 0 : i32
    %c0_i32_1 = arith.constant 0 : i32
    return %arg0, %c0_i32, %c0_i32_0 : i32, i32, i32
  }
}

</mosaic_0001>

<llo_original>
// kernel: sas_perceiver_io_forward.8
$region0: #{sas_perceiver_io_forward.8}
  #allocation0 [shape = 'u32[]', space=smem, size = 0x4, offset = 0x4, fixed_abs, tag = 'smem constant byte address 0x4 - core index']
  #allocation1 [shape = 'u32[144,128]{1,0:T(1,128)}', space=vmem, size = 0x12000, scoped, tag = 'internal scratch']
  %s0 = inlined_call_operand.vmem [shape: f32[32,32], index: 0, kind: input, shape index: {}]
  %s1 = inlined_call_operand.vmem [shape: f32[1,32], index: 1, kind: input, shape index: {}]
  %s2 = inlined_call_operand.vmem [shape: f32[1,32], index: 2, kind: input, shape index: {}]
  %s3 = inlined_call_operand.vmem [shape: bf16[32,64], index: 3, kind: input, shape index: {}]
  %s4 = inlined_call_operand.vmem [shape: f32[1,64], index: 4, kind: input, shape index: {}]
  %s5 = inlined_call_operand.vmem [shape: bf16[64,32], index: 5, kind: input, shape index: {}]
  %s6 = inlined_call_operand.vmem [shape: f32[1,32], index: 6, kind: input, shape index: {}]
  %s7 = inlined_call_operand.vmem [shape: f32[32,32], index: 7, kind: output, shape index: {}]
  %s8 = sld [smem:[#allocation0]]
  $region38: #{sas_perceiver_io_forward.8} parent=0
    _
  %s10 = ssub.s32 1, %s8
  %s11 = scalar_select 0, %s10, %s8
  // Predicated region
  $region2: #{sas_perceiver_io_forward.8} parent=0 // pred_check
    _
  $region3: #{sas_perceiver_io_forward.8} parent=0 // pred_check_branch
    %13 = sbr.rel (0) target = $region5
  $region4: #{sas_perceiver_io_forward.8} parent=0 // pred_region
    _
  $region5: #{sas_perceiver_io_forward.8} parent=0 // pred_fallthru
    _
  // Predicated region
  $region6: #{sas_perceiver_io_forward.8} parent=0 // pred_check
    _
  $region7: #{sas_perceiver_io_forward.8} parent=0 // pred_check_branch
    %15 = sbr.rel (0) target = $region9
  $region8: #{sas_perceiver_io_forward.8} parent=0 // pred_region
    _
  $region9: #{sas_perceiver_io_forward.8} parent=0 // pred_fallthru
    _
  // Predicated region
  $region10: #{sas_perceiver_io_forward.8} parent=0 // pred_check
    _
  $region11: #{sas_perceiver_io_forward.8} parent=0 // pred_check_branch
    %17 = sbr.rel (0) target = $region13
  $region12: #{sas_perceiver_io_forward.8} parent=0 // pred_region
    _
  $region13: #{sas_perceiver_io_forward.8} parent=0 // pred_fallthru
    _
  // Predicated region
  $region14: #{sas_perceiver_io_forward.8} parent=0 // pred_check
    _
  $region15: #{sas_perceiver_io_forward.8} parent=0 // pred_check_branch
    %19 = sbr.rel (0) target = $region17
  $region16: #{sas_perceiver_io_forward.8} parent=0 // pred_region
    _
  $region17: #{sas_perceiver_io_forward.8} parent=0 // pred_fallthru
    _
  // Predicated region
  $region18: #{sas_perceiver_io_forward.8} parent=0 // pred_check
    _
  $region19: #{sas_perceiver_io_forward.8} parent=0 // pred_check_branch
    %21 = sbr.rel (0) target = $region21
  $region20: #{sas_perceiver_io_forward.8} parent=0 // pred_region
    _
  $region21: #{sas_perceiver_io_forward.8} parent=0 // pred_fallthru
    _
  // Predicated region
  $region22: #{sas_perceiver_io_forward.8} parent=0 // pred_check
    _
  $region23: #{sas_perceiver_io_forward.8} parent=0 // pred_check_branch
    %23 = sbr.rel (0) target = $region25
  $region24: #{sas_perceiver_io_forward.8} parent=0 // pred_region
    _
  $region25: #{sas_perceiver_io_forward.8} parent=0 // pred_fallthru
    _
  // Predicated region
  $region26: #{sas_perceiver_io_forward.8} parent=0 // pred_check
    _
  $region27: #{sas_perceiver_io_forward.8} parent=0 // pred_check_branch
    %25 = sbr.rel (0) target = $region29
  $region28: #{sas_perceiver_io_forward.8} parent=0 // pred_region
    _
  $region29: #{sas_perceiver_io_forward.8} parent=0 // pred_fallthru
    _
  %v27 = vld [vmem:[%s0] sm:$0xff]
  %v28 = vld [vmem:[%s0 + $0x8] sm:$0xff]
  %v29 = vld [vmem:[%s0 + $0x10] sm:$0xff]
  %v30 = vld [vmem:[%s0 + $0x18] sm:$0xff]
  %v31 = vld [vmem:[%s1] sm:$0x1]
  %v32 = vld [vmem:[%s2] sm:$0x1]
  %vm33 = vcmask 261120
  %v34 = vsel %vm33, %v27, 0.0
  %35 = vadd.xlane.f32.xlu0 %v34
  %v36 = vpop.xlane.xlu0 %35
  %v37 = vsel %vm33, %v28, 0.0
  %38 = vadd.xlane.f32.xlu0 %v37
  %v39 = vpop.xlane.xlu0 %38
  %v40 = vsel %vm33, %v29, 0.0
  %41 = vadd.xlane.f32.xlu0 %v40
  %v42 = vpop.xlane.xlu0 %41
  %v43 = vsel %vm33, %v30, 0.0
  %44 = vadd.xlane.f32.xlu0 %v43
  %v45 = vpop.xlane.xlu0 %44
  %v46 = vrcp.pop 32.0
  %v47 = vmul.f32 %v36, %v46
  %v48 = vmul.f32 %v39, %v46
  %v49 = vmul.f32 %v42, %v46
  %v50 = vmul.f32 %v45, %v46
  %v51 = vsub.f32 %v27, %v47
  %v52 = vsub.f32 %v28, %v48
  %v53 = vsub.f32 %v29, %v49
  %v54 = vsub.f32 %v30, %v50
  %v55 = vmul.f32 %v51, %v51
  %v56 = vmul.f32 %v52, %v52
  %v57 = vmul.f32 %v53, %v53
  %v58 = vmul.f32 %v54, %v54
  %v59 = vsel %vm33, %v55, 0.0
  %60 = vadd.xlane.f32.xlu0 %v59
  %v61 = vpop.xlane.xlu0 %60
  %v62 = vsel %vm33, %v56, 0.0
  %63 = vadd.xlane.f32.xlu0 %v62
  %v64 = vpop.xlane.xlu0 %63
  %v65 = vsel %vm33, %v57, 0.0
  %66 = vadd.xlane.f32.xlu0 %v65
  %v67 = vpop.xlane.xlu0 %66
  %v68 = vsel %vm33, %v58, 0.0
  %69 = vadd.xlane.f32.xlu0 %v68
  %v70 = vpop.xlane.xlu0 %69
  %v71 = vmul.f32 %v61, %v46
  %v72 = vmul.f32 %v64, %v46
  %v73 = vmul.f32 %v67, %v46
  %v74 = vmul.f32 %v70, %v46
  %v75 = vadd.f32 %v71, 1e-05
  %v76 = vadd.f32 %v72, 1e-05
  %v77 = vadd.f32 %v73, 1e-05
  %v78 = vadd.f32 %v74, 1e-05
  %v79 = vrsqrt.pop %v75
  %v80 = vrsqrt.pop %v76
  %v81 = vrsqrt.pop %v77
  %v82 = vrsqrt.pop %v78
  %v83 = vmul.f32 %v51, %v79
  %v84 = vmul.f32 %v52, %v80
  %v85 = vmul.f32 %v53, %v81
  %v86 = vmul.f32 %v54, %v82
  %v88 = vlaneseq
  %v89 = vshrl.u32 %v88, 7
  %v90 = vsub.s32 0, %v89
  %v91 = vrot.slane %v31, %v90
  %v93 = vmul.f32 %v83, %v91
  %v94 = vmul.f32 %v84, %v91
  %v95 = vmul.f32 %v85, %v91
  %v96 = vmul.f32 %v86, %v91
  %v98 = vlaneseq
  %v99 = vshrl.u32 %v98, 7
  %v100 = vsub.s32 0, %v99
  %v101 = vrot.slane %v32, %v100
  %v103 = vadd.f32 %v93, %v101
  %v104 = vadd.f32 %v94, %v101
  %v105 = vadd.f32 %v95, %v101
  %v106 = vadd.f32 %v96, %v101
  %v107 = vpack.c.bf16 %v104, %v103
  %v108 = vpack.c.bf16 %v106, %v105
  %v109 = vld [vmem:[%s3] sm:$0xf]
  %v110 = vld [vmem:[%s3 + $0x4] sm:$0xf]
  %v111 = vld [vmem:[%s3 + $0x8] sm:$0xf]
  %v112 = vld [vmem:[%s3 + $0xc] sm:$0xf]
  %v113 = vld [vmem:[%s4] sm:$0x1]
  %v115 = vlaneseq
  %v116 = vshrl.u32 %v115, 7
  %v117 = vsub.s32 0, %v116
  %v118 = vrot.slane %v113, %v117
  %v124 = vunpack.c.l.b16 %v109
  %v125 = vunpack.c.l.b16 %v110
  %v126 = vunpack.c.l.b16 %v111
  %v127 = vunpack.c.l.b16 %v112
  %v128 = vpack.c.b16 %v125, %v124
  %v129 = vpack.c.b16 %v127, %v126
  %v133 = vsel %vm33, %v107, 0
  %v136 = vsel %vm33, %v108, 0
  %138 = vmatprep.subr.bf16.mxu0 0
  %139 = vmatpush1.bf16.msra.mxu0 0
  %140 = vmatprep.subr.bf16.mxu0 0
  %141 = vmatpush1.bf16.msra.mxu0 0
  %142 = vmatprep.subr.bf16.mxu0 0
  %143 = vmatpush1.bf16.msra.mxu0 0
  %144 = vmatprep.subr.bf16.mxu0 0
  %145 = vmatpush1.bf16.msra.mxu0 0
  %146 = vmatprep.subr.bf16.mxu0 0
  %147 = vmatpush1.bf16.msra.mxu0 0
  %148 = vmatprep.subr.bf16.mxu0 0
  %149 = vmatpush1.bf16.msra.mxu0 0
  %150 = vmatprep.subr.bf16.mxu0 0
  %151 = vmatpush1.bf16.msra.mxu0 %v129
  %152 = vmatprep.subr.bf16.mxu0 0
  %153 = vmatpush1.bf16.msra.mxu0 %v128
  %154 = vmatprep.subr.bf16.mxu0 0
  %155 = vmatpush2.bf16.msra.mxu0 0
  %156 = vmatprep.subr.bf16.mxu0 0
  %157 = vmatpush2.bf16.msra.mxu0 0
  %158 = vmatprep.subr.bf16.mxu0 0
  %159 = vmatpush2.bf16.msra.mxu0 0
  %160 = vmatprep.subr.bf16.mxu0 0
  %161 = vmatpush2.bf16.msra.mxu0 0
  %162 = vmatprep.subr.bf16.mxu0 0
  %163 = vmatpush2.bf16.msra.mxu0 0
  %164 = vmatprep.subr.bf16.mxu0 0
  %165 = vmatpush2.bf16.msra.mxu0 0
  %166 = vmatprep.subr.bf16.mxu0 0
  %167 = vmatpush2.bf16.msra.mxu0 0
  %168 = vmatprep.subr.bf16.mxu0 0
  %169 = vmatpush2.bf16.msra.mxu0 0
  %170 = vmatprep.mubr.bf16.mxu0 0
  %171 = vmatmul.mubr.bf16.gmra.mxu0 %v133
  %v172 = vpop.f32.mrf.mxu0
  %v173 = vadd.f32 %v118, %v172
  %v174 = vpop.f32.mrf.mxu0
  %v175 = vpop.f32.mrf.mxu0
  %v176 = vadd.f32 %v118, %v175
  %v177 = vpop.f32.mrf.mxu0
  %178 = vmatprep.mubr.bf16.mxu0 0
  %179 = vmatmul.mubr.bf16.gmra.mxu0 %v136
  %v180 = vpop.f32.mrf.mxu0
  %v181 = vadd.f32 %v118, %v180
  %v182 = vpop.f32.mrf.mxu0
  %v183 = vpop.f32.mrf.mxu0
  %v184 = vadd.f32 %v118, %v183
  %v185 = vpop.f32.mrf.mxu0
  %186 = vdwg.mxu0
  %v187 = vmul.f32 %v173, 0.5
  %v188 = vmul.f32 %v176, 0.5
  %v189 = vmul.f32 %v181, 0.5
  %v190 = vmul.f32 %v184, 0.5
  %v191 = vmul.f32 %v173, 0.70710677
  %v192 = vmul.f32 %v176, 0.70710677
  %v193 = vmul.f32 %v181, 0.70710677
  %v194 = vmul.f32 %v184, 0.70710677
  %vm195 = vcmp.lt.f32.partialorder %v191, 0.0
  %vm196 = vcmp.lt.f32.partialorder %v192, 0.0
  %vm197 = vcmp.lt.f32.partialorder %v193, 0.0
  %vm198 = vcmp.lt.f32.partialorder %v194, 0.0
  %v199 = vsel %vm195, -1.0, 1.0
  %v200 = vsel %vm196, -1.0, 1.0
  %v201 = vsel %vm197, -1.0, 1.0
  %v202 = vsel %vm198, -1.0, 1.0
  %v203 = vand.u32 2147483647, %v191
  %v204 = vand.u32 2147483647, %v192
  %v205 = vand.u32 2147483647, %v193
  %v206 = vand.u32 2147483647, %v194
  %v207 = vmul.f32 %v203, 0.3275911
  %v208 = vmul.f32 %v204, 0.3275911
  %v209 = vmul.f32 %v205, 0.3275911
  %v210 = vmul.f32 %v206, 0.3275911
  %v211 = vadd.f32 %v207, 1.0
  %v212 = vadd.f32 %v208, 1.0
  %v213 = vadd.f32 %v209, 1.0
  %v214 = vadd.f32 %v210, 1.0
  %v215 = vrcp.pop %v211
  %v216 = vrcp.pop %v212
  %v217 = vrcp.pop %v213
  %v218 = vrcp.pop %v214
  %v219 = vmul.f32 %v215, 1.0614054
  %v220 = vmul.f32 %v216, 1.0614054
  %v221 = vmul.f32 %v217, 1.0614054
  %v222 = vmul.f32 %v218, 1.0614054
  %v223 = vadd.f32 %v219, -1.4531521
  %v224 = vadd.f32 %v220, -1.4531521
  %v225 = vadd.f32 %v221, -1.4531521
  %v226 = vadd.f32 %v222, -1.4531521
  %v227 = vmul.f32 %v223, %v215
  %v228 = vmul.f32 %v224, %v216
  %v229 = vmul.f32 %v225, %v217
  %v230 = vmul.f32 %v226, %v218
  %v231 = vadd.f32 %v227, 1.4214138
  %v232 = vadd.f32 %v228, 1.4214138
  %v233 = vadd.f32 %v229, 1.4214138
  %v234 = vadd.f32 %v230, 1.4214138
  %v235 = vmul.f32 %v231, %v215
  %v236 = vmul.f32 %v232, %v216
  %v237 = vmul.f32 %v233, %v217
  %v238 = vmul.f32 %v234, %v218
  %v239 = vadd.f32 %v235, -0.28449672
  %v240 = vadd.f32 %v236, -0.28449672
  %v241 = vadd.f32 %v237, -0.28449672
  %v242 = vadd.f32 %v238, -0.28449672
  %v243 = vmul.f32 %v239, %v215
  %v244 = vmul.f32 %v240, %v216
  %v245 = vmul.f32 %v241, %v217
  %v246 = vmul.f32 %v242, %v218
  %v247 = vadd.f32 %v243, 0.2548296
  %v248 = vadd.f32 %v244, 0.2548296
  %v249 = vadd.f32 %v245, 0.2548296
  %v250 = vadd.f32 %v246, 0.2548296
  %v251 = vmul.f32 %v247, %v215
  %v252 = vmul.f32 %v248, %v216
  %v253 = vmul.f32 %v249, %v217
  %v254 = vmul.f32 %v250, %v218
  %v255 = vsub.f32 0.0, %v203
  %v256 = vsub.f32 0.0, %v204
  %v257 = vsub.f32 0.0, %v205
  %v258 = vsub.f32 0.0, %v206
  %v259 = vmul.f32 %v255, %v203
  %v260 = vmul.f32 %v256, %v204
  %v261 = vmul.f32 %v257, %v205
  %v262 = vmul.f32 %v258, %v206
  %v263 = vmul.f32 %v259, 1.442695
  %v264 = vpow.pop %v263
  %v265 = vmul.f32 %v260, 1.442695
  %v266 = vpow.pop %v265
  %v267 = vmul.f32 %v261, 1.442695
  %v268 = vpow.pop %v267
  %v269 = vmul.f32 %v262, 1.442695
  %v270 = vpow.pop %v269
  %v271 = vmul.f32 %v251, %v264
  %v272 = vmul.f32 %v252, %v266
  %v273 = vmul.f32 %v253, %v268
  %v274 = vmul.f32 %v254, %v270
  %v275 = vsub.f32 1.0, %v271
  %v276 = vsub.f32 1.0, %v272
  %v277 = vsub.f32 1.0, %v273
  %v278 = vsub.f32 1.0, %v274
  %v279 = vmul.f32 %v199, %v275
  %v280 = vmul.f32 %v200, %v276
  %v281 = vmul.f32 %v201, %v277
  %v282 = vmul.f32 %v202, %v278
  %v283 = vadd.f32 %v279, 1.0
  %v284 = vadd.f32 %v280, 1.0
  %v285 = vadd.f32 %v281, 1.0
  %v286 = vadd.f32 %v282, 1.0
  %v287 = vmul.f32 %v187, %v283
  %v288 = vmul.f32 %v188, %v284
  %v289 = vmul.f32 %v189, %v285
  %v290 = vmul.f32 %v190, %v286
  %v291 = vpack.c.bf16 %v288, %v287
  %v292 = vpack.c.bf16 %v290, %v289
  %v293 = vld [vmem:[%s5] sm:$0xf]
  %v294 = vld [vmem:[%s5 + $0x4] sm:$0xf]
  %v295 = vld [vmem:[%s5 + $0x8] sm:$0xf]
  %v296 = vld [vmem:[%s5 + $0xc] sm:$0xf]
  %v297 = vld [vmem:[%s5 + $0x10] sm:$0xf]
  %v298 = vld [vmem:[%s5 + $0x14] sm:$0xf]
  %v299 = vld [vmem:[%s5 + $0x18] sm:$0xf]
  %v300 = vld [vmem:[%s5 + $0x1c] sm:$0xf]
  %v301 = vld [vmem:[%s6] sm:$0x1]
  %v303 = vlaneseq
  %v304 = vshrl.u32 %v303, 7
  %v305 = vsub.s32 0, %v304
  %v306 = vrot.slane %v301, %v305
  %v316 = vunpack.c.l.b16 %v293
  %v317 = vunpack.c.l.b16 %v294
  %v318 = vunpack.c.l.b16 %v295
  %v319 = vunpack.c.l.b16 %v296
  %v320 = vunpack.c.l.b16 %v297
  %v321 = vunpack.c.l.b16 %v298
  %v322 = vunpack.c.l.b16 %v299
  %v323 = vunpack.c.l.b16 %v300
  %v324 = vpack.c.b16 %v317, %v316
  %v325 = vpack.c.b16 %v319, %v318
  %v326 = vpack.c.b16 %v321, %v320
  %v327 = vpack.c.b16 %v323, %v322
  %vm332 = vcmask 523264
  %v334 = vsel %vm332, %v291, 0
  %v337 = vsel %vm332, %v292, 0
  %339 = vmatprep.subr.bf16.mxu0 0
  %340 = vmatpush1.bf16.msra.mxu0 0
  %341 = vmatprep.subr.bf16.mxu0 0
  %342 = vmatpush1.bf16.msra.mxu0 0
  %343 = vmatprep.subr.bf16.mxu0 0
  %344 = vmatpush1.bf16.msra.mxu0 0
  %345 = vmatprep.subr.bf16.mxu0 0
  %346 = vmatpush1.bf16.msra.mxu0 0
  %347 = vmatprep.subr.bf16.mxu0 0
  %348 = vmatpush1.bf16.msra.mxu0 %v327
  %349 = vmatprep.subr.bf16.mxu0 0
  %350 = vmatpush1.bf16.msra.mxu0 %v326
  %351 = vmatprep.subr.bf16.mxu0 0
  %352 = vmatpush1.bf16.msra.mxu0 %v325
  %353 = vmatprep.subr.bf16.mxu0 0
  %354 = vmatpush1.bf16.msra.mxu0 %v324
  %355 = vmatprep.subr.bf16.mxu0 0
  %356 = vmatpush2.bf16.msra.mxu0 0
  %357 = vmatprep.subr.bf16.mxu0 0
  %358 = vmatpush2.bf16.msra.mxu0 0
  %359 = vmatprep.subr.bf16.mxu0 0
  %360 = vmatpush2.bf16.msra.mxu0 0
  %361 = vmatprep.subr.bf16.mxu0 0
  %362 = vmatpush2.bf16.msra.mxu0 0
  %363 = vmatprep.subr.bf16.mxu0 0
  %364 = vmatpush2.bf16.msra.mxu0 0
  %365 = vmatprep.subr.bf16.mxu0 0
  %366 = vmatpush2.bf16.msra.mxu0 0
  %367 = vmatprep.subr.bf16.mxu0 0
  %368 = vmatpush2.bf16.msra.mxu0 0
  %369 = vmatprep.subr.bf16.mxu0 0
  %370 = vmatpush2.bf16.msra.mxu0 0
  %371 = vmatprep.mubr.bf16.mxu0 0
  %372 = vmatmul.mubr.bf16.gmra.mxu0 %v334
  %v373 = vpop.f32.mrf.mxu0
  %v374 = vadd.f32 %v306, %v373
  %v375 = vpop.f32.mrf.mxu0
  %v376 = vpop.f32.mrf.mxu0
  %v377 = vadd.f32 %v306, %v376
  %v378 = vpop.f32.mrf.mxu0
  %379 = vmatprep.mubr.bf16.mxu0 0
  %380 = vmatmul.mubr.bf16.gmra.mxu0 %v337
  %v381 = vpop.f32.mrf.mxu0
  %v382 = vadd.f32 %v306, %v381
  %v383 = vpop.f32.mrf.mxu0
  %v384 = vpop.f32.mrf.mxu0
  %v385 = vadd.f32 %v306, %v384
  %v386 = vpop.f32.mrf.mxu0
  %387 = vdwg.mxu0
  %v388 = vadd.f32 %v27, %v374
  %v389 = vadd.f32 %v28, %v377
  %v390 = vadd.f32 %v29, %v382
  %v391 = vadd.f32 %v30, %v385
  %392 = vst.msk [vmem:[%s7] sm:$0xff] %vm33, %v388
  %393 = vst.msk [vmem:[%s7 + $0x8] sm:$0xff] %vm33, %v389
  %394 = vst.msk [vmem:[%s7 + $0x10] sm:$0xff] %vm33, %v390
  %395 = vst.msk [vmem:[%s7 + $0x18] sm:$0xff] %vm33, %v391
  // Predicated region
  $region30: #{sas_perceiver_io_forward.8} parent=0 // pred_check
    _
  $region31: #{sas_perceiver_io_forward.8} parent=0 // pred_check_branch
    %397 = sbr.rel (0) target = $region33
  $region32: #{sas_perceiver_io_forward.8} parent=0 // pred_region
    _
  $region33: #{sas_perceiver_io_forward.8} parent=0 // pred_fallthru
    _
  // Predicated region
  $region34: #{sas_perceiver_io_forward.8} parent=0 // pred_check
    _
  $region35: #{sas_perceiver_io_forward.8} parent=0 // pred_check_branch
    %399 = sbr.rel (0) target = $region37
  $region36: #{sas_perceiver_io_forward.8} parent=0 // pred_region
    _
  $region37: #{sas_perceiver_io_forward.8} parent=0 // pred_fallthru
    _

// kernel: sas_perceiver_io_forward.9
$region0: #{sas_perceiver_io_forward.9}
  #allocation0 [shape = 'u32[]', space=smem, size = 0x4, offset = 0x4, fixed_abs, tag = 'smem constant byte address 0x4 - core index']
  #allocation1 [shape = 'u32[144,128]{1,0:T(1,128)}', space=vmem, size = 0x12000, scoped, tag = 'internal scratch']
  %s0 = inlined_call_operand.vmem [shape: f32[2,16,32], index: 0, kind: input, shape index: {}]
  %s1 = inlined_call_operand.vmem [shape: f32[1,32], index: 1, kind: input, shape index: {}]
  %s2 = inlined_call_operand.vmem [shape: f32[1,32], index: 2, kind: input, shape index: {}]
  %s3 = inlined_call_operand.vmem [shape: bf16[32,96], index: 3, kind: input, shape index: {}]
  %s4 = inlined_call_operand.vmem [shape: f32[1,96], index: 4, kind: input, shape index: {}]
  %s5 = inlined_call_operand.vmem [shape: bf16[32,32], index: 5, kind: input, shape index: {}]
  %s6 = inlined_call_operand.vmem [shape: f32[1,32], index: 6, kind: input, shape index: {}]
  %s7 = inlined_call_operand.vmem [shape: f32[2,16,32], index: 7, kind: output, shape index: {}]
  %s8 = sld [smem:[#allocation0]]
  $region61: #{sas_perceiver_io_forward.9} parent=0
    _
  %s10 = ssub.s32 1, %s8
  %s11 = scalar_select 0, %s10, %s8
  loop: start=0, step=1, limit=4
  $region2: #{sas_perceiver_io_forward.9} parent=0 // loop_pre_header
    _
  $region3: #{sas_perceiver_io_forward.9} parent=0 // loop_header
    %s13 = sphi 0, %s17
    %p14 = scmp.ge.s32.totalorder %s13, 4
    %s23 = sphi 0, %s25
    %s26 = sphi 0, %s23
    %s27 = sphi 0, %s26
    %s43 = sphi 0, %s27
    %s47 = sphi 0, %s47
    %s49 = sphi 0, %s47
    %s50 = sphi 0, %s49
    %s64 = sphi 0, %s50
    %s68 = sphi 0, %s68
    %s70 = sphi 0, %s68
    %s71 = sphi 0, %s70
    %s85 = sphi 0, %s71
    %s89 = sphi 0, %s89
    %s91 = sphi 0, %s89
    %s92 = sphi 0, %s91
    %s106 = sphi 0, %s92
    %s110 = sphi 0, %s110
    %s112 = sphi 0, %s110
    %s113 = sphi 0, %s112
    %s127 = sphi 0, %s113
    %s131 = sphi 0, %s131
    %s133 = sphi 0, %s131
    %s134 = sphi 0, %s133
    %s148 = sphi 0, %s134
    %s152 = sphi 0, %s152
    %s154 = sphi 0, %s152
    %s155 = sphi 0, %s154
    %s169 = sphi 0, %s155
    %s175 = sphi 0, %s177
    %s178 = sphi 0, %s175
    %s179 = sphi 0, %s178
    %s195 = sphi 0, %s179
  $region4: #{sas_perceiver_io_forward.9} parent=0 // loop_header_branch
    %16 = sbr.rel (%p14) target = $region8
  $region5: #{sas_perceiver_io_forward.9} parent=0 // loop_body
    %s18 = ssub.s32 %s13, 1
    %s19 = ssub.s32 %s13, 2
    %s20 = sadd.s32 %s13, 1
    %s21 = ssub.s32 %s13, %s20
    %p22 = scmp.eq.s32.totalorder %s21, 0
    %s24 = sadd.s32 %s23, 1
    %s25 = scalar_select %p22, %s23, %s24
    %p28 = pneg %p22
    %p29 = scmp.eq.s32.totalorder %s13, 1
    %p30 = por %p28, %p29
    %p31 = scmp.ne.s32.totalorder %s23, %s26
    %p32 = scmp.eq.s32.totalorder %s13, 0
    %p33 = por %p31, %p32
    %p34 = scmp.ne.s32.totalorder %s23, %s26
    %p35 = scmp.eq.s32.totalorder %s18, 1
    %p36 = por %p34, %p35
    %p37 = scmp.ne.s32.totalorder %s26, %s27
    %p38 = scmp.eq.s32.totalorder %s18, 0
    %p39 = por %p37, %p38
    %p40 = scmp.ne.s32.totalorder %s26, %s27
    %p41 = scmp.eq.s32.totalorder %s19, 1
    %p42 = por %p40, %p41
    %p44 = scmp.ne.s32.totalorder %s27, %s43
    %p45 = scmp.eq.s32.totalorder %s19, 0
    %p46 = por %p44, %p45
    %s48 = sadd.s32 %s47, 1
    %p51 = scmp.eq.s32.totalorder %s13, 1
    %p52 = scmp.ne.s32.totalorder %s47, %s49
    %p53 = scmp.eq.s32.totalorder %s13, 0
    %p54 = por %p52, %p53
    %p55 = scmp.ne.s32.totalorder %s47, %s49
    %p56 = scmp.eq.s32.totalorder %s18, 1
    %p57 = por %p55, %p56
    %p58 = scmp.ne.s32.totalorder %s49, %s50
    %p59 = scmp.eq.s32.totalorder %s18, 0
    %p60 = por %p58, %p59
    %p61 = scmp.ne.s32.totalorder %s49, %s50
    %p62 = scmp.eq.s32.totalorder %s19, 1
    %p63 = por %p61, %p62
    %p65 = scmp.ne.s32.totalorder %s50, %s64
    %p66 = scmp.eq.s32.totalorder %s19, 0
    %p67 = por %p65, %p66
    %s69 = sadd.s32 %s68, 1
    %p72 = scmp.eq.s32.totalorder %s13, 1
    %p73 = scmp.ne.s32.totalorder %s68, %s70
    %p74 = scmp.eq.s32.totalorder %s13, 0
    %p75 = por %p73, %p74
    %p76 = scmp.ne.s32.totalorder %s68, %s70
    %p77 = scmp.eq.s32.totalorder %s18, 1
    %p78 = por %p76, %p77
    %p79 = scmp.ne.s32.totalorder %s70, %s71
    %p80 = scmp.eq.s32.totalorder %s18, 0
    %p81 = por %p79, %p80
    %p82 = scmp.ne.s32.totalorder %s70, %s71
    %p83 = scmp.eq.s32.totalorder %s19, 1
    %p84 = por %p82, %p83
    %p86 = scmp.ne.s32.totalorder %s71, %s85
    %p87 = scmp.eq.s32.totalorder %s19, 0
    %p88 = por %p86, %p87
    %s90 = sadd.s32 %s89, 1
    %p93 = scmp.eq.s32.totalorder %s13, 1
    %p94 = scmp.ne.s32.totalorder %s89, %s91
    %p95 = scmp.eq.s32.totalorder %s13, 0
    %p96 = por %p94, %p95
    %p97 = scmp.ne.s32.totalorder %s89, %s91
    %p98 = scmp.eq.s32.totalorder %s18, 1
    %p99 = por %p97, %p98
    %p100 = scmp.ne.s32.totalorder %s91, %s92
    %p101 = scmp.eq.s32.totalorder %s18, 0
    %p102 = por %p100, %p101
    %p103 = scmp.ne.s32.totalorder %s91, %s92
    %p104 = scmp.eq.s32.totalorder %s19, 1
    %p105 = por %p103, %p104
    %p107 = scmp.ne.s32.totalorder %s92, %s106
    %p108 = scmp.eq.s32.totalorder %s19, 0
    %p109 = por %p107, %p108
    %s111 = sadd.s32 %s110, 1
    %p114 = scmp.eq.s32.totalorder %s13, 1
    %p115 = scmp.ne.s32.totalorder %s110, %s112
    %p116 = scmp.eq.s32.totalorder %s13, 0
    %p117 = por %p115, %p116
    %p118 = scmp.ne.s32.totalorder %s110, %s112
    %p119 = scmp.eq.s32.totalorder %s18, 1
    %p120 = por %p118, %p119
    %p121 = scmp.ne.s32.totalorder %s112, %s113
    %p122 = scmp.eq.s32.totalorder %s18, 0
    %p123 = por %p121, %p122
    %p124 = scmp.ne.s32.totalorder %s112, %s113
    %p125 = scmp.eq.s32.totalorder %s19, 1
    %p126 = por %p124, %p125
    %p128 = scmp.ne.s32.totalorder %s113, %s127
    %p129 = scmp.eq.s32.totalorder %s19, 0
    %p130 = por %p128, %p129
    %s132 = sadd.s32 %s131, 1
    %p135 = scmp.eq.s32.totalorder %s13, 1
    %p136 = scmp.ne.s32.totalorder %s131, %s133
    %p137 = scmp.eq.s32.totalorder %s13, 0
    %p138 = por %p136, %p137
    %p139 = scmp.ne.s32.totalorder %s131, %s133
    %p140 = scmp.eq.s32.totalorder %s18, 1
    %p141 = por %p139, %p140
    %p142 = scmp.ne.s32.totalorder %s133, %s134
    %p143 = scmp.eq.s32.totalorder %s18, 0
    %p144 = por %p142, %p143
    %p145 = scmp.ne.s32.totalorder %s133, %s134
    %p146 = scmp.eq.s32.totalorder %s19, 1
    %p147 = por %p145, %p146
    %p149 = scmp.ne.s32.totalorder %s134, %s148
    %p150 = scmp.eq.s32.totalorder %s19, 0
    %p151 = por %p149, %p150
    %s153 = sadd.s32 %s152, 1
    %p156 = scmp.eq.s32.totalorder %s13, 1
    %p157 = scmp.ne.s32.totalorder %s152, %s154
    %p158 = scmp.eq.s32.totalorder %s13, 0
    %p159 = por %p157, %p158
    %p160 = scmp.ne.s32.totalorder %s152, %s154
    %p161 = scmp.eq.s32.totalorder %s18, 1
    %p162 = por %p160, %p161
    %p163 = scmp.ne.s32.totalorder %s154, %s155
    %p164 = scmp.eq.s32.totalorder %s18, 0
    %p165 = por %p163, %p164
    %p166 = scmp.ne.s32.totalorder %s154, %s155
    %p167 = scmp.eq.s32.totalorder %s19, 1
    %p168 = por %p166, %p167
    %p170 = scmp.ne.s32.totalorder %s155, %s169
    %p171 = scmp.eq.s32.totalorder %s19, 0
    %p172 = por %p170, %p171
    %s173 = ssub.s32 %s13, %s20
    %p174 = scmp.eq.s32.totalorder %s173, 0
    %s176 = sadd.s32 %s175, 1
    %s177 = scalar_select %p174, %s175, %s176
    %p180 = pneg %p174
    %p181 = scmp.eq.s32.totalorder %s13, 1
    %p182 = por %p180, %p181
    %p183 = scmp.ne.s32.totalorder %s175, %s178
    %p184 = scmp.eq.s32.totalorder %s13, 0
    %p185 = por %p183, %p184
    %p186 = scmp.ne.s32.totalorder %s175, %s178
    %p187 = scmp.eq.s32.totalorder %s18, 1
    %p188 = por %p186, %p187
    %p189 = scmp.ne.s32.totalorder %s178, %s179
    %p190 = scmp.eq.s32.totalorder %s18, 0
    %p191 = por %p189, %p190
    %p192 = scmp.ne.s32.totalorder %s178, %s179
    %p193 = scmp.eq.s32.totalorder %s19, 1
    %p194 = por %p192, %p193
    %p196 = scmp.ne.s32.totalorder %s179, %s195
    %p197 = scmp.eq.s32.totalorder %s19, 0
    %p198 = por %p196, %p197
    %p199 = scmp.le.s32.totalorder 1, %s13
    %p200 = scmp.lt.s32.totalorder %s13, 3
    %p201 = pnand %p199, %p200
    %p202 = pneg %p201
    // Predicated region
    $region9: #{sas_perceiver_io_forward.9} parent=5 // pred_check
      _
    $region10: #{sas_perceiver_io_forward.9} parent=5 // pred_check_branch
      %204 = sbr.rel (%p201) target = $region12
    $region11: #{sas_perceiver_io_forward.9} parent=5 // pred_region
      %s205 = ssub.s32 %s13, 1
      // Predicated region
      $region13: #{sas_perceiver_io_forward.9} parent=11 // pred_check
        %p206 = pneg %p60
      $region14: #{sas_perceiver_io_forward.9} parent=11 // pred_check_branch
        %208 = sbr.rel (%p206) target = $region16
      $region15: #{sas_perceiver_io_forward.9} parent=11 // pred_region
        _
      $region16: #{sas_perceiver_io_forward.9} parent=11 // pred_fallthru
        _
      // Predicated region
      $region17: #{sas_perceiver_io_forward.9} parent=11 // pred_check
        %p209 = pneg %p81
      $region18: #{sas_perceiver_io_forward.9} parent=11 // pred_check_branch
        %211 = sbr.rel (%p209) target = $region20
      $region19: #{sas_perceiver_io_forward.9} parent=11 // pred_region
        _
      $region20: #{sas_perceiver_io_forward.9} parent=11 // pred_fallthru
        _
      // Predicated region
      $region21: #{sas_perceiver_io_forward.9} parent=11 // pred_check
        %p212 = pneg %p102
      $region22: #{sas_perceiver_io_forward.9} parent=11 // pred_check_branch
        %214 = sbr.rel (%p212) target = $region24
      $region23: #{sas_perceiver_io_forward.9} parent=11 // pred_region
        _
      $region24: #{sas_perceiver_io_forward.9} parent=11 // pred_fallthru
        _
      // Predicated region
      $region25: #{sas_perceiver_io_forward.9} parent=11 // pred_check
        %p215 = pneg %p123
      $region26: #{sas_perceiver_io_forward.9} parent=11 // pred_check_branch
        %217 = sbr.rel (%p215) target = $region28
      $region27: #{sas_perceiver_io_forward.9} parent=11 // pred_region
        _
      $region28: #{sas_perceiver_io_forward.9} parent=11 // pred_fallthru
        _
      // Predicated region
      $region29: #{sas_perceiver_io_forward.9} parent=11 // pred_check
        %p218 = pneg %p144
      $region30: #{sas_perceiver_io_forward.9} parent=11 // pred_check_branch
        %220 = sbr.rel (%p218) target = $region32
      $region31: #{sas_perceiver_io_forward.9} parent=11 // pred_region
        _
      $region32: #{sas_perceiver_io_forward.9} parent=11 // pred_fallthru
        _
      // Predicated region
      $region33: #{sas_perceiver_io_forward.9} parent=11 // pred_check
        %p221 = pneg %p165
      $region34: #{sas_perceiver_io_forward.9} parent=11 // pred_check_branch
        %223 = sbr.rel (%p221) target = $region36
      $region35: #{sas_perceiver_io_forward.9} parent=11 // pred_region
        _
      $region36: #{sas_perceiver_io_forward.9} parent=11 // pred_fallthru
        _
    $region12: #{sas_perceiver_io_forward.9} parent=5 // pred_fallthru
      _
    %p224 = scmp.lt.s32.totalorder %s13, 2
    // Predicated region
    $region37: #{sas_perceiver_io_forward.9} parent=5 // pred_check
      %p225 = pneg %p224
    $region38: #{sas_perceiver_io_forward.9} parent=5 // pred_check_branch
      %227 = sbr.rel (%p225) target = $region40
    $region39: #{sas_perceiver_io_forward.9} parent=5 // pred_region
      // Predicated region
      $region41: #{sas_perceiver_io_forward.9} parent=39 // pred_check
        %p228 = pneg %p33
      $region42: #{sas_perceiver_io_forward.9} parent=39 // pred_check_branch
        %230 = sbr.rel (%p228) target = $region44
      $region43: #{sas_perceiver_io_forward.9} parent=39 // pred_region
        %p231 = scmp.lt.s32.totalorder %s13, 1
        %s232 = scalar_select %p231, %s13, 1
        %s233 = smul.addr %s232, 2
        %s234 = smul.addr %s233, 8
        %s235 = scalar_lea.vmem %s0, %s234
      $region44: #{sas_perceiver_io_forward.9} parent=39 // pred_fallthru
        _
    $region40: #{sas_perceiver_io_forward.9} parent=5 // pred_fallthru
      _
    %p236 = scmp.le.s32.totalorder 1, %s13
    %p237 = scmp.lt.s32.totalorder %s13, 3
    %p238 = pnand %p236, %p237
    %p239 = pneg %p238
    // Predicated region
    $region45: #{sas_perceiver_io_forward.9} parent=5 // pred_check
      _
    $region46: #{sas_perceiver_io_forward.9} parent=5 // pred_check_branch
      %241 = sbr.rel (%p238) target = $region48
    $region47: #{sas_perceiver_io_forward.9} parent=5 // pred_region
      %s242 = ssub.s32 %s13, 1
      %p243 = scmp.lt.s32.totalorder %s18, 1
      %s244 = scalar_select %p243, %s18, 1
      %s245 = smul.addr %s244, 2
      %s246 = smul.addr %s245, 8
      %s247 = scalar_lea.vmem %s0, %s246
      %p248 = pneg %p39
      %p249 = pneg %p36
      %p250 = pneg %p60
      %p251 = pneg %p57
      %p252 = pneg %p81
      %p253 = pneg %p78
      %p254 = pneg %p102
      %p255 = pneg %p99
      %p256 = pneg %p123
      %p257 = pneg %p120
      %p258 = pneg %p144
      %p259 = pneg %p141
      %p260 = pneg %p165
      %p261 = pneg %p162
      %p262 = pneg %p191
      %p263 = pneg %p188
      %p264 = scmp.lt.s32.totalorder %s18, 1
      %s265 = scalar_select %p264, %s18, 1
      %s266 = smul.addr %s265, 2
      %s267 = smul.addr %s266, 8
      %s268 = scalar_lea.vmem %s7, %s267
      %p269 = scmp.lt.s32.totalorder %s18, 1
      %s270 = scalar_select %p269, %s18, 1
      %s271 = smul.addr %s270, 2
      %s272 = smul.addr %s271, 8
      %s273 = scalar_lea.vmem %s0, %s272
      %p274 = scmp.lt.s32.totalorder %s18, 1
      %s275 = scalar_select %p274, %s18, 1
      %s276 = smul.addr %s275, 2
      %s277 = smul.addr %s276, 8
      %s278 = scalar_lea.vmem %s7, %s277
      %v280 = vld [vmem:[%s273] sm:$0xff]
      %v281 = vld [vmem:[%s273 + $0x8] sm:$0xff]
      %v282 = vld [vmem:[%s1] sm:$0x1]
      %v283 = vld [vmem:[%s2] sm:$0x1]
      %vm284 = vcmask 261120
      %v285 = vsel %vm284, %v280, 0.0
      %286 = vadd.xlane.f32.xlu0 %v285
      %v287 = vpop.xlane.xlu0 %286
      %v288 = vsel %vm284, %v281, 0.0
      %289 = vadd.xlane.f32.xlu0 %v288
      %v290 = vpop.xlane.xlu0 %289
      %v291 = vrcp.pop 32.0
      %v292 = vmul.f32 %v287, %v291
      %v293 = vmul.f32 %v290, %v291
      %v294 = vsub.f32 %v280, %v292
      %v295 = vsub.f32 %v281, %v293
      %v296 = vmul.f32 %v294, %v294
      %v297 = vmul.f32 %v295, %v295
      %v298 = vsel %vm284, %v296, 0.0
      %299 = vadd.xlane.f32.xlu0 %v298
      %v300 = vpop.xlane.xlu0 %299
      %v301 = vsel %vm284, %v297, 0.0
      %302 = vadd.xlane.f32.xlu0 %v301
      %v303 = vpop.xlane.xlu0 %302
      %v304 = vmul.f32 %v300, %v291
      %v305 = vmul.f32 %v303, %v291
      %v306 = vadd.f32 %v304, 1e-05
      %v307 = vadd.f32 %v305, 1e-05
      %v308 = vrsqrt.pop %v306
      %v309 = vrsqrt.pop %v307
      %v310 = vmul.f32 %v294, %v308
      %v311 = vmul.f32 %v295, %v309
      %v313 = vlaneseq
      %v314 = vshrl.u32 %v313, 7
      %v315 = vsub.s32 0, %v314
      %v316 = vrot.slane %v282, %v315
      %v318 = vmul.f32 %v310, %v316
      %v319 = vmul.f32 %v311, %v316
      %v321 = vlaneseq
      %v322 = vshrl.u32 %v321, 7
      %v323 = vsub.s32 0, %v322
      %v324 = vrot.slane %v283, %v323
      %v326 = vadd.f32 %v318, %v324
      %v327 = vadd.f32 %v319, %v324
      %v328 = vpack.c.bf16 %v327, %v326
      %v329 = vld [vmem:[%s3] sm:$0xf]
      %v330 = vld [vmem:[%s3 + $0x4] sm:$0xf]
      %v331 = vld [vmem:[%s3 + $0x8] sm:$0xf]
      %v332 = vld [vmem:[%s3 + $0xc] sm:$0xf]
      %v333 = vld [vmem:[%s4] sm:$0x1]
      %v335 = vlaneseq
      %v336 = vshrl.u32 %v335, 7
      %v337 = vsub.s32 0, %v336
      %v338 = vrot.slane %v333, %v337
      %v344 = vunpack.c.l.b16 %v329
      %v345 = vunpack.c.l.b16 %v330
      %v346 = vunpack.c.l.b16 %v331
      %v347 = vunpack.c.l.b16 %v332
      %v348 = vpack.c.b16 %v345, %v344
      %v349 = vpack.c.b16 %v347, %v346
      %v353 = vsel %vm284, %v328, 0
      %355 = vmatprep.subr.bf16.mxu0 0
      %356 = vmatpush1.bf16.msra.mxu0 0
      %357 = vmatprep.subr.bf16.mxu0 0
      %358 = vmatpush1.bf16.msra.mxu0 0
      %359 = vmatprep.subr.bf16.mxu0 0
      %360 = vmatpush1.bf16.msra.mxu0 0
      %361 = vmatprep.subr.bf16.mxu0 0
      %362 = vmatpush1.bf16.msra.mxu0 0
      %363 = vmatprep.subr.bf16.mxu0 0
      %364 = vmatpush1.bf16.msra.mxu0 0
      %365 = vmatprep.subr.bf16.mxu0 0
      %366 = vmatpush1.bf16.msra.mxu0 0
      %367 = vmatprep.subr.bf16.mxu0 0
      %368 = vmatpush1.bf16.msra.mxu0 %v349
      %369 = vmatprep.subr.bf16.mxu0 0
      %370 = vmatpush1.bf16.msra.mxu0 %v348
      %371 = vmatprep.subr.bf16.mxu0 0
      %372 = vmatpush2.bf16.msra.mxu0 0
      %373 = vmatprep.subr.bf16.mxu0 0
      %374 = vmatpush2.bf16.msra.mxu0 0
      %375 = vmatprep.subr.bf16.mxu0 0
      %376 = vmatpush2.bf16.msra.mxu0 0
      %377 = vmatprep.subr.bf16.mxu0 0
      %378 = vmatpush2.bf16.msra.mxu0 0
      %379 = vmatprep.subr.bf16.mxu0 0
      %380 = vmatpush2.bf16.msra.mxu0 0
      %381 = vmatprep.subr.bf16.mxu0 0
      %382 = vmatpush2.bf16.msra.mxu0 0
      %383 = vmatprep.subr.bf16.mxu0 0
      %384 = vmatpush2.bf16.msra.mxu0 0
      %385 = vmatprep.subr.bf16.mxu0 0
      %386 = vmatpush2.bf16.msra.mxu0 0
      %387 = vmatprep.mubr.bf16.mxu0 0
      %388 = vmatmul.mubr.bf16.gmra.mxu0 %v353
      %v389 = vpop.f32.mrf.mxu0
      %v390 = vadd.f32 %v338, %v389
      %v391 = vpop.f32.mrf.mxu0
      %v392 = vpop.f32.mrf.mxu0
      %v393 = vadd.f32 %v338, %v392
      %v394 = vpop.f32.mrf.mxu0
      %395 = vdwg.mxu0
      %v396 = vpack.c.bf16 %v393, %v390
      %398 = vrot.lane.b32.xlu0 %v396, 96
      %v399 = vpop.permute.xlu0 %398
      %vm400 = vcmask 64512
      %v402 = vsel %vm400, %v396, 0
      %v405 = vsel %vm400, %v399, 0
      %407 = vmatprep.subr.bf16.mxu0 0
      %408 = vmatpush1.bf16.xpose.msra.mxu0 0
      %409 = vmatprep.subr.bf16.mxu0 0
      %410 = vmatpush1.bf16.xpose.msra.mxu0 0
      %411 = vmatprep.subr.bf16.mxu0 0
      %412 = vmatpush1.bf16.xpose.msra.mxu0 0
      %413 = vmatprep.subr.bf16.mxu0 0
      %414 = vmatpush1.bf16.xpose.msra.mxu0 0
      %415 = vmatprep.subr.bf16.mxu0 0
      %416 = vmatpush1.bf16.xpose.msra.mxu0 0
      %417 = vmatprep.subr.bf16.mxu0 0
      %418 = vmatpush1.bf16.xpose.msra.mxu0 0
      %419 = vmatprep.subr.bf16.mxu0 0
      %420 = vmatpush1.bf16.xpose.msra.mxu0 0
      %421 = vmatprep.subr.bf16.mxu0 0
      %422 = vmatpush1.bf16.xpose.msra.mxu0 %v405
      %423 = vmatprep.subr.bf16.mxu0 0
      %424 = vmatpush2.bf16.xpose.msra.mxu0 0
      %425 = vmatprep.subr.bf16.mxu0 0
      %426 = vmatpush2.bf16.xpose.msra.mxu0 0
      %427 = vmatprep.subr.bf16.mxu0 0
      %428 = vmatpush2.bf16.xpose.msra.mxu0 0
      %429 = vmatprep.subr.bf16.mxu0 0
      %430 = vmatpush2.bf16.xpose.msra.mxu0 0
      %431 = vmatprep.subr.bf16.mxu0 0
      %432 = vmatpush2.bf16.xpose.msra.mxu0 0
      %433 = vmatprep.subr.bf16.mxu0 0
      %434 = vmatpush2.bf16.xpose.msra.mxu0 0
      %435 = vmatprep.subr.bf16.mxu0 0
      %436 = vmatpush2.bf16.xpose.msra.mxu0 0
      %437 = vmatprep.subr.bf16.mxu0 0
      %438 = vmatpush2.bf16.xpose.msra.mxu0 0
      %439 = vmatprep.mubr.bf16.mxu0 0
      %440 = vmatmul.mubr.bf16.gmra.mxu0 %v402
      %v441 = vpop.f32.mrf.mxu0
      %v442 = vadd.f32 0.0, %v441
      %v443 = vpop.f32.mrf.mxu0
      %v444 = vpop.f32.mrf.mxu0
      %v445 = vadd.f32 0.0, %v444
      %v446 = vpop.f32.mrf.mxu0
      %447 = vdwg.mxu0
      %vm448 = vcmask 130048
      %v449 = vsel %vm448, %v442, -inf
      %450 = vmax.xlane.f32.xlu0 %v449
      %v451 = vpop.xlane.xlu0 %450
      %v452 = vsel %vm448, %v445, -inf
      %453 = vmax.xlane.f32.xlu0 %v452
      %v454 = vpop.xlane.xlu0 %453
      %v455 = vsub.f32 %v442, %v451
      %v456 = vsub.f32 %v445, %v454
      %v457 = vmul.f32 %v455, 1.442695
      %v458 = vpow.pop %v457
      %v459 = vmul.f32 %v456, 1.442695
      %v460 = vpow.pop %v459
      %v461 = vsel %vm448, %v458, 0.0
      %462 = vadd.xlane.f32.xlu0 %v461
      %v463 = vpop.xlane.xlu0 %462
      %v464 = vsel %vm448, %v460, 0.0
      %465 = vadd.xlane.f32.xlu0 %v464
      %v466 = vpop.xlane.xlu0 %465
      %v467 = vrcp.pop %v463
      %v468 = vrcp.pop %v466
      %v469 = vmul.f32 %v458, %v467
      %v470 = vmul.f32 %v460, %v468
      %v471 = vpack.c.bf16 %v470, %v469
      %472 = vrot.lane.b32.xlu0 %v396, 64
      %v473 = vpop.permute.xlu0 %472
      %v476 = vsel %vm448, %v471, 0
      %478 = vmatprep.subr.bf16.mxu0 0
      %479 = vmatpush1.bf16.msra.mxu0 0
      %480 = vmatprep.subr.bf16.mxu0 0
      %481 = vmatpush1.bf16.msra.mxu0 0
      %482 = vmatprep.subr.bf16.mxu0 0
      %483 = vmatpush1.bf16.msra.mxu0 0
      %484 = vmatprep.subr.bf16.mxu0 0
      %485 = vmatpush1.bf16.msra.mxu0 0
      %486 = vmatprep.subr.bf16.mxu0 0
      %487 = vmatpush1.bf16.msra.mxu0 0
      %488 = vmatprep.subr.bf16.mxu0 0
      %489 = vmatpush1.bf16.msra.mxu0 0
      %490 = vmatprep.subr.bf16.mxu0 0
      %491 = vmatpush1.bf16.msra.mxu0 0
      %492 = vmatprep.subr.bf16.mxu0 0
      %493 = vmatpush1.bf16.msra.mxu0 %v473
      %494 = vmatprep.subr.bf16.mxu0 0
      %495 = vmatpush2.bf16.msra.mxu0 0
      %496 = vmatprep.subr.bf16.mxu0 0
      %497 = vmatpush2.bf16.msra.mxu0 0
      %498 = vmatprep.subr.bf16.mxu0 0
      %499 = vmatpush2.bf16.msra.mxu0 0
      %500 = vmatprep.subr.bf16.mxu0 0
      %501 = vmatpush2.bf16.msra.mxu0 0
      %502 = vmatprep.subr.bf16.mxu0 0
      %503 = vmatpush2.bf16.msra.mxu0 0
      %504 = vmatprep.subr.bf16.mxu0 0
      %505 = vmatpush2.bf16.msra.mxu0 0
      %506 = vmatprep.subr.bf16.mxu0 0
      %507 = vmatpush2.bf16.msra.mxu0 0
      %508 = vmatprep.subr.bf16.mxu0 0
      %509 = vmatpush2.bf16.msra.mxu0 0
      %510 = vmatprep.mubr.bf16.mxu0 0
      %511 = vmatmul.mubr.bf16.gmra.mxu0 %v476
      %v512 = vpop.f32.mrf.mxu0
      %v513 = vadd.f32 0.0, %v512
      %v514 = vpop.f32.mrf.mxu0
      %v515 = vpop.f32.mrf.mxu0
      %v516 = vadd.f32 0.0, %v515
      %v517 = vpop.f32.mrf.mxu0
      %518 = vdwg.mxu0
      %519 = vrot.lane.b32.xlu0 %v396, 120
      %v520 = vpop.permute.xlu0 %519
      %521 = vrot.lane.b32.xlu0 %v396, 88
      %v522 = vpop.permute.xlu0 %521
      %v524 = vsel %vm400, %v520, 0
      %v527 = vsel %vm400, %v522, 0
      %529 = vmatprep.subr.bf16.mxu0 0
      %530 = vmatpush1.bf16.xpose.msra.mxu0 0
      %531 = vmatprep.subr.bf16.mxu0 0
      %532 = vmatpush1.bf16.xpose.msra.mxu0 0
      %533 = vmatprep.subr.bf16.mxu0 0
      %534 = vmatpush1.bf16.xpose.msra.mxu0 0
      %535 = vmatprep.subr.bf16.mxu0 0
      %536 = vmatpush1.bf16.xpose.msra.mxu0 0
      %537 = vmatprep.subr.bf16.mxu0 0
      %538 = vmatpush1.bf16.xpose.msra.mxu0 0
      %539 = vmatprep.subr.bf16.mxu0 0
      %540 = vmatpush1.bf16.xpose.msra.mxu0 0
      %541 = vmatprep.subr.bf16.mxu0 0
      %542 = vmatpush1.bf16.xpose.msra.mxu0 0
      %543 = vmatprep.subr.bf16.mxu0 0
      %544 = vmatpush1.bf16.xpose.msra.mxu0 %v527
      %545 = vmatprep.subr.bf16.mxu0 0
      %546 = vmatpush2.bf16.xpose.msra.mxu0 0
      %547 = vmatprep.subr.bf16.mxu0 0
      %548 = vmatpush2.bf16.xpose.msra.mxu0 0
      %549 = vmatprep.subr.bf16.mxu0 0
      %550 = vmatpush2.bf16.xpose.msra.mxu0 0
      %551 = vmatprep.subr.bf16.mxu0 0
      %552 = vmatpush2.bf16.xpose.msra.mxu0 0
      %553 = vmatprep.subr.bf16.mxu0 0
      %554 = vmatpush2.bf16.xpose.msra.mxu0 0
      %555 = vmatprep.subr.bf16.mxu0 0
      %556 = vmatpush2.bf16.xpose.msra.mxu0 0
      %557 = vmatprep.subr.bf16.mxu0 0
      %558 = vmatpush2.bf16.xpose.msra.mxu0 0
      %559 = vmatprep.subr.bf16.mxu0 0
      %560 = vmatpush2.bf16.xpose.msra.mxu0 0
      %561 = vmatprep.mubr.bf16.mxu0 0
      %562 = vmatmul.mubr.bf16.gmra.mxu0 %v524
      %v563 = vpop.f32.mrf.mxu0
      %v564 = vadd.f32 0.0, %v563
      %v565 = vpop.f32.mrf.mxu0
      %v566 = vpop.f32.mrf.mxu0
      %v567 = vadd.f32 0.0, %v566
      %v568 = vpop.f32.mrf.mxu0
      %569 = vdwg.mxu0
      %v570 = vsel %vm448, %v564, -inf
      %571 = vmax.xlane.f32.xlu0 %v570
      %v572 = vpop.xlane.xlu0 %571
      %v573 = vsel %vm448, %v567, -inf
      %574 = vmax.xlane.f32.xlu0 %v573
      %v575 = vpop.xlane.xlu0 %574
      %v576 = vsub.f32 %v564, %v572
      %v577 = vsub.f32 %v567, %v575
      %v578 = vmul.f32 %v576, 1.442695
      %v579 = vpow.pop %v578
      %v580 = vmul.f32 %v577, 1.442695
      %v581 = vpow.pop %v580
      %v582 = vsel %vm448, %v579, 0.0
      %583 = vadd.xlane.f32.xlu0 %v582
      %v584 = vpop.xlane.xlu0 %583
      %v585 = vsel %vm448, %v581, 0.0
      %586 = vadd.xlane.f32.xlu0 %v585
      %v587 = vpop.xlane.xlu0 %586
      %v588 = vrcp.pop %v584
      %v589 = vrcp.pop %v587
      %v590 = vmul.f32 %v579, %v588
      %v591 = vmul.f32 %v581, %v589
      %v592 = vpack.c.bf16 %v591, %v590
      %593 = vrot.lane.b32.xlu0 %v396, 56
      %v594 = vpop.permute.xlu0 %593
      %v597 = vsel %vm448, %v592, 0
      %599 = vmatprep.subr.bf16.mxu0 0
      %600 = vmatpush1.bf16.msra.mxu0 0
      %601 = vmatprep.subr.bf16.mxu0 0
      %602 = vmatpush1.bf16.msra.mxu0 0
      %603 = vmatprep.subr.bf16.mxu0 0
      %604 = vmatpush1.bf16.msra.mxu0 0
      %605 = vmatprep.subr.bf16.mxu0 0
      %606 = vmatpush1.bf16.msra.mxu0 0
      %607 = vmatprep.subr.bf16.mxu0 0
      %608 = vmatpush1.bf16.msra.mxu0 0
      %609 = vmatprep.subr.bf16.mxu0 0
      %610 = vmatpush1.bf16.msra.mxu0 0
      %611 = vmatprep.subr.bf16.mxu0 0
      %612 = vmatpush1.bf16.msra.mxu0 0
      %613 = vmatprep.subr.bf16.mxu0 0
      %614 = vmatpush1.bf16.msra.mxu0 %v594
      %615 = vmatprep.subr.bf16.mxu0 0
      %616 = vmatpush2.bf16.msra.mxu0 0
      %617 = vmatprep.subr.bf16.mxu0 0
      %618 = vmatpush2.bf16.msra.mxu0 0
      %619 = vmatprep.subr.bf16.mxu0 0
      %620 = vmatpush2.bf16.msra.mxu0 0
      %621 = vmatprep.subr.bf16.mxu0 0
      %622 = vmatpush2.bf16.msra.mxu0 0
      %623 = vmatprep.subr.bf16.mxu0 0
      %624 = vmatpush2.bf16.msra.mxu0 0
      %625 = vmatprep.subr.bf16.mxu0 0
      %626 = vmatpush2.bf16.msra.mxu0 0
      %627 = vmatprep.subr.bf16.mxu0 0
      %628 = vmatpush2.bf16.msra.mxu0 0
      %629 = vmatprep.subr.bf16.mxu0 0
      %630 = vmatpush2.bf16.msra.mxu0 0
      %631 = vmatprep.mubr.bf16.mxu0 0
      %632 = vmatmul.mubr.bf16.gmra.mxu0 %v597
      %v633 = vpop.f32.mrf.mxu0
      %v634 = vadd.f32 0.0, %v633
      %v635 = vpop.f32.mrf.mxu0
      %v636 = vpop.f32.mrf.mxu0
      %v637 = vadd.f32 0.0, %v636
      %v638 = vpop.f32.mrf.mxu0
      %639 = vdwg.mxu0
      %640 = vrot.lane.b32.xlu0 %v396, 112
      %v641 = vpop.permute.xlu0 %640
      %642 = vrot.lane.b32.xlu0 %v396, 80
      %v643 = vpop.permute.xlu0 %642
      %v645 = vsel %vm400, %v641, 0
      %v648 = vsel %vm400, %v643, 0
      %650 = vmatprep.subr.bf16.mxu0 0
      %651 = vmatpush1.bf16.xpose.msra.mxu0 0
      %652 = vmatprep.subr.bf16.mxu0 0
      %653 = vmatpush1.bf16.xpose.msra.mxu0 0
      %654 = vmatprep.subr.bf16.mxu0 0
      %655 = vmatpush1.bf16.xpose.msra.mxu0 0
      %656 = vmatprep.subr.bf16.mxu0 0
      %657 = vmatpush1.bf16.xpose.msra.mxu0 0
      %658 = vmatprep.subr.bf16.mxu0 0
      %659 = vmatpush1.bf16.xpose.msra.mxu0 0
      %660 = vmatprep.subr.bf16.mxu0 0
      %661 = vmatpush1.bf16.xpose.msra.mxu0 0
      %662 = vmatprep.subr.bf16.mxu0 0
      %663 = vmatpush1.bf16.xpose.msra.mxu0 0
      %664 = vmatprep.subr.bf16.mxu0 0
      %665 = vmatpush1.bf16.xpose.msra.mxu0 %v648
      %666 = vmatprep.subr.bf16.mxu0 0
      %667 = vmatpush2.bf16.xpose.msra.mxu0 0
      %668 = vmatprep.subr.bf16.mxu0 0
      %669 = vmatpush2.bf16.xpose.msra.mxu0 0
      %670 = vmatprep.subr.bf16.mxu0 0
      %671 = vmatpush2.bf16.xpose.msra.mxu0 0
      %672 = vmatprep.subr.bf16.mxu0 0
      %673 = vmatpush2.bf16.xpose.msra.mxu0 0
      %674 = vmatprep.subr.bf16.mxu0 0
      %675 = vmatpush2.bf16.xpose.msra.mxu0 0
      %676 = vmatprep.subr.bf16.mxu0 0
      %677 = vmatpush2.bf16.xpose.msra.mxu0 0
      %678 = vmatprep.subr.bf16.mxu0 0
      %679 = vmatpush2.bf16.xpose.msra.mxu0 0
      %680 = vmatprep.subr.bf16.mxu0 0
      %681 = vmatpush2.bf16.xpose.msra.mxu0 0
      %682 = vmatprep.mubr.bf16.mxu0 0
      %683 = vmatmul.mubr.bf16.gmra.mxu0 %v645
      %v684 = vpop.f32.mrf.mxu0
      %v685 = vadd.f32 0.0, %v684
      %v686 = vpop.f32.mrf.mxu0
      %v687 = vpop.f32.mrf.mxu0
      %v688 = vadd.f32 0.0, %v687
      %v689 = vpop.f32.mrf.mxu0
      %690 = vdwg.mxu0
      %v691 = vsel %vm448, %v685, -inf
      %692 = vmax.xlane.f32.xlu0 %v691
      %v693 = vpop.xlane.xlu0 %692
      %v694 = vsel %vm448, %v688, -inf
      %695 = vmax.xlane.f32.xlu0 %v694
      %v696 = vpop.xlane.xlu0 %695
      %v697 = vsub.f32 %v685, %v693
      %v698 = vsub.f32 %v688, %v696
      %v699 = vmul.f32 %v697, 1.442695
      %v700 = vpow.pop %v699
      %v701 = vmul.f32 %v698, 1.442695
      %v702 = vpow.pop %v701
      %v703 = vsel %vm448, %v700, 0.0
      %704 = vadd.xlane.f32.xlu0 %v703
      %v705 = vpop.xlane.xlu0 %704
      %v706 = vsel %vm448, %v702, 0.0
      %707 = vadd.xlane.f32.xlu0 %v706
      %v708 = vpop.xlane.xlu0 %707
      %v709 = vrcp.pop %v705
      %v710 = vrcp.pop %v708
      %v711 = vmul.f32 %v700, %v709
      %v712 = vmul.f32 %v702, %v710
      %v713 = vpack.c.bf16 %v712, %v711
      %714 = vrot.lane.b32.xlu0 %v396, 48
      %v715 = vpop.permute.xlu0 %714
      %v718 = vsel %vm448, %v713, 0
      %720 = vmatprep.subr.bf16.mxu0 0
      %721 = vmatpush1.bf16.msra.mxu0 0
      %722 = vmatprep.subr.bf16.mxu0 0
      %723 = vmatpush1.bf16.msra.mxu0 0
      %724 = vmatprep.subr.bf16.mxu0 0
      %725 = vmatpush1.bf16.msra.mxu0 0
      %726 = vmatprep.subr.bf16.mxu0 0
      %727 = vmatpush1.bf16.msra.mxu0 0
      %728 = vmatprep.subr.bf16.mxu0 0
      %729 = vmatpush1.bf16.msra.mxu0 0
      %730 = vmatprep.subr.bf16.mxu0 0
      %731 = vmatpush1.bf16.msra.mxu0 0
      %732 = vmatprep.subr.bf16.mxu0 0
      %733 = vmatpush1.bf16.msra.mxu0 0
      %734 = vmatprep.subr.bf16.mxu0 0
      %735 = vmatpush1.bf16.msra.mxu0 %v715
      %736 = vmatprep.subr.bf16.mxu0 0
      %737 = vmatpush2.bf16.msra.mxu0 0
      %738 = vmatprep.subr.bf16.mxu0 0
      %739 = vmatpush2.bf16.msra.mxu0 0
      %740 = vmatprep.subr.bf16.mxu0 0
      %741 = vmatpush2.bf16.msra.mxu0 0
      %742 = vmatprep.subr.bf16.mxu0 0
      %743 = vmatpush2.bf16.msra.mxu0 0
      %744 = vmatprep.subr.bf16.mxu0 0
      %745 = vmatpush2.bf16.msra.mxu0 0
      %746 = vmatprep.subr.bf16.mxu0 0
      %747 = vmatpush2.bf16.msra.mxu0 0
      %748 = vmatprep.subr.bf16.mxu0 0
      %749 = vmatpush2.bf16.msra.mxu0 0
      %750 = vmatprep.subr.bf16.mxu0 0
      %751 = vmatpush2.bf16.msra.mxu0 0
      %752 = vmatprep.mubr.bf16.mxu0 0
      %753 = vmatmul.mubr.bf16.gmra.mxu0 %v718
      %v754 = vpop.f32.mrf.mxu0
      %v755 = vadd.f32 0.0, %v754
      %v756 = vpop.f32.mrf.mxu0
      %v757 = vpop.f32.mrf.mxu0
      %v758 = vadd.f32 0.0, %v757
      %v759 = vpop.f32.mrf.mxu0
      %760 = vdwg.mxu0
      %761 = vrot.lane.b32.xlu0 %v396, 104
      %v762 = vpop.permute.xlu0 %761
      %763 = vrot.lane.b32.xlu0 %v396, 72
      %v764 = vpop.permute.xlu0 %763
      %v766 = vsel %vm400, %v762, 0
      %v769 = vsel %vm400, %v764, 0
      %771 = vmatprep.subr.bf16.mxu0 0
      %772 = vmatpush1.bf16.xpose.msra.mxu0 0
      %773 = vmatprep.subr.bf16.mxu0 0
      %774 = vmatpush1.bf16.xpose.msra.mxu0 0
      %775 = vmatprep.subr.bf16.mxu0 0
      %776 = vmatpush1.bf16.xpose.msra.mxu0 0
      %777 = vmatprep.subr.bf16.mxu0 0
      %778 = vmatpush1.bf16.xpose.msra.mxu0 0
      %779 = vmatprep.subr.bf16.mxu0 0
      %780 = vmatpush1.bf16.xpose.msra.mxu0 0
      %781 = vmatprep.subr.bf16.mxu0 0
      %782 = vmatpush1.bf16.xpose.msra.mxu0 0
      %783 = vmatprep.subr.bf16.mxu0 0
      %784 = vmatpush1.bf16.xpose.msra.mxu0 0
      %785 = vmatprep.subr.bf16.mxu0 0
      %786 = vmatpush1.bf16.xpose.msra.mxu0 %v769
      %787 = vmatprep.subr.bf16.mxu0 0
      %788 = vmatpush2.bf16.xpose.msra.mxu0 0
      %789 = vmatprep.subr.bf16.mxu0 0
      %790 = vmatpush2.bf16.xpose.msra.mxu0 0
      %791 = vmatprep.subr.bf16.mxu0 0
      %792 = vmatpush2.bf16.xpose.msra.mxu0 0
      %793 = vmatprep.subr.bf16.mxu0 0
      %794 = vmatpush2.bf16.xpose.msra.mxu0 0
      %795 = vmatprep.subr.bf16.mxu0 0
      %796 = vmatpush2.bf16.xpose.msra.mxu0 0
      %797 = vmatprep.subr.bf16.mxu0 0
      %798 = vmatpush2.bf16.xpose.msra.mxu0 0
      %799 = vmatprep.subr.bf16.mxu0 0
      %800 = vmatpush2.bf16.xpose.msra.mxu0 0
      %801 = vmatprep.subr.bf16.mxu0 0
      %802 = vmatpush2.bf16.xpose.msra.mxu0 0
      %803 = vmatprep.mubr.bf16.mxu0 0
      %804 = vmatmul.mubr.bf16.gmra.mxu0 %v766
      %v805 = vpop.f32.mrf.mxu0
      %v806 = vadd.f32 0.0, %v805
      %v807 = vpop.f32.mrf.mxu0
      %v808 = vpop.f32.mrf.mxu0
      %v809 = vadd.f32 0.0, %v808
      %v810 = vpop.f32.mrf.mxu0
      %811 = vdwg.mxu0
      %v812 = vsel %vm448, %v806, -inf
      %813 = vmax.xlane.f32.xlu0 %v812
      %v814 = vpop.xlane.xlu0 %813
      %v815 = vsel %vm448, %v809, -inf
      %816 = vmax.xlane.f32.xlu0 %v815
      %v817 = vpop.xlane.xlu0 %816
      %v818 = vsub.f32 %v806, %v814
      %v819 = vsub.f32 %v809, %v817
      %v820 = vmul.f32 %v818, 1.442695
      %v821 = vpow.pop %v820
      %v822 = vmul.f32 %v819, 1.442695
      %v823 = vpow.pop %v822
      %v824 = vsel %vm448, %v821, 0.0
      %825 = vadd.xlane.f32.xlu0 %v824
      %v826 = vpop.xlane.xlu0 %825
      %v827 = vsel %vm448, %v823, 0.0
      %828 = vadd.xlane.f32.xlu0 %v827
      %v829 = vpop.xlane.xlu0 %828
      %v830 = vrcp.pop %v826
      %v831 = vrcp.pop %v829
      %v832 = vmul.f32 %v821, %v830
      %v833 = vmul.f32 %v823, %v831
      %v834 = vpack.c.bf16 %v833, %v832
      %835 = vrot.lane.b32.xlu0 %v396, 40
      %v836 = vpop.permute.xlu0 %835
      %v839 = vsel %vm448, %v834, 0
      %841 = vmatprep.subr.bf16.mxu0 0
      %842 = vmatpush1.bf16.msra.mxu0 0
      %843 = vmatprep.subr.bf16.mxu0 0
      %844 = vmatpush1.bf16.msra.mxu0 0
      %845 = vmatprep.subr.bf16.mxu0 0
      %846 = vmatpush1.bf16.msra.mxu0 0
      %847 = vmatprep.subr.bf16.mxu0 0
      %848 = vmatpush1.bf16.msra.mxu0 0
      %849 = vmatprep.subr.bf16.mxu0 0
      %850 = vmatpush1.bf16.msra.mxu0 0
      %851 = vmatprep.subr.bf16.mxu0 0
      %852 = vmatpush1.bf16.msra.mxu0 0
      %853 = vmatprep.subr.bf16.mxu0 0
      %854 = vmatpush1.bf16.msra.mxu0 0
      %855 = vmatprep.subr.bf16.mxu0 0
      %856 = vmatpush1.bf16.msra.mxu0 %v836
      %857 = vmatprep.subr.bf16.mxu0 0
      %858 = vmatpush2.bf16.msra.mxu0 0
      %859 = vmatprep.subr.bf16.mxu0 0
      %860 = vmatpush2.bf16.msra.mxu0 0
      %861 = vmatprep.subr.bf16.mxu0 0
      %862 = vmatpush2.bf16.msra.mxu0 0
      %863 = vmatprep.subr.bf16.mxu0 0
      %864 = vmatpush2.bf16.msra.mxu0 0
      %865 = vmatprep.subr.bf16.mxu0 0
      %866 = vmatpush2.bf16.msra.mxu0 0
      %867 = vmatprep.subr.bf16.mxu0 0
      %868 = vmatpush2.bf16.msra.mxu0 0
      %869 = vmatprep.subr.bf16.mxu0 0
      %870 = vmatpush2.bf16.msra.mxu0 0
      %871 = vmatprep.subr.bf16.mxu0 0
      %872 = vmatpush2.bf16.msra.mxu0 0
      %873 = vmatprep.mubr.bf16.mxu0 0
      %874 = vmatmul.mubr.bf16.gmra.mxu0 %v839
      %v875 = vpop.f32.mrf.mxu0
      %v876 = vadd.f32 0.0, %v875
      %v877 = vpop.f32.mrf.mxu0
      %v878 = vpop.f32.mrf.mxu0
      %v879 = vadd.f32 0.0, %v878
      %v880 = vpop.f32.mrf.mxu0
      %881 = vdwg.mxu0
      %884 = vrot.lane.b32.xlu0 %v634, 8
      %v885 = vpop.permute.xlu0 %884
      %886 = vrot.lane.b32.xlu0 %v637, 8
      %v887 = vpop.permute.xlu0 %886
      %892 = vrot.lane.b32.xlu0 %v755, 16
      %v893 = vpop.permute.xlu0 %892
      %894 = vrot.lane.b32.xlu0 %v758, 16
      %v895 = vpop.permute.xlu0 %894
      %900 = vrot.lane.b32.xlu0 %v876, 24
      %v901 = vpop.permute.xlu0 %900
      %902 = vrot.lane.b32.xlu0 %v879, 24
      %v903 = vpop.permute.xlu0 %902
      %v906 = vsel %vm400, %v513, %v885
      %v907 = vsel %vm400, %v516, %v887
      %v908 = vsel %vm448, %v906, %v893
      %v909 = vsel %vm448, %v907, %v895
      %vm910 = vcmask 195584
      %v911 = vsel %vm910, %v908, %v901
      %v912 = vsel %vm910, %v909, %v903
      %v913 = vpack.c.bf16 %v912, %v911
      %v914 = vld [vmem:[%s5] sm:$0xf]
      %v915 = vld [vmem:[%s5 + $0x4] sm:$0xf]
      %v916 = vld [vmem:[%s5 + $0x8] sm:$0xf]
      %v917 = vld [vmem:[%s5 + $0xc] sm:$0xf]
      %v918 = vld [vmem:[%s6] sm:$0x1]
      %v920 = vlaneseq
      %v921 = vshrl.u32 %v920, 7
      %v922 = vsub.s32 0, %v921
      %v923 = vrot.slane %v918, %v922
      %v929 = vunpack.c.l.b16 %v914
      %v930 = vunpack.c.l.b16 %v915
      %v931 = vunpack.c.l.b16 %v916
      %v932 = vunpack.c.l.b16 %v917
      %v933 = vpack.c.b16 %v930, %v929
      %v934 = vpack.c.b16 %v932, %v931
      %v938 = vsel %vm284, %v913, 0
      %940 = vmatprep.subr.bf16.mxu0 0
      %941 = vmatpush1.bf16.msra.mxu0 0
      %942 = vmatprep.subr.bf16.mxu0 0
      %943 = vmatpush1.bf16.msra.mxu0 0
      %944 = vmatprep.subr.bf16.mxu0 0
      %945 = vmatpush1.bf16.msra.mxu0 0
      %946 = vmatprep.subr.bf16.mxu0 0
      %947 = vmatpush1.bf16.msra.mxu0 0
      %948 = vmatprep.subr.bf16.mxu0 0
      %949 = vmatpush1.bf16.msra.mxu0 0
      %950 = vmatprep.subr.bf16.mxu0 0
      %951 = vmatpush1.bf16.msra.mxu0 0
      %952 = vmatprep.subr.bf16.mxu0 0
      %953 = vmatpush1.bf16.msra.mxu0 %v934
      %954 = vmatprep.subr.bf16.mxu0 0
      %955 = vmatpush1.bf16.msra.mxu0 %v933
      %956 = vmatprep.subr.bf16.mxu0 0
      %957 = vmatpush2.bf16.msra.mxu0 0
      %958 = vmatprep.subr.bf16.mxu0 0
      %959 = vmatpush2.bf16.msra.mxu0 0
      %960 = vmatprep.subr.bf16.mxu0 0
      %961 = vmatpush2.bf16.msra.mxu0 0
      %962 = vmatprep.subr.bf16.mxu0 0
      %963 = vmatpush2.bf16.msra.mxu0 0
      %964 = vmatprep.subr.bf16.mxu0 0
      %965 = vmatpush2.bf16.msra.mxu0 0
      %966 = vmatprep.subr.bf16.mxu0 0
      %967 = vmatpush2.bf16.msra.mxu0 0
      %968 = vmatprep.subr.bf16.mxu0 0
      %969 = vmatpush2.bf16.msra.mxu0 0
      %970 = vmatprep.subr.bf16.mxu0 0
      %971 = vmatpush2.bf16.msra.mxu0 0
      %972 = vmatprep.mubr.bf16.mxu0 0
      %973 = vmatmul.mubr.bf16.gmra.mxu0 %v938
      %v974 = vpop.f32.mrf.mxu0
      %v975 = vadd.f32 %v923, %v974
      %v976 = vpop.f32.mrf.mxu0
      %v977 = vpop.f32.mrf.mxu0
      %v978 = vadd.f32 %v923, %v977
      %v979 = vpop.f32.mrf.mxu0
      %980 = vdwg.mxu0
      %v981 = vadd.f32 %v280, %v975
      %v982 = vadd.f32 %v281, %v978
      %983 = vst.msk [vmem:[%s278] sm:$0xff] %vm284, %v981
      %984 = vst.msk [vmem:[%s278 + $0x8] sm:$0xff] %vm284, %v982
      %p985 = scmp.lt.s32.totalorder %s18, 1
      %s986 = scalar_select %p985, %s18, 1
      %s987 = smul.addr %s986, 2
      %s988 = smul.addr %s987, 8
      %s989 = scalar_lea.vmem %s7, %s988
      // Predicated region
      $region49: #{sas_perceiver_io_forward.9} parent=47 // pred_check
        %p990 = pneg %p188
      $region50: #{sas_perceiver_io_forward.9} parent=47 // pred_check_branch
        %992 = sbr.rel (%p990) target = $region52
      $region51: #{sas_perceiver_io_forward.9} parent=47 // pred_region
        _
      $region52: #{sas_perceiver_io_forward.9} parent=47 // pred_fallthru
        _
    $region48: #{sas_perceiver_io_forward.9} parent=5 // pred_fallthru
      _
    %p993 = scmp.le.s32.totalorder 2, %s13
    // Predicated region
    $region53: #{sas_perceiver_io_forward.9} parent=5 // pred_check
      %p994 = pneg %p993
    $region54: #{sas_perceiver_io_forward.9} parent=5 // pred_check_branch
      %996 = sbr.rel (%p994) target = $region56
    $region55: #{sas_perceiver_io_forward.9} parent=5 // pred_region
      %s997 = ssub.s32 %s13, 2
      // Predicated region
      $region57: #{sas_perceiver_io_forward.9} parent=55 // pred_check
        %p998 = pneg %p194
      $region58: #{sas_perceiver_io_forward.9} parent=55 // pred_check_branch
        %1000 = sbr.rel (%p998) target = $region60
      $region59: #{sas_perceiver_io_forward.9} parent=55 // pred_region
        %p1001 = scmp.lt.s32.totalorder %s19, 1
        %s1002 = scalar_select %p1001, %s19, 1
        %s1003 = smul.addr %s1002, 2
        %s1004 = smul.addr %s1003, 8
        %s1005 = scalar_lea.vmem %s7, %s1004
      $region60: #{sas_perceiver_io_forward.9} parent=55 // pred_fallthru
        _
    $region56: #{sas_perceiver_io_forward.9} parent=5 // pred_fallthru
      _
  $region6: #{sas_perceiver_io_forward.9} parent=0 // loop_footer
    %s17 = sadd.s32 1, %s13
  $region7: #{sas_perceiver_io_forward.9} parent=0 // loop_footer_branch
    %12 = sbr.rel target = $region3
  $region8: #{sas_perceiver_io_forward.9} parent=0 // loop_exit
    _

// kernel: sas_perceiver_io_forward.7
$region0: #{sas_perceiver_io_forward.7}
  #allocation0 [shape = 'u32[]', space=smem, size = 0x4, offset = 0x4, fixed_abs, tag = 'smem constant byte address 0x4 - core index']
  #allocation1 [shape = 'u32[144,128]{1,0:T(1,128)}', space=vmem, size = 0x12000, scoped, tag = 'internal scratch']
  %s0 = inlined_call_operand.vmem [shape: f32[2,8,32], index: 0, kind: input, shape index: {}]
  %s1 = inlined_call_operand.vmem [shape: f32[16,32], index: 1, kind: input, shape index: {}]
  %s2 = inlined_call_operand.vmem [shape: f32[16,32], index: 2, kind: input, shape index: {}]
  %s3 = inlined_call_operand.vmem [shape: f32[1,32], index: 3, kind: input, shape index: {}]
  %s4 = inlined_call_operand.vmem [shape: f32[1,32], index: 4, kind: input, shape index: {}]
  %s5 = inlined_call_operand.vmem [shape: bf16[32,64], index: 5, kind: input, shape index: {}]
  %s6 = inlined_call_operand.vmem [shape: f32[1,64], index: 6, kind: input, shape index: {}]
  %s7 = inlined_call_operand.vmem [shape: bf16[32,32], index: 7, kind: input, shape index: {}]
  %s8 = inlined_call_operand.vmem [shape: f32[1,32], index: 8, kind: input, shape index: {}]
  %s9 = inlined_call_operand.vmem [shape: f32[2,16,32], index: 9, kind: output, shape index: {}]
  %s10 = sld [smem:[#allocation0]]
  $region69: #{sas_perceiver_io_forward.7} parent=0
    _
  %s12 = ssub.s32 1, %s10
  %s13 = scalar_select 0, %s12, %s10
  loop: start=0, step=1, limit=4
  $region2: #{sas_perceiver_io_forward.7} parent=0 // loop_pre_header
    _
  $region3: #{sas_perceiver_io_forward.7} parent=0 // loop_header
    %s15 = sphi 0, %s19
    %p16 = scmp.ge.s32.totalorder %s15, 4
    %s25 = sphi 0, %s27
    %s28 = sphi 0, %s25
    %s29 = sphi 0, %s28
    %s45 = sphi 0, %s29
    %s49 = sphi 0, %s49
    %s51 = sphi 0, %s49
    %s52 = sphi 0, %s51
    %s66 = sphi 0, %s52
    %s70 = sphi 0, %s70
    %s72 = sphi 0, %s70
    %s73 = sphi 0, %s72
    %s87 = sphi 0, %s73
    %s91 = sphi 0, %s91
    %s93 = sphi 0, %s91
    %s94 = sphi 0, %s93
    %s108 = sphi 0, %s94
    %s112 = sphi 0, %s112
    %s114 = sphi 0, %s112
    %s115 = sphi 0, %s114
    %s129 = sphi 0, %s115
    %s133 = sphi 0, %s133
    %s135 = sphi 0, %s133
    %s136 = sphi 0, %s135
    %s150 = sphi 0, %s136
    %s154 = sphi 0, %s154
    %s156 = sphi 0, %s154
    %s157 = sphi 0, %s156
    %s171 = sphi 0, %s157
    %s175 = sphi 0, %s175
    %s177 = sphi 0, %s175
    %s178 = sphi 0, %s177
    %s192 = sphi 0, %s178
    %s196 = sphi 0, %s196
    %s198 = sphi 0, %s196
    %s199 = sphi 0, %s198
    %s213 = sphi 0, %s199
    %s219 = sphi 0, %s221
    %s222 = sphi 0, %s219
    %s223 = sphi 0, %s222
    %s239 = sphi 0, %s223
  $region4: #{sas_perceiver_io_forward.7} parent=0 // loop_header_branch
    %18 = sbr.rel (%p16) target = $region8
  $region5: #{sas_perceiver_io_forward.7} parent=0 // loop_body
    %s20 = ssub.s32 %s15, 1
    %s21 = ssub.s32 %s15, 2
    %s22 = sadd.s32 %s15, 1
    %s23 = ssub.s32 %s15, %s22
    %p24 = scmp.eq.s32.totalorder %s23, 0
    %s26 = sadd.s32 %s25, 1
    %s27 = scalar_select %p24, %s25, %s26
    %p30 = pneg %p24
    %p31 = scmp.eq.s32.totalorder %s15, 1
    %p32 = por %p30, %p31
    %p33 = scmp.ne.s32.totalorder %s25, %s28
    %p34 = scmp.eq.s32.totalorder %s15, 0
    %p35 = por %p33, %p34
    %p36 = scmp.ne.s32.totalorder %s25, %s28
    %p37 = scmp.eq.s32.totalorder %s20, 1
    %p38 = por %p36, %p37
    %p39 = scmp.ne.s32.totalorder %s28, %s29
    %p40 = scmp.eq.s32.totalorder %s20, 0
    %p41 = por %p39, %p40
    %p42 = scmp.ne.s32.totalorder %s28, %s29
    %p43 = scmp.eq.s32.totalorder %s21, 1
    %p44 = por %p42, %p43
    %p46 = scmp.ne.s32.totalorder %s29, %s45
    %p47 = scmp.eq.s32.totalorder %s21, 0
    %p48 = por %p46, %p47
    %s50 = sadd.s32 %s49, 1
    %p53 = scmp.eq.s32.totalorder %s15, 1
    %p54 = scmp.ne.s32.totalorder %s49, %s51
    %p55 = scmp.eq.s32.totalorder %s15, 0
    %p56 = por %p54, %p55
    %p57 = scmp.ne.s32.totalorder %s49, %s51
    %p58 = scmp.eq.s32.totalorder %s20, 1
    %p59 = por %p57, %p58
    %p60 = scmp.ne.s32.totalorder %s51, %s52
    %p61 = scmp.eq.s32.totalorder %s20, 0
    %p62 = por %p60, %p61
    %p63 = scmp.ne.s32.totalorder %s51, %s52
    %p64 = scmp.eq.s32.totalorder %s21, 1
    %p65 = por %p63, %p64
    %p67 = scmp.ne.s32.totalorder %s52, %s66
    %p68 = scmp.eq.s32.totalorder %s21, 0
    %p69 = por %p67, %p68
    %s71 = sadd.s32 %s70, 1
    %p74 = scmp.eq.s32.totalorder %s15, 1
    %p75 = scmp.ne.s32.totalorder %s70, %s72
    %p76 = scmp.eq.s32.totalorder %s15, 0
    %p77 = por %p75, %p76
    %p78 = scmp.ne.s32.totalorder %s70, %s72
    %p79 = scmp.eq.s32.totalorder %s20, 1
    %p80 = por %p78, %p79
    %p81 = scmp.ne.s32.totalorder %s72, %s73
    %p82 = scmp.eq.s32.totalorder %s20, 0
    %p83 = por %p81, %p82
    %p84 = scmp.ne.s32.totalorder %s72, %s73
    %p85 = scmp.eq.s32.totalorder %s21, 1
    %p86 = por %p84, %p85
    %p88 = scmp.ne.s32.totalorder %s73, %s87
    %p89 = scmp.eq.s32.totalorder %s21, 0
    %p90 = por %p88, %p89
    %s92 = sadd.s32 %s91, 1
    %p95 = scmp.eq.s32.totalorder %s15, 1
    %p96 = scmp.ne.s32.totalorder %s91, %s93
    %p97 = scmp.eq.s32.totalorder %s15, 0
    %p98 = por %p96, %p97
    %p99 = scmp.ne.s32.totalorder %s91, %s93
    %p100 = scmp.eq.s32.totalorder %s20, 1
    %p101 = por %p99, %p100
    %p102 = scmp.ne.s32.totalorder %s93, %s94
    %p103 = scmp.eq.s32.totalorder %s20, 0
    %p104 = por %p102, %p103
    %p105 = scmp.ne.s32.totalorder %s93, %s94
    %p106 = scmp.eq.s32.totalorder %s21, 1
    %p107 = por %p105, %p106
    %p109 = scmp.ne.s32.totalorder %s94, %s108
    %p110 = scmp.eq.s32.totalorder %s21, 0
    %p111 = por %p109, %p110
    %s113 = sadd.s32 %s112, 1
    %p116 = scmp.eq.s32.totalorder %s15, 1
    %p117 = scmp.ne.s32.totalorder %s112, %s114
    %p118 = scmp.eq.s32.totalorder %s15, 0
    %p119 = por %p117, %p118
    %p120 = scmp.ne.s32.totalorder %s112, %s114
    %p121 = scmp.eq.s32.totalorder %s20, 1
    %p122 = por %p120, %p121
    %p123 = scmp.ne.s32.totalorder %s114, %s115
    %p124 = scmp.eq.s32.totalorder %s20, 0
    %p125 = por %p123, %p124
    %p126 = scmp.ne.s32.totalorder %s114, %s115
    %p127 = scmp.eq.s32.totalorder %s21, 1
    %p128 = por %p126, %p127
    %p130 = scmp.ne.s32.totalorder %s115, %s129
    %p131 = scmp.eq.s32.totalorder %s21, 0
    %p132 = por %p130, %p131
    %s134 = sadd.s32 %s133, 1
    %p137 = scmp.eq.s32.totalorder %s15, 1
    %p138 = scmp.ne.s32.totalorder %s133, %s135
    %p139 = scmp.eq.s32.totalorder %s15, 0
    %p140 = por %p138, %p139
    %p141 = scmp.ne.s32.totalorder %s133, %s135
    %p142 = scmp.eq.s32.totalorder %s20, 1
    %p143 = por %p141, %p142
    %p144 = scmp.ne.s32.totalorder %s135, %s136
    %p145 = scmp.eq.s32.totalorder %s20, 0
    %p146 = por %p144, %p145
    %p147 = scmp.ne.s32.totalorder %s135, %s136
    %p148 = scmp.eq.s32.totalorder %s21, 1
    %p149 = por %p147, %p148
    %p151 = scmp.ne.s32.totalorder %s136, %s150
    %p152 = scmp.eq.s32.totalorder %s21, 0
    %p153 = por %p151, %p152
    %s155 = sadd.s32 %s154, 1
    %p158 = scmp.eq.s32.totalorder %s15, 1
    %p159 = scmp.ne.s32.totalorder %s154, %s156
    %p160 = scmp.eq.s32.totalorder %s15, 0
    %p161 = por %p159, %p160
    %p162 = scmp.ne.s32.totalorder %s154, %s156
    %p163 = scmp.eq.s32.totalorder %s20, 1
    %p164 = por %p162, %p163
    %p165 = scmp.ne.s32.totalorder %s156, %s157
    %p166 = scmp.eq.s32.totalorder %s20, 0
    %p167 = por %p165, %p166
    %p168 = scmp.ne.s32.totalorder %s156, %s157
    %p169 = scmp.eq.s32.totalorder %s21, 1
    %p170 = por %p168, %p169
    %p172 = scmp.ne.s32.totalorder %s157, %s171
    %p173 = scmp.eq.s32.totalorder %s21, 0
    %p174 = por %p172, %p173
    %s176 = sadd.s32 %s175, 1
    %p179 = scmp.eq.s32.totalorder %s15, 1
    %p180 = scmp.ne.s32.totalorder %s175, %s177
    %p181 = scmp.eq.s32.totalorder %s15, 0
    %p182 = por %p180, %p181
    %p183 = scmp.ne.s32.totalorder %s175, %s177
    %p184 = scmp.eq.s32.totalorder %s20, 1
    %p185 = por %p183, %p184
    %p186 = scmp.ne.s32.totalorder %s177, %s178
    %p187 = scmp.eq.s32.totalorder %s20, 0
    %p188 = por %p186, %p187
    %p189 = scmp.ne.s32.totalorder %s177, %s178
    %p190 = scmp.eq.s32.totalorder %s21, 1
    %p191 = por %p189, %p190
    %p193 = scmp.ne.s32.totalorder %s178, %s192
    %p194 = scmp.eq.s32.totalorder %s21, 0
    %p195 = por %p193, %p194
    %s197 = sadd.s32 %s196, 1
    %p200 = scmp.eq.s32.totalorder %s15, 1
    %p201 = scmp.ne.s32.totalorder %s196, %s198
    %p202 = scmp.eq.s32.totalorder %s15, 0
    %p203 = por %p201, %p202
    %p204 = scmp.ne.s32.totalorder %s196, %s198
    %p205 = scmp.eq.s32.totalorder %s20, 1
    %p206 = por %p204, %p205
    %p207 = scmp.ne.s32.totalorder %s198, %s199
    %p208 = scmp.eq.s32.totalorder %s20, 0
    %p209 = por %p207, %p208
    %p210 = scmp.ne.s32.totalorder %s198, %s199
    %p211 = scmp.eq.s32.totalorder %s21, 1
    %p212 = por %p210, %p211
    %p214 = scmp.ne.s32.totalorder %s199, %s213
    %p215 = scmp.eq.s32.totalorder %s21, 0
    %p216 = por %p214, %p215
    %s217 = ssub.s32 %s15, %s22
    %p218 = scmp.eq.s32.totalorder %s217, 0
    %s220 = sadd.s32 %s219, 1
    %s221 = scalar_select %p218, %s219, %s220
    %p224 = pneg %p218
    %p225 = scmp.eq.s32.totalorder %s15, 1
    %p226 = por %p224, %p225
    %p227 = scmp.ne.s32.totalorder %s219, %s222
    %p228 = scmp.eq.s32.totalorder %s15, 0
    %p229 = por %p227, %p228
    %p230 = scmp.ne.s32.totalorder %s219, %s222
    %p231 = scmp.eq.s32.totalorder %s20, 1
    %p232 = por %p230, %p231
    %p233 = scmp.ne.s32.totalorder %s222, %s223
    %p234 = scmp.eq.s32.totalorder %s20, 0
    %p235 = por %p233, %p234
    %p236 = scmp.ne.s32.totalorder %s222, %s223
    %p237 = scmp.eq.s32.totalorder %s21, 1
    %p238 = por %p236, %p237
    %p240 = scmp.ne.s32.totalorder %s223, %s239
    %p241 = scmp.eq.s32.totalorder %s21, 0
    %p242 = por %p240, %p241
    %p243 = scmp.le.s32.totalorder 1, %s15
    %p244 = scmp.lt.s32.totalorder %s15, 3
    %p245 = pnand %p243, %p244
    %p246 = pneg %p245
    // Predicated region
    $region9: #{sas_perceiver_io_forward.7} parent=5 // pred_check
      _
    $region10: #{sas_perceiver_io_forward.7} parent=5 // pred_check_branch
      %248 = sbr.rel (%p245) target = $region12
    $region11: #{sas_perceiver_io_forward.7} parent=5 // pred_region
      %s249 = ssub.s32 %s15, 1
      // Predicated region
      $region13: #{sas_perceiver_io_forward.7} parent=11 // pred_check
        %p250 = pneg %p62
      $region14: #{sas_perceiver_io_forward.7} parent=11 // pred_check_branch
        %252 = sbr.rel (%p250) target = $region16
      $region15: #{sas_perceiver_io_forward.7} parent=11 // pred_region
        _
      $region16: #{sas_perceiver_io_forward.7} parent=11 // pred_fallthru
        _
      // Predicated region
      $region17: #{sas_perceiver_io_forward.7} parent=11 // pred_check
        %p253 = pneg %p83
      $region18: #{sas_perceiver_io_forward.7} parent=11 // pred_check_branch
        %255 = sbr.rel (%p253) target = $region20
      $region19: #{sas_perceiver_io_forward.7} parent=11 // pred_region
        _
      $region20: #{sas_perceiver_io_forward.7} parent=11 // pred_fallthru
        _
      // Predicated region
      $region21: #{sas_perceiver_io_forward.7} parent=11 // pred_check
        %p256 = pneg %p104
      $region22: #{sas_perceiver_io_forward.7} parent=11 // pred_check_branch
        %258 = sbr.rel (%p256) target = $region24
      $region23: #{sas_perceiver_io_forward.7} parent=11 // pred_region
        _
      $region24: #{sas_perceiver_io_forward.7} parent=11 // pred_fallthru
        _
      // Predicated region
      $region25: #{sas_perceiver_io_forward.7} parent=11 // pred_check
        %p259 = pneg %p125
      $region26: #{sas_perceiver_io_forward.7} parent=11 // pred_check_branch
        %261 = sbr.rel (%p259) target = $region28
      $region27: #{sas_perceiver_io_forward.7} parent=11 // pred_region
        _
      $region28: #{sas_perceiver_io_forward.7} parent=11 // pred_fallthru
        _
      // Predicated region
      $region29: #{sas_perceiver_io_forward.7} parent=11 // pred_check
        %p262 = pneg %p146
      $region30: #{sas_perceiver_io_forward.7} parent=11 // pred_check_branch
        %264 = sbr.rel (%p262) target = $region32
      $region31: #{sas_perceiver_io_forward.7} parent=11 // pred_region
        _
      $region32: #{sas_perceiver_io_forward.7} parent=11 // pred_fallthru
        _
      // Predicated region
      $region33: #{sas_perceiver_io_forward.7} parent=11 // pred_check
        %p265 = pneg %p167
      $region34: #{sas_perceiver_io_forward.7} parent=11 // pred_check_branch
        %267 = sbr.rel (%p265) target = $region36
      $region35: #{sas_perceiver_io_forward.7} parent=11 // pred_region
        _
      $region36: #{sas_perceiver_io_forward.7} parent=11 // pred_fallthru
        _
      // Predicated region
      $region37: #{sas_perceiver_io_forward.7} parent=11 // pred_check
        %p268 = pneg %p188
      $region38: #{sas_perceiver_io_forward.7} parent=11 // pred_check_branch
        %270 = sbr.rel (%p268) target = $region40
      $region39: #{sas_perceiver_io_forward.7} parent=11 // pred_region
        _
      $region40: #{sas_perceiver_io_forward.7} parent=11 // pred_fallthru
        _
      // Predicated region
      $region41: #{sas_perceiver_io_forward.7} parent=11 // pred_check
        %p271 = pneg %p209
      $region42: #{sas_perceiver_io_forward.7} parent=11 // pred_check_branch
        %273 = sbr.rel (%p271) target = $region44
      $region43: #{sas_perceiver_io_forward.7} parent=11 // pred_region
        _
      $region44: #{sas_perceiver_io_forward.7} parent=11 // pred_fallthru
        _
    $region12: #{sas_perceiver_io_forward.7} parent=5 // pred_fallthru
      _
    %p274 = scmp.lt.s32.totalorder %s15, 2
    // Predicated region
    $region45: #{sas_perceiver_io_forward.7} parent=5 // pred_check
      %p275 = pneg %p274
    $region46: #{sas_perceiver_io_forward.7} parent=5 // pred_check_branch
      %277 = sbr.rel (%p275) target = $region48
    $region47: #{sas_perceiver_io_forward.7} parent=5 // pred_region
      // Predicated region
      $region49: #{sas_perceiver_io_forward.7} parent=47 // pred_check
        %p278 = pneg %p35
      $region50: #{sas_perceiver_io_forward.7} parent=47 // pred_check_branch
        %280 = sbr.rel (%p278) target = $region52
      $region51: #{sas_perceiver_io_forward.7} parent=47 // pred_region
        %p281 = scmp.lt.s32.totalorder %s15, 1
        %s282 = scalar_select %p281, %s15, 1
        %s283 = smul.addr %s282, 8
        %s284 = scalar_lea.vmem %s0, %s283
      $region52: #{sas_perceiver_io_forward.7} parent=47 // pred_fallthru
        _
    $region48: #{sas_perceiver_io_forward.7} parent=5 // pred_fallthru
      _
    %p285 = scmp.le.s32.totalorder 1, %s15
    %p286 = scmp.lt.s32.totalorder %s15, 3
    %p287 = pnand %p285, %p286
    %p288 = pneg %p287
    // Predicated region
    $region53: #{sas_perceiver_io_forward.7} parent=5 // pred_check
      _
    $region54: #{sas_perceiver_io_forward.7} parent=5 // pred_check_branch
      %290 = sbr.rel (%p287) target = $region56
    $region55: #{sas_perceiver_io_forward.7} parent=5 // pred_region
      %s291 = ssub.s32 %s15, 1
      %p292 = scmp.lt.s32.totalorder %s20, 1
      %s293 = scalar_select %p292, %s20, 1
      %s294 = smul.addr %s293, 8
      %s295 = scalar_lea.vmem %s0, %s294
      %p296 = pneg %p41
      %p297 = pneg %p38
      %p298 = pneg %p62
      %p299 = pneg %p59
      %p300 = pneg %p83
      %p301 = pneg %p80
      %p302 = pneg %p104
      %p303 = pneg %p101
      %p304 = pneg %p125
      %p305 = pneg %p122
      %p306 = pneg %p146
      %p307 = pneg %p143
      %p308 = pneg %p167
      %p309 = pneg %p164
      %p310 = pneg %p188
      %p311 = pneg %p185
      %p312 = pneg %p209
      %p313 = pneg %p206
      %p314 = pneg %p235
      %p315 = pneg %p232
      %p316 = scmp.lt.s32.totalorder %s20, 1
      %s317 = scalar_select %p316, %s20, 1
      %s318 = smul.addr %s317, 2
      %s319 = smul.addr %s318, 8
      %s320 = scalar_lea.vmem %s9, %s319
      %p321 = scmp.lt.s32.totalorder %s20, 1
      %s322 = scalar_select %p321, %s20, 1
      %s323 = smul.addr %s322, 8
      %s324 = scalar_lea.vmem %s0, %s323
      %p325 = scmp.lt.s32.totalorder %s20, 1
      %s326 = scalar_select %p325, %s20, 1
      %s327 = smul.addr %s326, 2
      %s328 = smul.addr %s327, 8
      %s329 = scalar_lea.vmem %s9, %s328
      %v331 = vld [vmem:[%s324] sm:$0xff]
      %v332 = vld [vmem:[%s3] sm:$0x1]
      %v333 = vld [vmem:[%s4] sm:$0x1]
      %vm334 = vcmask 261120
      %v335 = vsel %vm334, %v331, 0.0
      %336 = vadd.xlane.f32.xlu0 %v335
      %v337 = vpop.xlane.xlu0 %336
      %v338 = vrcp.pop 32.0
      %v339 = vmul.f32 %v337, %v338
      %v340 = vsub.f32 %v331, %v339
      %v341 = vmul.f32 %v340, %v340
      %v342 = vsel %vm334, %v341, 0.0
      %343 = vadd.xlane.f32.xlu0 %v342
      %v344 = vpop.xlane.xlu0 %343
      %v345 = vmul.f32 %v344, %v338
      %v346 = vadd.f32 %v345, 1e-05
      %v347 = vrsqrt.pop %v346
      %v348 = vmul.f32 %v340, %v347
      %v350 = vlaneseq
      %v351 = vshrl.u32 %v350, 7
      %v352 = vsub.s32 0, %v351
      %v353 = vrot.slane %v332, %v352
      %v355 = vmul.f32 %v348, %v353
      %v357 = vlaneseq
      %v358 = vshrl.u32 %v357, 7
      %v359 = vsub.s32 0, %v358
      %v360 = vrot.slane %v333, %v359
      %v362 = vadd.f32 %v355, %v360
      %v363 = vpack.c.bf16 %v362, %v362
      %v364 = vld [vmem:[%s5] sm:$0xf]
      %v365 = vld [vmem:[%s5 + $0x4] sm:$0xf]
      %v366 = vld [vmem:[%s5 + $0x8] sm:$0xf]
      %v367 = vld [vmem:[%s5 + $0xc] sm:$0xf]
      %v368 = vld [vmem:[%s6] sm:$0x1]
      %v370 = vlaneseq
      %v371 = vshrl.u32 %v370, 7
      %v372 = vsub.s32 0, %v371
      %v373 = vrot.slane %v368, %v372
      %v379 = vunpack.c.l.b16 %v364
      %v380 = vunpack.c.l.b16 %v365
      %v381 = vunpack.c.l.b16 %v366
      %v382 = vunpack.c.l.b16 %v367
      %v383 = vpack.c.b16 %v380, %v379
      %v384 = vpack.c.b16 %v382, %v381
      %v388 = vsel %vm334, %v363, 0
      %390 = vmatprep.subr.bf16.mxu0 0
      %391 = vmatpush1.bf16.msra.mxu0 0
      %392 = vmatprep.subr.bf16.mxu0 0
      %393 = vmatpush1.bf16.msra.mxu0 0
      %394 = vmatprep.subr.bf16.mxu0 0
      %395 = vmatpush1.bf16.msra.mxu0 0
      %396 = vmatprep.subr.bf16.mxu0 0
      %397 = vmatpush1.bf16.msra.mxu0 0
      %398 = vmatprep.subr.bf16.mxu0 0
      %399 = vmatpush1.bf16.msra.mxu0 0
      %400 = vmatprep.subr.bf16.mxu0 0
      %401 = vmatpush1.bf16.msra.mxu0 0
      %402 = vmatprep.subr.bf16.mxu0 0
      %403 = vmatpush1.bf16.msra.mxu0 %v384
      %404 = vmatprep.subr.bf16.mxu0 0
      %405 = vmatpush1.bf16.msra.mxu0 %v383
      %406 = vmatprep.subr.bf16.mxu0 0
      %407 = vmatpush2.bf16.msra.mxu0 0
      %408 = vmatprep.subr.bf16.mxu0 0
      %409 = vmatpush2.bf16.msra.mxu0 0
      %410 = vmatprep.subr.bf16.mxu0 0
      %411 = vmatpush2.bf16.msra.mxu0 0
      %412 = vmatprep.subr.bf16.mxu0 0
      %413 = vmatpush2.bf16.msra.mxu0 0
      %414 = vmatprep.subr.bf16.mxu0 0
      %415 = vmatpush2.bf16.msra.mxu0 0
      %416 = vmatprep.subr.bf16.mxu0 0
      %417 = vmatpush2.bf16.msra.mxu0 0
      %418 = vmatprep.subr.bf16.mxu0 0
      %419 = vmatpush2.bf16.msra.mxu0 0
      %420 = vmatprep.subr.bf16.mxu0 0
      %421 = vmatpush2.bf16.msra.mxu0 0
      %422 = vmatprep.mubr.bf16.mxu0 0
      %423 = vmatmul.mubr.bf16.gmra.mxu0 %v388
      %v424 = vpop.f32.mrf.mxu0
      %v425 = vadd.f32 %v373, %v424
      %v426 = vpop.f32.mrf.mxu0
      %v427 = vpop.f32.mrf.mxu0
      %v428 = vpop.f32.mrf.mxu0
      %429 = vdwg.mxu0
      %v430 = vld [vmem:[%s1] sm:$0xff]
      %v431 = vld [vmem:[%s1 + $0x8] sm:$0xff]
      %v432 = vpack.c.bf16 %v431, %v430
      %v433 = vpack.c.bf16 %v425, %v425
      %vm434 = vcmask 64512
      %v436 = vsel %vm434, %v432, 0
      %v439 = vsel %vm434, %v433, 0
      %441 = vmatprep.subr.bf16.mxu0 0
      %442 = vmatpush1.bf16.xpose.msra.mxu0 0
      %443 = vmatprep.subr.bf16.mxu0 0
      %444 = vmatpush1.bf16.xpose.msra.mxu0 0
      %445 = vmatprep.subr.bf16.mxu0 0
      %446 = vmatpush1.bf16.xpose.msra.mxu0 0
      %447 = vmatprep.subr.bf16.mxu0 0
      %448 = vmatpush1.bf16.xpose.msra.mxu0 0
      %449 = vmatprep.subr.bf16.mxu0 0
      %450 = vmatpush1.bf16.xpose.msra.mxu0 0
      %451 = vmatprep.subr.bf16.mxu0 0
      %452 = vmatpush1.bf16.xpose.msra.mxu0 0
      %453 = vmatprep.subr.bf16.mxu0 0
      %454 = vmatpush1.bf16.xpose.msra.mxu0 0
      %455 = vmatprep.subr.bf16.mxu0 0
      %456 = vmatpush1.bf16.xpose.msra.mxu0 %v439
      %457 = vmatprep.subr.bf16.mxu0 0
      %458 = vmatpush2.bf16.xpose.msra.mxu0 0
      %459 = vmatprep.subr.bf16.mxu0 0
      %460 = vmatpush2.bf16.xpose.msra.mxu0 0
      %461 = vmatprep.subr.bf16.mxu0 0
      %462 = vmatpush2.bf16.xpose.msra.mxu0 0
      %463 = vmatprep.subr.bf16.mxu0 0
      %464 = vmatpush2.bf16.xpose.msra.mxu0 0
      %465 = vmatprep.subr.bf16.mxu0 0
      %466 = vmatpush2.bf16.xpose.msra.mxu0 0
      %467 = vmatprep.subr.bf16.mxu0 0
      %468 = vmatpush2.bf16.xpose.msra.mxu0 0
      %469 = vmatprep.subr.bf16.mxu0 0
      %470 = vmatpush2.bf16.xpose.msra.mxu0 0
      %471 = vmatprep.subr.bf16.mxu0 0
      %472 = vmatpush2.bf16.xpose.msra.mxu0 0
      %473 = vmatprep.mubr.bf16.mxu0 0
      %474 = vmatmul.mubr.bf16.gmra.mxu0 %v436
      %v475 = vpop.f32.mrf.mxu0
      %v476 = vadd.f32 0.0, %v475
      %v477 = vpop.f32.mrf.mxu0
      %v478 = vpop.f32.mrf.mxu0
      %v479 = vadd.f32 0.0, %v478
      %v480 = vpop.f32.mrf.mxu0
      %481 = vdwg.mxu0
      %v482 = vsel %vm434, %v476, -inf
      %483 = vmax.xlane.f32.xlu0 %v482
      %v484 = vpop.xlane.xlu0 %483
      %v485 = vsel %vm434, %v479, -inf
      %486 = vmax.xlane.f32.xlu0 %v485
      %v487 = vpop.xlane.xlu0 %486
      %v488 = vsub.f32 %v476, %v484
      %v489 = vsub.f32 %v479, %v487
      %v490 = vmul.f32 %v488, 1.442695
      %v491 = vpow.pop %v490
      %v492 = vmul.f32 %v489, 1.442695
      %v493 = vpow.pop %v492
      %v494 = vsel %vm434, %v491, 0.0
      %495 = vadd.xlane.f32.xlu0 %v494
      %v496 = vpop.xlane.xlu0 %495
      %v497 = vsel %vm434, %v493, 0.0
      %498 = vadd.xlane.f32.xlu0 %v497
      %v499 = vpop.xlane.xlu0 %498
      %v500 = vrcp.pop %v496
      %v501 = vrcp.pop %v499
      %v502 = vmul.f32 %v491, %v500
      %v503 = vmul.f32 %v493, %v501
      %v504 = vpack.c.bf16 %v503, %v502
      %506 = vrot.lane.b32.xlu0 %v433, 96
      %v507 = vpop.permute.xlu0 %506
      %v509 = vsel %vm434, %v504, 0
      %vm511 = vcmask 1043456
      %v513 = vsel %vm511, %v507, 0
      %515 = vmatprep.subr.bf16.mxu0 0
      %516 = vmatpush1.bf16.msra.mxu0 0
      %517 = vmatprep.subr.bf16.mxu0 0
      %518 = vmatpush1.bf16.msra.mxu0 0
      %519 = vmatprep.subr.bf16.mxu0 0
      %520 = vmatpush1.bf16.msra.mxu0 0
      %521 = vmatprep.subr.bf16.mxu0 0
      %522 = vmatpush1.bf16.msra.mxu0 0
      %523 = vmatprep.subr.bf16.mxu0 0
      %524 = vmatpush1.bf16.msra.mxu0 0
      %525 = vmatprep.subr.bf16.mxu0 0
      %526 = vmatpush1.bf16.msra.mxu0 0
      %527 = vmatprep.subr.bf16.mxu0 0
      %528 = vmatpush1.bf16.msra.mxu0 0
      %529 = vmatprep.subr.bf16.mxu0 0
      %530 = vmatpush1.bf16.msra.mxu0 %v513
      %531 = vmatprep.subr.bf16.mxu0 0
      %532 = vmatpush2.bf16.msra.mxu0 0
      %533 = vmatprep.subr.bf16.mxu0 0
      %534 = vmatpush2.bf16.msra.mxu0 0
      %535 = vmatprep.subr.bf16.mxu0 0
      %536 = vmatpush2.bf16.msra.mxu0 0
      %537 = vmatprep.subr.bf16.mxu0 0
      %538 = vmatpush2.bf16.msra.mxu0 0
      %539 = vmatprep.subr.bf16.mxu0 0
      %540 = vmatpush2.bf16.msra.mxu0 0
      %541 = vmatprep.subr.bf16.mxu0 0
      %542 = vmatpush2.bf16.msra.mxu0 0
      %543 = vmatprep.subr.bf16.mxu0 0
      %544 = vmatpush2.bf16.msra.mxu0 0
      %545 = vmatprep.subr.bf16.mxu0 0
      %546 = vmatpush2.bf16.msra.mxu0 0
      %547 = vmatprep.mubr.bf16.mxu0 0
      %548 = vmatmul.mubr.bf16.gmra.mxu0 %v509
      %v549 = vpop.f32.mrf.mxu0
      %v550 = vadd.f32 0.0, %v549
      %v551 = vpop.f32.mrf.mxu0
      %v552 = vpop.f32.mrf.mxu0
      %v553 = vadd.f32 0.0, %v552
      %v554 = vpop.f32.mrf.mxu0
      %555 = vdwg.mxu0
      %557 = vrot.lane.b32.xlu0 %v432, 120
      %v558 = vpop.permute.xlu0 %557
      %559 = vrot.lane.b32.xlu0 %v433, 120
      %v560 = vpop.permute.xlu0 %559
      %v562 = vsel %vm434, %v558, 0
      %v565 = vsel %vm434, %v560, 0
      %567 = vmatprep.subr.bf16.mxu0 0
      %568 = vmatpush1.bf16.xpose.msra.mxu0 0
      %569 = vmatprep.subr.bf16.mxu0 0
      %570 = vmatpush1.bf16.xpose.msra.mxu0 0
      %571 = vmatprep.subr.bf16.mxu0 0
      %572 = vmatpush1.bf16.xpose.msra.mxu0 0
      %573 = vmatprep.subr.bf16.mxu0 0
      %574 = vmatpush1.bf16.xpose.msra.mxu0 0
      %575 = vmatprep.subr.bf16.mxu0 0
      %576 = vmatpush1.bf16.xpose.msra.mxu0 0
      %577 = vmatprep.subr.bf16.mxu0 0
      %578 = vmatpush1.bf16.xpose.msra.mxu0 0
      %579 = vmatprep.subr.bf16.mxu0 0
      %580 = vmatpush1.bf16.xpose.msra.mxu0 0
      %581 = vmatprep.subr.bf16.mxu0 0
      %582 = vmatpush1.bf16.xpose.msra.mxu0 %v565
      %583 = vmatprep.subr.bf16.mxu0 0
      %584 = vmatpush2.bf16.xpose.msra.mxu0 0
      %585 = vmatprep.subr.bf16.mxu0 0
      %586 = vmatpush2.bf16.xpose.msra.mxu0 0
      %587 = vmatprep.subr.bf16.mxu0 0
      %588 = vmatpush2.bf16.xpose.msra.mxu0 0
      %589 = vmatprep.subr.bf16.mxu0 0
      %590 = vmatpush2.bf16.xpose.msra.mxu0 0
      %591 = vmatprep.subr.bf16.mxu0 0
      %592 = vmatpush2.bf16.xpose.msra.mxu0 0
      %593 = vmatprep.subr.bf16.mxu0 0
      %594 = vmatpush2.bf16.xpose.msra.mxu0 0
      %595 = vmatprep.subr.bf16.mxu0 0
      %596 = vmatpush2.bf16.xpose.msra.mxu0 0
      %597 = vmatprep.subr.bf16.mxu0 0
      %598 = vmatpush2.bf16.xpose.msra.mxu0 0
      %599 = vmatprep.mubr.bf16.mxu0 0
      %600 = vmatmul.mubr.bf16.gmra.mxu0 %v562
      %v601 = vpop.f32.mrf.mxu0
      %v602 = vadd.f32 0.0, %v601
      %v603 = vpop.f32.mrf.mxu0
      %v604 = vpop.f32.mrf.mxu0
      %v605 = vadd.f32 0.0, %v604
      %v606 = vpop.f32.mrf.mxu0
      %607 = vdwg.mxu0
      %v608 = vsel %vm434, %v602, -inf
      %609 = vmax.xlane.f32.xlu0 %v608
      %v610 = vpop.xlane.xlu0 %609
      %v611 = vsel %vm434, %v605, -inf
      %612 = vmax.xlane.f32.xlu0 %v611
      %v613 = vpop.xlane.xlu0 %612
      %v614 = vsub.f32 %v602, %v610
      %v615 = vsub.f32 %v605, %v613
      %v616 = vmul.f32 %v614, 1.442695
      %v617 = vpow.pop %v616
      %v618 = vmul.f32 %v615, 1.442695
      %v619 = vpow.pop %v618
      %v620 = vsel %vm434, %v617, 0.0
      %621 = vadd.xlane.f32.xlu0 %v620
      %v622 = vpop.xlane.xlu0 %621
      %v623 = vsel %vm434, %v619, 0.0
      %624 = vadd.xlane.f32.xlu0 %v623
      %v625 = vpop.xlane.xlu0 %624
      %v626 = vrcp.pop %v622
      %v627 = vrcp.pop %v625
      %v628 = vmul.f32 %v617, %v626
      %v629 = vmul.f32 %v619, %v627
      %v630 = vpack.c.bf16 %v629, %v628
      %631 = vrot.lane.b32.xlu0 %v433, 88
      %v632 = vpop.permute.xlu0 %631
      %v634 = vsel %vm434, %v630, 0
      %v637 = vsel %vm511, %v632, 0
      %639 = vmatprep.subr.bf16.mxu0 0
      %640 = vmatpush1.bf16.msra.mxu0 0
      %641 = vmatprep.subr.bf16.mxu0 0
      %642 = vmatpush1.bf16.msra.mxu0 0
      %643 = vmatprep.subr.bf16.mxu0 0
      %644 = vmatpush1.bf16.msra.mxu0 0
      %645 = vmatprep.subr.bf16.mxu0 0
      %646 = vmatpush1.bf16.msra.mxu0 0
      %647 = vmatprep.subr.bf16.mxu0 0
      %648 = vmatpush1.bf16.msra.mxu0 0
      %649 = vmatprep.subr.bf16.mxu0 0
      %650 = vmatpush1.bf16.msra.mxu0 0
      %651 = vmatprep.subr.bf16.mxu0 0
      %652 = vmatpush1.bf16.msra.mxu0 0
      %653 = vmatprep.subr.bf16.mxu0 0
      %654 = vmatpush1.bf16.msra.mxu0 %v637
      %655 = vmatprep.subr.bf16.mxu0 0
      %656 = vmatpush2.bf16.msra.mxu0 0
      %657 = vmatprep.subr.bf16.mxu0 0
      %658 = vmatpush2.bf16.msra.mxu0 0
      %659 = vmatprep.subr.bf16.mxu0 0
      %660 = vmatpush2.bf16.msra.mxu0 0
      %661 = vmatprep.subr.bf16.mxu0 0
      %662 = vmatpush2.bf16.msra.mxu0 0
      %663 = vmatprep.subr.bf16.mxu0 0
      %664 = vmatpush2.bf16.msra.mxu0 0
      %665 = vmatprep.subr.bf16.mxu0 0
      %666 = vmatpush2.bf16.msra.mxu0 0
      %667 = vmatprep.subr.bf16.mxu0 0
      %668 = vmatpush2.bf16.msra.mxu0 0
      %669 = vmatprep.subr.bf16.mxu0 0
      %670 = vmatpush2.bf16.msra.mxu0 0
      %671 = vmatprep.mubr.bf16.mxu0 0
      %672 = vmatmul.mubr.bf16.gmra.mxu0 %v634
      %v673 = vpop.f32.mrf.mxu0
      %v674 = vadd.f32 0.0, %v673
      %v675 = vpop.f32.mrf.mxu0
      %v676 = vpop.f32.mrf.mxu0
      %v677 = vadd.f32 0.0, %v676
      %v678 = vpop.f32.mrf.mxu0
      %679 = vdwg.mxu0
      %680 = vrot.lane.b32.xlu0 %v432, 112
      %v681 = vpop.permute.xlu0 %680
      %682 = vrot.lane.b32.xlu0 %v433, 112
      %v683 = vpop.permute.xlu0 %682
      %v685 = vsel %vm434, %v681, 0
      %v688 = vsel %vm434, %v683, 0
      %690 = vmatprep.subr.bf16.mxu0 0
      %691 = vmatpush1.bf16.xpose.msra.mxu0 0
      %692 = vmatprep.subr.bf16.mxu0 0
      %693 = vmatpush1.bf16.xpose.msra.mxu0 0
      %694 = vmatprep.subr.bf16.mxu0 0
      %695 = vmatpush1.bf16.xpose.msra.mxu0 0
      %696 = vmatprep.subr.bf16.mxu0 0
      %697 = vmatpush1.bf16.xpose.msra.mxu0 0
      %698 = vmatprep.subr.bf16.mxu0 0
      %699 = vmatpush1.bf16.xpose.msra.mxu0 0
      %700 = vmatprep.subr.bf16.mxu0 0
      %701 = vmatpush1.bf16.xpose.msra.mxu0 0
      %702 = vmatprep.subr.bf16.mxu0 0
      %703 = vmatpush1.bf16.xpose.msra.mxu0 0
      %704 = vmatprep.subr.bf16.mxu0 0
      %705 = vmatpush1.bf16.xpose.msra.mxu0 %v688
      %706 = vmatprep.subr.bf16.mxu0 0
      %707 = vmatpush2.bf16.xpose.msra.mxu0 0
      %708 = vmatprep.subr.bf16.mxu0 0
      %709 = vmatpush2.bf16.xpose.msra.mxu0 0
      %710 = vmatprep.subr.bf16.mxu0 0
      %711 = vmatpush2.bf16.xpose.msra.mxu0 0
      %712 = vmatprep.subr.bf16.mxu0 0
      %713 = vmatpush2.bf16.xpose.msra.mxu0 0
      %714 = vmatprep.subr.bf16.mxu0 0
      %715 = vmatpush2.bf16.xpose.msra.mxu0 0
      %716 = vmatprep.subr.bf16.mxu0 0
      %717 = vmatpush2.bf16.xpose.msra.mxu0 0
      %718 = vmatprep.subr.bf16.mxu0 0
      %719 = vmatpush2.bf16.xpose.msra.mxu0 0
      %720 = vmatprep.subr.bf16.mxu0 0
      %721 = vmatpush2.bf16.xpose.msra.mxu0 0
      %722 = vmatprep.mubr.bf16.mxu0 0
      %723 = vmatmul.mubr.bf16.gmra.mxu0 %v685
      %v724 = vpop.f32.mrf.mxu0
      %v725 = vadd.f32 0.0, %v724
      %v726 = vpop.f32.mrf.mxu0
      %v727 = vpop.f32.mrf.mxu0
      %v728 = vadd.f32 0.0, %v727
      %v729 = vpop.f32.mrf.mxu0
      %730 = vdwg.mxu0
      %v731 = vsel %vm434, %v725, -inf
      %732 = vmax.xlane.f32.xlu0 %v731
      %v733 = vpop.xlane.xlu0 %732
      %v734 = vsel %vm434, %v728, -inf
      %735 = vmax.xlane.f32.xlu0 %v734
      %v736 = vpop.xlane.xlu0 %735
      %v737 = vsub.f32 %v725, %v733
      %v738 = vsub.f32 %v728, %v736
      %v739 = vmul.f32 %v737, 1.442695
      %v740 = vpow.pop %v739
      %v741 = vmul.f32 %v738, 1.442695
      %v742 = vpow.pop %v741
      %v743 = vsel %vm434, %v740, 0.0
      %744 = vadd.xlane.f32.xlu0 %v743
      %v745 = vpop.xlane.xlu0 %744
      %v746 = vsel %vm434, %v742, 0.0
      %747 = vadd.xlane.f32.xlu0 %v746
      %v748 = vpop.xlane.xlu0 %747
      %v749 = vrcp.pop %v745
      %v750 = vrcp.pop %v748
      %v751 = vmul.f32 %v740, %v749
      %v752 = vmul.f32 %v742, %v750
      %v753 = vpack.c.bf16 %v752, %v751
      %754 = vrot.lane.b32.xlu0 %v433, 80
      %v755 = vpop.permute.xlu0 %754
      %v757 = vsel %vm434, %v753, 0
      %v760 = vsel %vm511, %v755, 0
      %762 = vmatprep.subr.bf16.mxu0 0
      %763 = vmatpush1.bf16.msra.mxu0 0
      %764 = vmatprep.subr.bf16.mxu0 0
      %765 = vmatpush1.bf16.msra.mxu0 0
      %766 = vmatprep.subr.bf16.mxu0 0
      %767 = vmatpush1.bf16.msra.mxu0 0
      %768 = vmatprep.subr.bf16.mxu0 0
      %769 = vmatpush1.bf16.msra.mxu0 0
      %770 = vmatprep.subr.bf16.mxu0 0
      %771 = vmatpush1.bf16.msra.mxu0 0
      %772 = vmatprep.subr.bf16.mxu0 0
      %773 = vmatpush1.bf16.msra.mxu0 0
      %774 = vmatprep.subr.bf16.mxu0 0
      %775 = vmatpush1.bf16.msra.mxu0 0
      %776 = vmatprep.subr.bf16.mxu0 0
      %777 = vmatpush1.bf16.msra.mxu0 %v760
      %778 = vmatprep.subr.bf16.mxu0 0
      %779 = vmatpush2.bf16.msra.mxu0 0
      %780 = vmatprep.subr.bf16.mxu0 0
      %781 = vmatpush2.bf16.msra.mxu0 0
      %782 = vmatprep.subr.bf16.mxu0 0
      %783 = vmatpush2.bf16.msra.mxu0 0
      %784 = vmatprep.subr.bf16.mxu0 0
      %785 = vmatpush2.bf16.msra.mxu0 0
      %786 = vmatprep.subr.bf16.mxu0 0
      %787 = vmatpush2.bf16.msra.mxu0 0
      %788 = vmatprep.subr.bf16.mxu0 0
      %789 = vmatpush2.bf16.msra.mxu0 0
      %790 = vmatprep.subr.bf16.mxu0 0
      %791 = vmatpush2.bf16.msra.mxu0 0
      %792 = vmatprep.subr.bf16.mxu0 0
      %793 = vmatpush2.bf16.msra.mxu0 0
      %794 = vmatprep.mubr.bf16.mxu0 0
      %795 = vmatmul.mubr.bf16.gmra.mxu0 %v757
      %v796 = vpop.f32.mrf.mxu0
      %v797 = vadd.f32 0.0, %v796
      %v798 = vpop.f32.mrf.mxu0
      %v799 = vpop.f32.mrf.mxu0
      %v800 = vadd.f32 0.0, %v799
      %v801 = vpop.f32.mrf.mxu0
      %802 = vdwg.mxu0
      %803 = vrot.lane.b32.xlu0 %v432, 104
      %v804 = vpop.permute.xlu0 %803
      %805 = vrot.lane.b32.xlu0 %v433, 104
      %v806 = vpop.permute.xlu0 %805
      %v808 = vsel %vm434, %v804, 0
      %v811 = vsel %vm434, %v806, 0
      %813 = vmatprep.subr.bf16.mxu0 0
      %814 = vmatpush1.bf16.xpose.msra.mxu0 0
      %815 = vmatprep.subr.bf16.mxu0 0
      %816 = vmatpush1.bf16.xpose.msra.mxu0 0
      %817 = vmatprep.subr.bf16.mxu0 0
      %818 = vmatpush1.bf16.xpose.msra.mxu0 0
      %819 = vmatprep.subr.bf16.mxu0 0
      %820 = vmatpush1.bf16.xpose.msra.mxu0 0
      %821 = vmatprep.subr.bf16.mxu0 0
      %822 = vmatpush1.bf16.xpose.msra.mxu0 0
      %823 = vmatprep.subr.bf16.mxu0 0
      %824 = vmatpush1.bf16.xpose.msra.mxu0 0
      %825 = vmatprep.subr.bf16.mxu0 0
      %826 = vmatpush1.bf16.xpose.msra.mxu0 0
      %827 = vmatprep.subr.bf16.mxu0 0
      %828 = vmatpush1.bf16.xpose.msra.mxu0 %v811
      %829 = vmatprep.subr.bf16.mxu0 0
      %830 = vmatpush2.bf16.xpose.msra.mxu0 0
      %831 = vmatprep.subr.bf16.mxu0 0
      %832 = vmatpush2.bf16.xpose.msra.mxu0 0
      %833 = vmatprep.subr.bf16.mxu0 0
      %834 = vmatpush2.bf16.xpose.msra.mxu0 0
      %835 = vmatprep.subr.bf16.mxu0 0
      %836 = vmatpush2.bf16.xpose.msra.mxu0 0
      %837 = vmatprep.subr.bf16.mxu0 0
      %838 = vmatpush2.bf16.xpose.msra.mxu0 0
      %839 = vmatprep.subr.bf16.mxu0 0
      %840 = vmatpush2.bf16.xpose.msra.mxu0 0
      %841 = vmatprep.subr.bf16.mxu0 0
      %842 = vmatpush2.bf16.xpose.msra.mxu0 0
      %843 = vmatprep.subr.bf16.mxu0 0
      %844 = vmatpush2.bf16.xpose.msra.mxu0 0
      %845 = vmatprep.mubr.bf16.mxu0 0
      %846 = vmatmul.mubr.bf16.gmra.mxu0 %v808
      %v847 = vpop.f32.mrf.mxu0
      %v848 = vadd.f32 0.0, %v847
      %v849 = vpop.f32.mrf.mxu0
      %v850 = vpop.f32.mrf.mxu0
      %v851 = vadd.f32 0.0, %v850
      %v852 = vpop.f32.mrf.mxu0
      %853 = vdwg.mxu0
      %v854 = vsel %vm434, %v848, -inf
      %855 = vmax.xlane.f32.xlu0 %v854
      %v856 = vpop.xlane.xlu0 %855
      %v857 = vsel %vm434, %v851, -inf
      %858 = vmax.xlane.f32.xlu0 %v857
      %v859 = vpop.xlane.xlu0 %858
      %v860 = vsub.f32 %v848, %v856
      %v861 = vsub.f32 %v851, %v859
      %v862 = vmul.f32 %v860, 1.442695
      %v863 = vpow.pop %v862
      %v864 = vmul.f32 %v861, 1.442695
      %v865 = vpow.pop %v864
      %v866 = vsel %vm434, %v863, 0.0
      %867 = vadd.xlane.f32.xlu0 %v866
      %v868 = vpop.xlane.xlu0 %867
      %v869 = vsel %vm434, %v865, 0.0
      %870 = vadd.xlane.f32.xlu0 %v869
      %v871 = vpop.xlane.xlu0 %870
      %v872 = vrcp.pop %v868
      %v873 = vrcp.pop %v871
      %v874 = vmul.f32 %v863, %v872
      %v875 = vmul.f32 %v865, %v873
      %v876 = vpack.c.bf16 %v875, %v874
      %877 = vrot.lane.b32.xlu0 %v433, 72
      %v878 = vpop.permute.xlu0 %877
      %v880 = vsel %vm434, %v876, 0
      %v883 = vsel %vm511, %v878, 0
      %885 = vmatprep.subr.bf16.mxu0 0
      %886 = vmatpush1.bf16.msra.mxu0 0
      %887 = vmatprep.subr.bf16.mxu0 0
      %888 = vmatpush1.bf16.msra.mxu0 0
      %889 = vmatprep.subr.bf16.mxu0 0
      %890 = vmatpush1.bf16.msra.mxu0 0
      %891 = vmatprep.subr.bf16.mxu0 0
      %892 = vmatpush1.bf16.msra.mxu0 0
      %893 = vmatprep.subr.bf16.mxu0 0
      %894 = vmatpush1.bf16.msra.mxu0 0
      %895 = vmatprep.subr.bf16.mxu0 0
      %896 = vmatpush1.bf16.msra.mxu0 0
      %897 = vmatprep.subr.bf16.mxu0 0
      %898 = vmatpush1.bf16.msra.mxu0 0
      %899 = vmatprep.subr.bf16.mxu0 0
      %900 = vmatpush1.bf16.msra.mxu0 %v883
      %901 = vmatprep.subr.bf16.mxu0 0
      %902 = vmatpush2.bf16.msra.mxu0 0
      %903 = vmatprep.subr.bf16.mxu0 0
      %904 = vmatpush2.bf16.msra.mxu0 0
      %905 = vmatprep.subr.bf16.mxu0 0
      %906 = vmatpush2.bf16.msra.mxu0 0
      %907 = vmatprep.subr.bf16.mxu0 0
      %908 = vmatpush2.bf16.msra.mxu0 0
      %909 = vmatprep.subr.bf16.mxu0 0
      %910 = vmatpush2.bf16.msra.mxu0 0
      %911 = vmatprep.subr.bf16.mxu0 0
      %912 = vmatpush2.bf16.msra.mxu0 0
      %913 = vmatprep.subr.bf16.mxu0 0
      %914 = vmatpush2.bf16.msra.mxu0 0
      %915 = vmatprep.subr.bf16.mxu0 0
      %916 = vmatpush2.bf16.msra.mxu0 0
      %917 = vmatprep.mubr.bf16.mxu0 0
      %918 = vmatmul.mubr.bf16.gmra.mxu0 %v880
      %v919 = vpop.f32.mrf.mxu0
      %v920 = vadd.f32 0.0, %v919
      %v921 = vpop.f32.mrf.mxu0
      %v922 = vpop.f32.mrf.mxu0
      %v923 = vadd.f32 0.0, %v922
      %v924 = vpop.f32.mrf.mxu0
      %925 = vdwg.mxu0
      %928 = vrot.lane.b32.xlu0 %v674, 8
      %v929 = vpop.permute.xlu0 %928
      %930 = vrot.lane.b32.xlu0 %v677, 8
      %v931 = vpop.permute.xlu0 %930
      %936 = vrot.lane.b32.xlu0 %v797, 16
      %v937 = vpop.permute.xlu0 %936
      %938 = vrot.lane.b32.xlu0 %v800, 16
      %v939 = vpop.permute.xlu0 %938
      %944 = vrot.lane.b32.xlu0 %v920, 24
      %v945 = vpop.permute.xlu0 %944
      %946 = vrot.lane.b32.xlu0 %v923, 24
      %v947 = vpop.permute.xlu0 %946
      %v950 = vsel %vm434, %v550, %v929
      %v951 = vsel %vm434, %v553, %v931
      %vm952 = vcmask 130048
      %v953 = vsel %vm952, %v950, %v937
      %v954 = vsel %vm952, %v951, %v939
      %vm955 = vcmask 195584
      %v956 = vsel %vm955, %v953, %v945
      %v957 = vsel %vm955, %v954, %v947
      %v958 = vpack.c.bf16 %v957, %v956
      %v959 = vld [vmem:[%s7] sm:$0xf]
      %v960 = vld [vmem:[%s7 + $0x4] sm:$0xf]
      %v961 = vld [vmem:[%s7 + $0x8] sm:$0xf]
      %v962 = vld [vmem:[%s7 + $0xc] sm:$0xf]
      %v963 = vld [vmem:[%s8] sm:$0x1]
      %v965 = vlaneseq
      %v966 = vshrl.u32 %v965, 7
      %v967 = vsub.s32 0, %v966
      %v968 = vrot.slane %v963, %v967
      %v974 = vunpack.c.l.b16 %v959
      %v975 = vunpack.c.l.b16 %v960
      %v976 = vunpack.c.l.b16 %v961
      %v977 = vunpack.c.l.b16 %v962
      %v978 = vpack.c.b16 %v975, %v974
      %v979 = vpack.c.b16 %v977, %v976
      %v983 = vsel %vm334, %v958, 0
      %985 = vmatprep.subr.bf16.mxu0 0
      %986 = vmatpush1.bf16.msra.mxu0 0
      %987 = vmatprep.subr.bf16.mxu0 0
      %988 = vmatpush1.bf16.msra.mxu0 0
      %989 = vmatprep.subr.bf16.mxu0 0
      %990 = vmatpush1.bf16.msra.mxu0 0
      %991 = vmatprep.subr.bf16.mxu0 0
      %992 = vmatpush1.bf16.msra.mxu0 0
      %993 = vmatprep.subr.bf16.mxu0 0
      %994 = vmatpush1.bf16.msra.mxu0 0
      %995 = vmatprep.subr.bf16.mxu0 0
      %996 = vmatpush1.bf16.msra.mxu0 0
      %997 = vmatprep.subr.bf16.mxu0 0
      %998 = vmatpush1.bf16.msra.mxu0 %v979
      %999 = vmatprep.subr.bf16.mxu0 0
      %1000 = vmatpush1.bf16.msra.mxu0 %v978
      %1001 = vmatprep.subr.bf16.mxu0 0
      %1002 = vmatpush2.bf16.msra.mxu0 0
      %1003 = vmatprep.subr.bf16.mxu0 0
      %1004 = vmatpush2.bf16.msra.mxu0 0
      %1005 = vmatprep.subr.bf16.mxu0 0
      %1006 = vmatpush2.bf16.msra.mxu0 0
      %1007 = vmatprep.subr.bf16.mxu0 0
      %1008 = vmatpush2.bf16.msra.mxu0 0
      %1009 = vmatprep.subr.bf16.mxu0 0
      %1010 = vmatpush2.bf16.msra.mxu0 0
      %1011 = vmatprep.subr.bf16.mxu0 0
      %1012 = vmatpush2.bf16.msra.mxu0 0
      %1013 = vmatprep.subr.bf16.mxu0 0
      %1014 = vmatpush2.bf16.msra.mxu0 0
      %1015 = vmatprep.subr.bf16.mxu0 0
      %1016 = vmatpush2.bf16.msra.mxu0 0
      %1017 = vmatprep.mubr.bf16.mxu0 0
      %1018 = vmatmul.mubr.bf16.gmra.mxu0 %v983
      %v1019 = vpop.f32.mrf.mxu0
      %v1020 = vadd.f32 %v968, %v1019
      %v1021 = vpop.f32.mrf.mxu0
      %v1022 = vpop.f32.mrf.mxu0
      %v1023 = vadd.f32 %v968, %v1022
      %v1024 = vpop.f32.mrf.mxu0
      %1025 = vdwg.mxu0
      %v1026 = vld [vmem:[%s2] sm:$0xff]
      %v1027 = vld [vmem:[%s2 + $0x8] sm:$0xff]
      %v1028 = vadd.f32 %v1026, %v1020
      %v1029 = vadd.f32 %v1027, %v1023
      %1030 = vst.msk [vmem:[%s329] sm:$0xff] %vm334, %v1028
      %1031 = vst.msk [vmem:[%s329 + $0x8] sm:$0xff] %vm334, %v1029
      %p1032 = scmp.lt.s32.totalorder %s20, 1
      %s1033 = scalar_select %p1032, %s20, 1
      %s1034 = smul.addr %s1033, 2
      %s1035 = smul.addr %s1034, 8
      %s1036 = scalar_lea.vmem %s9, %s1035
      // Predicated region
      $region57: #{sas_perceiver_io_forward.7} parent=55 // pred_check
        %p1037 = pneg %p232
      $region58: #{sas_perceiver_io_forward.7} parent=55 // pred_check_branch
        %1039 = sbr.rel (%p1037) target = $region60
      $region59: #{sas_perceiver_io_forward.7} parent=55 // pred_region
        _
      $region60: #{sas_perceiver_io_forward.7} parent=55 // pred_fallthru
        _
    $region56: #{sas_perceiver_io_forward.7} parent=5 // pred_fallthru
      _
    %p1040 = scmp.le.s32.totalorder 2, %s15
    // Predicated region
    $region61: #{sas_perceiver_io_forward.7} parent=5 // pred_check
      %p1041 = pneg %p1040
    $region62: #{sas_perceiver_io_forward.7} parent=5 // pred_check_branch
      %1043 = sbr.rel (%p1041) target = $region64
    $region63: #{sas_perceiver_io_forward.7} parent=5 // pred_region
      %s1044 = ssub.s32 %s15, 2
      // Predicated region
      $region65: #{sas_perceiver_io_forward.7} parent=63 // pred_check
        %p1045 = pneg %p238
      $region66: #{sas_perceiver_io_forward.7} parent=63 // pred_check_branch
        %1047 = sbr.rel (%p1045) target = $region68
      $region67: #{sas_perceiver_io_forward.7} parent=63 // pred_region
        %p1048 = scmp.lt.s32.totalorder %s21, 1
        %s1049 = scalar_select %p1048, %s21, 1
        %s1050 = smul.addr %s1049, 2
        %s1051 = smul.addr %s1050, 8
        %s1052 = scalar_lea.vmem %s9, %s1051
      $region68: #{sas_perceiver_io_forward.7} parent=63 // pred_fallthru
        _
    $region64: #{sas_perceiver_io_forward.7} parent=5 // pred_fallthru
      _
  $region6: #{sas_perceiver_io_forward.7} parent=0 // loop_footer
    %s19 = sadd.s32 1, %s15
  $region7: #{sas_perceiver_io_forward.7} parent=0 // loop_footer_branch
    %14 = sbr.rel target = $region3
  $region8: #{sas_perceiver_io_forward.7} parent=0 // loop_exit
    _

// kernel: sas_perceiver_io_forward.13
$region0: #{sas_perceiver_io_forward.13}
  #allocation0 [shape = 'u32[]', space=smem, size = 0x4, offset = 0x4, fixed_abs, tag = 'smem constant byte address 0x4 - core index']
  #allocation1 [shape = 'u32[144,128]{1,0:T(1,128)}', space=vmem, size = 0x12000, scoped, tag = 'internal scratch']
  %s0 = inlined_call_operand.vmem [shape: f32[2,16,32], index: 0, kind: input, shape index: {}]
  %s1 = inlined_call_operand.vmem [shape: f32[1,32], index: 1, kind: input, shape index: {}]
  %s2 = inlined_call_operand.vmem [shape: f32[1,32], index: 2, kind: input, shape index: {}]
  %s3 = inlined_call_operand.vmem [shape: f32[1,32], index: 3, kind: input, shape index: {}]
  %s4 = inlined_call_operand.vmem [shape: bf16[32,64], index: 4, kind: input, shape index: {}]
  %s5 = inlined_call_operand.vmem [shape: f32[1,64], index: 5, kind: input, shape index: {}]
  %s6 = inlined_call_operand.vmem [shape: bf16[32,32], index: 6, kind: input, shape index: {}]
  %s7 = inlined_call_operand.vmem [shape: f32[1,32], index: 7, kind: input, shape index: {}]
  %s8 = inlined_call_operand.vmem [shape: bf16[32,5], index: 8, kind: input, shape index: {}]
  %s9 = inlined_call_operand.vmem [shape: f32[1,5], index: 9, kind: input, shape index: {}]
  %s10 = inlined_call_operand.vmem [shape: f32[1,32], index: 10, kind: input, shape index: {}]
  %s11 = inlined_call_operand.vmem [shape: f32[1,32], index: 11, kind: input, shape index: {}]
  %s12 = inlined_call_operand.vmem [shape: f32[1,32], index: 12, kind: input, shape index: {}]
  %s13 = inlined_call_operand.vmem [shape: bf16[32,64], index: 13, kind: input, shape index: {}]
  %s14 = inlined_call_operand.vmem [shape: f32[1,64], index: 14, kind: input, shape index: {}]
  %s15 = inlined_call_operand.vmem [shape: bf16[32,32], index: 15, kind: input, shape index: {}]
  %s16 = inlined_call_operand.vmem [shape: f32[1,32], index: 16, kind: input, shape index: {}]
  %s17 = inlined_call_operand.vmem [shape: bf16[32,6], index: 17, kind: input, shape index: {}]
  %s18 = inlined_call_operand.vmem [shape: f32[1,6], index: 18, kind: input, shape index: {}]
  %s19 = inlined_call_operand.hbm [shape: f32[2,1,5], index: 19, kind: output, shape index: {0}]
  %s20 = inlined_call_operand.hbm [shape: f32[2,1,6], index: 20, kind: output, shape index: {1}]
  %21 = xla_tuple %s19, %s20
  %s22 = sld [smem:[#allocation0]]
  $region117: #{sas_perceiver_io_forward.13} parent=0
    _
  %s24 = ssub.s32 1, %s22
  %s25 = scalar_select 0, %s24, %s22
  $region1: #{sas_perceiver_io_forward.13} parent=0
    #allocation2 [shape = 'u8[1024]{0}', space=vmem, size = 0x400, scoped, tag = 'output window, operand 0']
    #allocation3 [shape = 's32[2]{0}', space=sflag, size = 0x8, scoped, tag = 'scoped memory for sas_perceiver_io_forward.13']
    #allocation4 [shape = 'u8[1024]{0}', space=vmem, size = 0x400, scoped, tag = 'output window, operand 1']
    #allocation5 [shape = 's32[2]{0}', space=sflag, size = 0x8, scoped, tag = 'scoped memory for sas_perceiver_io_forward.13']
    %26 = vsyncpa [#allocation3], 0
    %s27 = scalar_lea.sflag [#allocation3], 1
    %28 = vsyncpa %s27, 0
    %29 = vsyncpa [#allocation5], 0
    %s30 = scalar_lea.sflag [#allocation5], 1
    %31 = vsyncpa %s30, 0
    loop: start=0, step=1, limit=4
    $region2: #{sas_perceiver_io_forward.13} parent=1 // loop_pre_header
      _
    $region3: #{sas_perceiver_io_forward.13} parent=1 // loop_header
      %s33 = sphi 0, %s37
      %p34 = scmp.ge.s32.totalorder %s33, 4
      %s43 = sphi 0, %s45
      %s46 = sphi 0, %s43
      %s47 = sphi 0, %s46
      %s63 = sphi 0, %s47
      %s67 = sphi 0, %s67
      %s69 = sphi 0, %s67
      %s70 = sphi 0, %s69
      %s84 = sphi 0, %s70
      %s88 = sphi 0, %s88
      %s90 = sphi 0, %s88
      %s91 = sphi 0, %s90
      %s105 = sphi 0, %s91
      %s109 = sphi 0, %s109
      %s111 = sphi 0, %s109
      %s112 = sphi 0, %s111
      %s126 = sphi 0, %s112
      %s130 = sphi 0, %s130
      %s132 = sphi 0, %s130
      %s133 = sphi 0, %s132
      %s147 = sphi 0, %s133
      %s151 = sphi 0, %s151
      %s153 = sphi 0, %s151
      %s154 = sphi 0, %s153
      %s168 = sphi 0, %s154
      %s172 = sphi 0, %s172
      %s174 = sphi 0, %s172
      %s175 = sphi 0, %s174
      %s189 = sphi 0, %s175
      %s193 = sphi 0, %s193
      %s195 = sphi 0, %s193
      %s196 = sphi 0, %s195
      %s210 = sphi 0, %s196
      %s214 = sphi 0, %s214
      %s216 = sphi 0, %s214
      %s217 = sphi 0, %s216
      %s231 = sphi 0, %s217
      %s235 = sphi 0, %s235
      %s237 = sphi 0, %s235
      %s238 = sphi 0, %s237
      %s252 = sphi 0, %s238
      %s256 = sphi 0, %s256
      %s258 = sphi 0, %s256
      %s259 = sphi 0, %s258
      %s273 = sphi 0, %s259
      %s277 = sphi 0, %s277
      %s279 = sphi 0, %s277
      %s280 = sphi 0, %s279
      %s294 = sphi 0, %s280
      %s298 = sphi 0, %s298
      %s300 = sphi 0, %s298
      %s301 = sphi 0, %s300
      %s315 = sphi 0, %s301
      %s319 = sphi 0, %s319
      %s321 = sphi 0, %s319
      %s322 = sphi 0, %s321
      %s336 = sphi 0, %s322
      %s340 = sphi 0, %s340
      %s342 = sphi 0, %s340
      %s343 = sphi 0, %s342
      %s357 = sphi 0, %s343
      %s361 = sphi 0, %s361
      %s363 = sphi 0, %s361
      %s364 = sphi 0, %s363
      %s378 = sphi 0, %s364
      %s382 = sphi 0, %s382
      %s384 = sphi 0, %s382
      %s385 = sphi 0, %s384
      %s399 = sphi 0, %s385
      %s403 = sphi 0, %s403
      %s405 = sphi 0, %s403
      %s406 = sphi 0, %s405
      %s420 = sphi 0, %s406
      %s424 = sphi 0, %s424
      %s426 = sphi 0, %s424
      %s427 = sphi 0, %s426
      %s441 = sphi 0, %s427
      %s447 = sphi 0, %s449
      %s450 = sphi 0, %s447
      %s451 = sphi 0, %s450
      %s467 = sphi 0, %s451
      %s473 = sphi 0, %s475
      %s476 = sphi 0, %s473
      %s477 = sphi 0, %s476
      %s493 = sphi 0, %s477
    $region4: #{sas_perceiver_io_forward.13} parent=1 // loop_header_branch
      %36 = sbr.rel (%p34) target = $region8
    $region5: #{sas_perceiver_io_forward.13} parent=1 // loop_body
      %s38 = ssub.s32 %s33, 1
      %s39 = ssub.s32 %s33, 2
      %s40 = sadd.s32 %s33, 1
      %s41 = ssub.s32 %s33, %s40
      %p42 = scmp.eq.s32.totalorder %s41, 0
      %s44 = sadd.s32 %s43, 1
      %s45 = scalar_select %p42, %s43, %s44
      %p48 = pneg %p42
      %p49 = scmp.eq.s32.totalorder %s33, 1
      %p50 = por %p48, %p49
      %p51 = scmp.ne.s32.totalorder %s43, %s46
      %p52 = scmp.eq.s32.totalorder %s33, 0
      %p53 = por %p51, %p52
      %p54 = scmp.ne.s32.totalorder %s43, %s46
      %p55 = scmp.eq.s32.totalorder %s38, 1
      %p56 = por %p54, %p55
      %p57 = scmp.ne.s32.totalorder %s46, %s47
      %p58 = scmp.eq.s32.totalorder %s38, 0
      %p59 = por %p57, %p58
      %p60 = scmp.ne.s32.totalorder %s46, %s47
      %p61 = scmp.eq.s32.totalorder %s39, 1
      %p62 = por %p60, %p61
      %p64 = scmp.ne.s32.totalorder %s47, %s63
      %p65 = scmp.eq.s32.totalorder %s39, 0
      %p66 = por %p64, %p65
      %s68 = sadd.s32 %s67, 1
      %p71 = scmp.eq.s32.totalorder %s33, 1
      %p72 = scmp.ne.s32.totalorder %s67, %s69
      %p73 = scmp.eq.s32.totalorder %s33, 0
      %p74 = por %p72, %p73
      %p75 = scmp.ne.s32.totalorder %s67, %s69
      %p76 = scmp.eq.s32.totalorder %s38, 1
      %p77 = por %p75, %p76
      %p78 = scmp.ne.s32.totalorder %s69, %s70
      %p79 = scmp.eq.s32.totalorder %s38, 0
      %p80 = por %p78, %p79
      %p81 = scmp.ne.s32.totalorder %s69, %s70
      %p82 = scmp.eq.s32.totalorder %s39, 1
      %p83 = por %p81, %p82
      %p85 = scmp.ne.s32.totalorder %s70, %s84
      %p86 = scmp.eq.s32.totalorder %s39, 0
      %p87 = por %p85, %p86
      %s89 = sadd.s32 %s88, 1
      %p92 = scmp.eq.s32.totalorder %s33, 1
      %p93 = scmp.ne.s32.totalorder %s88, %s90
      %p94 = scmp.eq.s32.totalorder %s33, 0
      %p95 = por %p93, %p94
      %p96 = scmp.ne.s32.totalorder %s88, %s90
      %p97 = scmp.eq.s32.totalorder %s38, 1
      %p98 = por %p96, %p97
      %p99 = scmp.ne.s32.totalorder %s90, %s91
      %p100 = scmp.eq.s32.totalorder %s38, 0
      %p101 = por %p99, %p100
      %p102 = scmp.ne.s32.totalorder %s90, %s91
      %p103 = scmp.eq.s32.totalorder %s39, 1
      %p104 = por %p102, %p103
      %p106 = scmp.ne.s32.totalorder %s91, %s105
      %p107 = scmp.eq.s32.totalorder %s39, 0
      %p108 = por %p106, %p107
      %s110 = sadd.s32 %s109, 1
      %p113 = scmp.eq.s32.totalorder %s33, 1
      %p114 = scmp.ne.s32.totalorder %s109, %s111
      %p115 = scmp.eq.s32.totalorder %s33, 0
      %p116 = por %p114, %p115
      %p117 = scmp.ne.s32.totalorder %s109, %s111
      %p118 = scmp.eq.s32.totalorder %s38, 1
      %p119 = por %p117, %p118
      %p120 = scmp.ne.s32.totalorder %s111, %s112
      %p121 = scmp.eq.s32.totalorder %s38, 0
      %p122 = por %p120, %p121
      %p123 = scmp.ne.s32.totalorder %s111, %s112
      %p124 = scmp.eq.s32.totalorder %s39, 1
      %p125 = por %p123, %p124
      %p127 = scmp.ne.s32.totalorder %s112, %s126
      %p128 = scmp.eq.s32.totalorder %s39, 0
      %p129 = por %p127, %p128
      %s131 = sadd.s32 %s130, 1
      %p134 = scmp.eq.s32.totalorder %s33, 1
      %p135 = scmp.ne.s32.totalorder %s130, %s132
      %p136 = scmp.eq.s32.totalorder %s33, 0
      %p137 = por %p135, %p136
      %p138 = scmp.ne.s32.totalorder %s130, %s132
      %p139 = scmp.eq.s32.totalorder %s38, 1
      %p140 = por %p138, %p139
      %p141 = scmp.ne.s32.totalorder %s132, %s133
      %p142 = scmp.eq.s32.totalorder %s38, 0
      %p143 = por %p141, %p142
      %p144 = scmp.ne.s32.totalorder %s132, %s133
      %p145 = scmp.eq.s32.totalorder %s39, 1
      %p146 = por %p144, %p145
      %p148 = scmp.ne.s32.totalorder %s133, %s147
      %p149 = scmp.eq.s32.totalorder %s39, 0
      %p150 = por %p148, %p149
      %s152 = sadd.s32 %s151, 1
      %p155 = scmp.eq.s32.totalorder %s33, 1
      %p156 = scmp.ne.s32.totalorder %s151, %s153
      %p157 = scmp.eq.s32.totalorder %s33, 0
      %p158 = por %p156, %p157
      %p159 = scmp.ne.s32.totalorder %s151, %s153
      %p160 = scmp.eq.s32.totalorder %s38, 1
      %p161 = por %p159, %p160
      %p162 = scmp.ne.s32.totalorder %s153, %s154
      %p163 = scmp.eq.s32.totalorder %s38, 0
      %p164 = por %p162, %p163
      %p165 = scmp.ne.s32.totalorder %s153, %s154
      %p166 = scmp.eq.s32.totalorder %s39, 1
      %p167 = por %p165, %p166
      %p169 = scmp.ne.s32.totalorder %s154, %s168
      %p170 = scmp.eq.s32.totalorder %s39, 0
      %p171 = por %p169, %p170
      %s173 = sadd.s32 %s172, 1
      %p176 = scmp.eq.s32.totalorder %s33, 1
      %p177 = scmp.ne.s32.totalorder %s172, %s174
      %p178 = scmp.eq.s32.totalorder %s33, 0
      %p179 = por %p177, %p178
      %p180 = scmp.ne.s32.totalorder %s172, %s174
      %p181 = scmp.eq.s32.totalorder %s38, 1
      %p182 = por %p180, %p181
      %p183 = scmp.ne.s32.totalorder %s174, %s175
      %p184 = scmp.eq.s32.totalorder %s38, 0
      %p185 = por %p183, %p184
      %p186 = scmp.ne.s32.totalorder %s174, %s175
      %p187 = scmp.eq.s32.totalorder %s39, 1
      %p188 = por %p186, %p187
      %p190 = scmp.ne.s32.totalorder %s175, %s189
      %p191 = scmp.eq.s32.totalorder %s39, 0
      %p192 = por %p190, %p191
      %s194 = sadd.s32 %s193, 1
      %p197 = scmp.eq.s32.totalorder %s33, 1
      %p198 = scmp.ne.s32.totalorder %s193, %s195
      %p199 = scmp.eq.s32.totalorder %s33, 0
      %p200 = por %p198, %p199
      %p201 = scmp.ne.s32.totalorder %s193, %s195
      %p202 = scmp.eq.s32.totalorder %s38, 1
      %p203 = por %p201, %p202
      %p204 = scmp.ne.s32.totalorder %s195, %s196
      %p205 = scmp.eq.s32.totalorder %s38, 0
      %p206 = por %p204, %p205
      %p207 = scmp.ne.s32.totalorder %s195, %s196
      %p208 = scmp.eq.s32.totalorder %s39, 1
      %p209 = por %p207, %p208
      %p211 = scmp.ne.s32.totalorder %s196, %s210
      %p212 = scmp.eq.s32.totalorder %s39, 0
      %p213 = por %p211, %p212
      %s215 = sadd.s32 %s214, 1
      %p218 = scmp.eq.s32.totalorder %s33, 1
      %p219 = scmp.ne.s32.totalorder %s214, %s216
      %p220 = scmp.eq.s32.totalorder %s33, 0
      %p221 = por %p219, %p220
      %p222 = scmp.ne.s32.totalorder %s214, %s216
      %p223 = scmp.eq.s32.totalorder %s38, 1
      %p224 = por %p222, %p223
      %p225 = scmp.ne.s32.totalorder %s216, %s217
      %p226 = scmp.eq.s32.totalorder %s38, 0
      %p227 = por %p225, %p226
      %p228 = scmp.ne.s32.totalorder %s216, %s217
      %p229 = scmp.eq.s32.totalorder %s39, 1
      %p230 = por %p228, %p229
      %p232 = scmp.ne.s32.totalorder %s217, %s231
      %p233 = scmp.eq.s32.totalorder %s39, 0
      %p234 = por %p232, %p233
      %s236 = sadd.s32 %s235, 1
      %p239 = scmp.eq.s32.totalorder %s33, 1
      %p240 = scmp.ne.s32.totalorder %s235, %s237
      %p241 = scmp.eq.s32.totalorder %s33, 0
      %p242 = por %p240, %p241
      %p243 = scmp.ne.s32.totalorder %s235, %s237
      %p244 = scmp.eq.s32.totalorder %s38, 1
      %p245 = por %p243, %p244
      %p246 = scmp.ne.s32.totalorder %s237, %s238
      %p247 = scmp.eq.s32.totalorder %s38, 0
      %p248 = por %p246, %p247
      %p249 = scmp.ne.s32.totalorder %s237, %s238
      %p250 = scmp.eq.s32.totalorder %s39, 1
      %p251 = por %p249, %p250
      %p253 = scmp.ne.s32.totalorder %s238, %s252
      %p254 = scmp.eq.s32.totalorder %s39, 0
      %p255 = por %p253, %p254
      %s257 = sadd.s32 %s256, 1
      %p260 = scmp.eq.s32.totalorder %s33, 1
      %p261 = scmp.ne.s32.totalorder %s256, %s258
      %p262 = scmp.eq.s32.totalorder %s33, 0
      %p263 = por %p261, %p262
      %p264 = scmp.ne.s32.totalorder %s256, %s258
      %p265 = scmp.eq.s32.totalorder %s38, 1
      %p266 = por %p264, %p265
      %p267 = scmp.ne.s32.totalorder %s258, %s259
      %p268 = scmp.eq.s32.totalorder %s38, 0
      %p269 = por %p267, %p268
      %p270 = scmp.ne.s32.totalorder %s258, %s259
      %p271 = scmp.eq.s32.totalorder %s39, 1
      %p272 = por %p270, %p271
      %p274 = scmp.ne.s32.totalorder %s259, %s273
      %p275 = scmp.eq.s32.totalorder %s39, 0
      %p276 = por %p274, %p275
      %s278 = sadd.s32 %s277, 1
      %p281 = scmp.eq.s32.totalorder %s33, 1
      %p282 = scmp.ne.s32.totalorder %s277, %s279
      %p283 = scmp.eq.s32.totalorder %s33, 0
      %p284 = por %p282, %p283
      %p285 = scmp.ne.s32.totalorder %s277, %s279
      %p286 = scmp.eq.s32.totalorder %s38, 1
      %p287 = por %p285, %p286
      %p288 = scmp.ne.s32.totalorder %s279, %s280
      %p289 = scmp.eq.s32.totalorder %s38, 0
      %p290 = por %p288, %p289
      %p291 = scmp.ne.s32.totalorder %s279, %s280
      %p292 = scmp.eq.s32.totalorder %s39, 1
      %p293 = por %p291, %p292
      %p295 = scmp.ne.s32.totalorder %s280, %s294
      %p296 = scmp.eq.s32.totalorder %s39, 0
      %p297 = por %p295, %p296
      %s299 = sadd.s32 %s298, 1
      %p302 = scmp.eq.s32.totalorder %s33, 1
      %p303 = scmp.ne.s32.totalorder %s298, %s300
      %p304 = scmp.eq.s32.totalorder %s33, 0
      %p305 = por %p303, %p304
      %p306 = scmp.ne.s32.totalorder %s298, %s300
      %p307 = scmp.eq.s32.totalorder %s38, 1
      %p308 = por %p306, %p307
      %p309 = scmp.ne.s32.totalorder %s300, %s301
      %p310 = scmp.eq.s32.totalorder %s38, 0
      %p311 = por %p309, %p310
      %p312 = scmp.ne.s32.totalorder %s300, %s301
      %p313 = scmp.eq.s32.totalorder %s39, 1
      %p314 = por %p312, %p313
      %p316 = scmp.ne.s32.totalorder %s301, %s315
      %p317 = scmp.eq.s32.totalorder %s39, 0
      %p318 = por %p316, %p317
      %s320 = sadd.s32 %s319, 1
      %p323 = scmp.eq.s32.totalorder %s33, 1
      %p324 = scmp.ne.s32.totalorder %s319, %s321
      %p325 = scmp.eq.s32.totalorder %s33, 0
      %p326 = por %p324, %p325
      %p327 = scmp.ne.s32.totalorder %s319, %s321
      %p328 = scmp.eq.s32.totalorder %s38, 1
      %p329 = por %p327, %p328
      %p330 = scmp.ne.s32.totalorder %s321, %s322
      %p331 = scmp.eq.s32.totalorder %s38, 0
      %p332 = por %p330, %p331
      %p333 = scmp.ne.s32.totalorder %s321, %s322
      %p334 = scmp.eq.s32.totalorder %s39, 1
      %p335 = por %p333, %p334
      %p337 = scmp.ne.s32.totalorder %s322, %s336
      %p338 = scmp.eq.s32.totalorder %s39, 0
      %p339 = por %p337, %p338
      %s341 = sadd.s32 %s340, 1
      %p344 = scmp.eq.s32.totalorder %s33, 1
      %p345 = scmp.ne.s32.totalorder %s340, %s342
      %p346 = scmp.eq.s32.totalorder %s33, 0
      %p347 = por %p345, %p346
      %p348 = scmp.ne.s32.totalorder %s340, %s342
      %p349 = scmp.eq.s32.totalorder %s38, 1
      %p350 = por %p348, %p349
      %p351 = scmp.ne.s32.totalorder %s342, %s343
      %p352 = scmp.eq.s32.totalorder %s38, 0
      %p353 = por %p351, %p352
      %p354 = scmp.ne.s32.totalorder %s342, %s343
      %p355 = scmp.eq.s32.totalorder %s39, 1
      %p356 = por %p354, %p355
      %p358 = scmp.ne.s32.totalorder %s343, %s357
      %p359 = scmp.eq.s32.totalorder %s39, 0
      %p360 = por %p358, %p359
      %s362 = sadd.s32 %s361, 1
      %p365 = scmp.eq.s32.totalorder %s33, 1
      %p366 = scmp.ne.s32.totalorder %s361, %s363
      %p367 = scmp.eq.s32.totalorder %s33, 0
      %p368 = por %p366, %p367
      %p369 = scmp.ne.s32.totalorder %s361, %s363
      %p370 = scmp.eq.s32.totalorder %s38, 1
      %p371 = por %p369, %p370
      %p372 = scmp.ne.s32.totalorder %s363, %s364
      %p373 = scmp.eq.s32.totalorder %s38, 0
      %p374 = por %p372, %p373
      %p375 = scmp.ne.s32.totalorder %s363, %s364
      %p376 = scmp.eq.s32.totalorder %s39, 1
      %p377 = por %p375, %p376
      %p379 = scmp.ne.s32.totalorder %s364, %s378
      %p380 = scmp.eq.s32.totalorder %s39, 0
      %p381 = por %p379, %p380
      %s383 = sadd.s32 %s382, 1
      %p386 = scmp.eq.s32.totalorder %s33, 1
      %p387 = scmp.ne.s32.totalorder %s382, %s384
      %p388 = scmp.eq.s32.totalorder %s33, 0
      %p389 = por %p387, %p388
      %p390 = scmp.ne.s32.totalorder %s382, %s384
      %p391 = scmp.eq.s32.totalorder %s38, 1
      %p392 = por %p390, %p391
      %p393 = scmp.ne.s32.totalorder %s384, %s385
      %p394 = scmp.eq.s32.totalorder %s38, 0
      %p395 = por %p393, %p394
      %p396 = scmp.ne.s32.totalorder %s384, %s385
      %p397 = scmp.eq.s32.totalorder %s39, 1
      %p398 = por %p396, %p397
      %p400 = scmp.ne.s32.totalorder %s385, %s399
      %p401 = scmp.eq.s32.totalorder %s39, 0
      %p402 = por %p400, %p401
      %s404 = sadd.s32 %s403, 1
      %p407 = scmp.eq.s32.totalorder %s33, 1
      %p408 = scmp.ne.s32.totalorder %s403, %s405
      %p409 = scmp.eq.s32.totalorder %s33, 0
      %p410 = por %p408, %p409
      %p411 = scmp.ne.s32.totalorder %s403, %s405
      %p412 = scmp.eq.s32.totalorder %s38, 1
      %p413 = por %p411, %p412
      %p414 = scmp.ne.s32.totalorder %s405, %s406
      %p415 = scmp.eq.s32.totalorder %s38, 0
      %p416 = por %p414, %p415
      %p417 = scmp.ne.s32.totalorder %s405, %s406
      %p418 = scmp.eq.s32.totalorder %s39, 1
      %p419 = por %p417, %p418
      %p421 = scmp.ne.s32.totalorder %s406, %s420
      %p422 = scmp.eq.s32.totalorder %s39, 0
      %p423 = por %p421, %p422
      %s425 = sadd.s32 %s424, 1
      %p428 = scmp.eq.s32.totalorder %s33, 1
      %p429 = scmp.ne.s32.totalorder %s424, %s426
      %p430 = scmp.eq.s32.totalorder %s33, 0
      %p431 = por %p429, %p430
      %p432 = scmp.ne.s32.totalorder %s424, %s426
      %p433 = scmp.eq.s32.totalorder %s38, 1
      %p434 = por %p432, %p433
      %p435 = scmp.ne.s32.totalorder %s426, %s427
      %p436 = scmp.eq.s32.totalorder %s38, 0
      %p437 = por %p435, %p436
      %p438 = scmp.ne.s32.totalorder %s426, %s427
      %p439 = scmp.eq.s32.totalorder %s39, 1
      %p440 = por %p438, %p439
      %p442 = scmp.ne.s32.totalorder %s427, %s441
      %p443 = scmp.eq.s32.totalorder %s39, 0
      %p444 = por %p442, %p443
      %s445 = ssub.s32 %s33, %s40
      %p446 = scmp.eq.s32.totalorder %s445, 0
      %s448 = sadd.s32 %s447, 1
      %s449 = scalar_select %p446, %s447, %s448
      %p452 = pneg %p446
      %p453 = scmp.eq.s32.totalorder %s33, 1
      %p454 = por %p452, %p453
      %p455 = scmp.ne.s32.totalorder %s447, %s450
      %p456 = scmp.eq.s32.totalorder %s33, 0
      %p457 = por %p455, %p456
      %p458 = scmp.ne.s32.totalorder %s447, %s450
      %p459 = scmp.eq.s32.totalorder %s38, 1
      %p460 = por %p458, %p459
      %p461 = scmp.ne.s32.totalorder %s450, %s451
      %p462 = scmp.eq.s32.totalorder %s38, 0
      %p463 = por %p461, %p462
      %p464 = scmp.ne.s32.totalorder %s450, %s451
      %p465 = scmp.eq.s32.totalorder %s39, 1
      %p466 = por %p464, %p465
      %p468 = scmp.ne.s32.totalorder %s451, %s467
      %p469 = scmp.eq.s32.totalorder %s39, 0
      %p470 = por %p468, %p469
      %s471 = ssub.s32 %s33, %s40
      %p472 = scmp.eq.s32.totalorder %s471, 0
      %s474 = sadd.s32 %s473, 1
      %s475 = scalar_select %p472, %s473, %s474
      %p478 = pneg %p472
      %p479 = scmp.eq.s32.totalorder %s33, 1
      %p480 = por %p478, %p479
      %p481 = scmp.ne.s32.totalorder %s473, %s476
      %p482 = scmp.eq.s32.totalorder %s33, 0
      %p483 = por %p481, %p482
      %p484 = scmp.ne.s32.totalorder %s473, %s476
      %p485 = scmp.eq.s32.totalorder %s38, 1
      %p486 = por %p484, %p485
      %p487 = scmp.ne.s32.totalorder %s476, %s477
      %p488 = scmp.eq.s32.totalorder %s38, 0
      %p489 = por %p487, %p488
      %p490 = scmp.ne.s32.totalorder %s476, %s477
      %p491 = scmp.eq.s32.totalorder %s39, 1
      %p492 = por %p490, %p491
      %p494 = scmp.ne.s32.totalorder %s477, %s493
      %p495 = scmp.eq.s32.totalorder %s39, 0
      %p496 = por %p494, %p495
      %p497 = scmp.le.s32.totalorder 1, %s33
      %p498 = scmp.lt.s32.totalorder %s33, 3
      %p499 = pnand %p497, %p498
      %p500 = pneg %p499
      // Predicated region
      $region9: #{sas_perceiver_io_forward.13} parent=5 // pred_check
        _
      $region10: #{sas_perceiver_io_forward.13} parent=5 // pred_check_branch
        %502 = sbr.rel (%p499) target = $region12
      $region11: #{sas_perceiver_io_forward.13} parent=5 // pred_region
        %s503 = ssub.s32 %s33, 1
        // Predicated region
        $region13: #{sas_perceiver_io_forward.13} parent=11 // pred_check
          %p504 = pneg %p80
        $region14: #{sas_perceiver_io_forward.13} parent=11 // pred_check_branch
          %506 = sbr.rel (%p504) target = $region16
        $region15: #{sas_perceiver_io_forward.13} parent=11 // pred_region
          _
        $region16: #{sas_perceiver_io_forward.13} parent=11 // pred_fallthru
          _
        // Predicated region
        $region17: #{sas_perceiver_io_forward.13} parent=11 // pred_check
          %p507 = pneg %p101
        $region18: #{sas_perceiver_io_forward.13} parent=11 // pred_check_branch
          %509 = sbr.rel (%p507) target = $region20
        $region19: #{sas_perceiver_io_forward.13} parent=11 // pred_region
          _
        $region20: #{sas_perceiver_io_forward.13} parent=11 // pred_fallthru
          _
        // Predicated region
        $region21: #{sas_perceiver_io_forward.13} parent=11 // pred_check
          %p510 = pneg %p122
        $region22: #{sas_perceiver_io_forward.13} parent=11 // pred_check_branch
          %512 = sbr.rel (%p510) target = $region24
        $region23: #{sas_perceiver_io_forward.13} parent=11 // pred_region
          _
        $region24: #{sas_perceiver_io_forward.13} parent=11 // pred_fallthru
          _
        // Predicated region
        $region25: #{sas_perceiver_io_forward.13} parent=11 // pred_check
          %p513 = pneg %p143
        $region26: #{sas_perceiver_io_forward.13} parent=11 // pred_check_branch
          %515 = sbr.rel (%p513) target = $region28
        $region27: #{sas_perceiver_io_forward.13} parent=11 // pred_region
          _
        $region28: #{sas_perceiver_io_forward.13} parent=11 // pred_fallthru
          _
        // Predicated region
        $region29: #{sas_perceiver_io_forward.13} parent=11 // pred_check
          %p516 = pneg %p164
        $region30: #{sas_perceiver_io_forward.13} parent=11 // pred_check_branch
          %518 = sbr.rel (%p516) target = $region32
        $region31: #{sas_perceiver_io_forward.13} parent=11 // pred_region
          _
        $region32: #{sas_perceiver_io_forward.13} parent=11 // pred_fallthru
          _
        // Predicated region
        $region33: #{sas_perceiver_io_forward.13} parent=11 // pred_check
          %p519 = pneg %p185
        $region34: #{sas_perceiver_io_forward.13} parent=11 // pred_check_branch
          %521 = sbr.rel (%p519) target = $region36
        $region35: #{sas_perceiver_io_forward.13} parent=11 // pred_region
          _
        $region36: #{sas_perceiver_io_forward.13} parent=11 // pred_fallthru
          _
        // Predicated region
        $region37: #{sas_perceiver_io_forward.13} parent=11 // pred_check
          %p522 = pneg %p206
        $region38: #{sas_perceiver_io_forward.13} parent=11 // pred_check_branch
          %524 = sbr.rel (%p522) target = $region40
        $region39: #{sas_perceiver_io_forward.13} parent=11 // pred_region
          _
        $region40: #{sas_perceiver_io_forward.13} parent=11 // pred_fallthru
          _
        // Predicated region
        $region41: #{sas_perceiver_io_forward.13} parent=11 // pred_check
          %p525 = pneg %p227
        $region42: #{sas_perceiver_io_forward.13} parent=11 // pred_check_branch
          %527 = sbr.rel (%p525) target = $region44
        $region43: #{sas_perceiver_io_forward.13} parent=11 // pred_region
          _
        $region44: #{sas_perceiver_io_forward.13} parent=11 // pred_fallthru
          _
        // Predicated region
        $region45: #{sas_perceiver_io_forward.13} parent=11 // pred_check
          %p528 = pneg %p248
        $region46: #{sas_perceiver_io_forward.13} parent=11 // pred_check_branch
          %530 = sbr.rel (%p528) target = $region48
        $region47: #{sas_perceiver_io_forward.13} parent=11 // pred_region
          _
        $region48: #{sas_perceiver_io_forward.13} parent=11 // pred_fallthru
          _
        // Predicated region
        $region49: #{sas_perceiver_io_forward.13} parent=11 // pred_check
          %p531 = pneg %p269
        $region50: #{sas_perceiver_io_forward.13} parent=11 // pred_check_branch
          %533 = sbr.rel (%p531) target = $region52
        $region51: #{sas_perceiver_io_forward.13} parent=11 // pred_region
          _
        $region52: #{sas_perceiver_io_forward.13} parent=11 // pred_fallthru
          _
        // Predicated region
        $region53: #{sas_perceiver_io_forward.13} parent=11 // pred_check
          %p534 = pneg %p290
        $region54: #{sas_perceiver_io_forward.13} parent=11 // pred_check_branch
          %536 = sbr.rel (%p534) target = $region56
        $region55: #{sas_perceiver_io_forward.13} parent=11 // pred_region
          _
        $region56: #{sas_perceiver_io_forward.13} parent=11 // pred_fallthru
          _
        // Predicated region
        $region57: #{sas_perceiver_io_forward.13} parent=11 // pred_check
          %p537 = pneg %p311
        $region58: #{sas_perceiver_io_forward.13} parent=11 // pred_check_branch
          %539 = sbr.rel (%p537) target = $region60
        $region59: #{sas_perceiver_io_forward.13} parent=11 // pred_region
          _
        $region60: #{sas_perceiver_io_forward.13} parent=11 // pred_fallthru
          _
        // Predicated region
        $region61: #{sas_perceiver_io_forward.13} parent=11 // pred_check
          %p540 = pneg %p332
        $region62: #{sas_perceiver_io_forward.13} parent=11 // pred_check_branch
          %542 = sbr.rel (%p540) target = $region64
        $region63: #{sas_perceiver_io_forward.13} parent=11 // pred_region
          _
        $region64: #{sas_perceiver_io_forward.13} parent=11 // pred_fallthru
          _
        // Predicated region
        $region65: #{sas_perceiver_io_forward.13} parent=11 // pred_check
          %p543 = pneg %p353
        $region66: #{sas_perceiver_io_forward.13} parent=11 // pred_check_branch
          %545 = sbr.rel (%p543) target = $region68
        $region67: #{sas_perceiver_io_forward.13} parent=11 // pred_region
          _
        $region68: #{sas_perceiver_io_forward.13} parent=11 // pred_fallthru
          _
        // Predicated region
        $region69: #{sas_perceiver_io_forward.13} parent=11 // pred_check
          %p546 = pneg %p374
        $region70: #{sas_perceiver_io_forward.13} parent=11 // pred_check_branch
          %548 = sbr.rel (%p546) target = $region72
        $region71: #{sas_perceiver_io_forward.13} parent=11 // pred_region
          _
        $region72: #{sas_perceiver_io_forward.13} parent=11 // pred_fallthru
          _
        // Predicated region
        $region73: #{sas_perceiver_io_forward.13} parent=11 // pred_check
          %p549 = pneg %p395
        $region74: #{sas_perceiver_io_forward.13} parent=11 // pred_check_branch
          %551 = sbr.rel (%p549) target = $region76
        $region75: #{sas_perceiver_io_forward.13} parent=11 // pred_region
          _
        $region76: #{sas_perceiver_io_forward.13} parent=11 // pred_fallthru
          _
        // Predicated region
        $region77: #{sas_perceiver_io_forward.13} parent=11 // pred_check
          %p552 = pneg %p416
        $region78: #{sas_perceiver_io_forward.13} parent=11 // pred_check_branch
          %554 = sbr.rel (%p552) target = $region80
        $region79: #{sas_perceiver_io_forward.13} parent=11 // pred_region
          _
        $region80: #{sas_perceiver_io_forward.13} parent=11 // pred_fallthru
          _
        // Predicated region
        $region81: #{sas_perceiver_io_forward.13} parent=11 // pred_check
          %p555 = pneg %p437
        $region82: #{sas_perceiver_io_forward.13} parent=11 // pred_check_branch
          %557 = sbr.rel (%p555) target = $region84
        $region83: #{sas_perceiver_io_forward.13} parent=11 // pred_region
          _
        $region84: #{sas_perceiver_io_forward.13} parent=11 // pred_fallthru
          _
      $region12: #{sas_perceiver_io_forward.13} parent=5 // pred_fallthru
        _
      %p558 = scmp.lt.s32.totalorder %s33, 2
      // Predicated region
      $region85: #{sas_perceiver_io_forward.13} parent=5 // pred_check
        %p559 = pneg %p558
      $region86: #{sas_perceiver_io_forward.13} parent=5 // pred_check_branch
        %561 = sbr.rel (%p559) target = $region88
      $region87: #{sas_perceiver_io_forward.13} parent=5 // pred_region
        // Predicated region
        $region89: #{sas_perceiver_io_forward.13} parent=87 // pred_check
          %p562 = pneg %p53
        $region90: #{sas_perceiver_io_forward.13} parent=87 // pred_check_branch
          %564 = sbr.rel (%p562) target = $region92
        $region91: #{sas_perceiver_io_forward.13} parent=87 // pred_region
          %p565 = scmp.lt.s32.totalorder %s33, 1
          %s566 = scalar_select %p565, %s33, 1
          %s567 = smul.addr %s566, 2
          %s568 = smul.addr %s567, 8
          %s569 = scalar_lea.vmem %s0, %s568
        $region92: #{sas_perceiver_io_forward.13} parent=87 // pred_fallthru
          _
      $region88: #{sas_perceiver_io_forward.13} parent=5 // pred_fallthru
        _
      %p570 = scmp.le.s32.totalorder 1, %s33
      %p571 = scmp.lt.s32.totalorder %s33, 3
      %p572 = pnand %p570, %p571
      %p573 = pneg %p572
      // Predicated region
      $region93: #{sas_perceiver_io_forward.13} parent=5 // pred_check
        _
      $region94: #{sas_perceiver_io_forward.13} parent=5 // pred_check_branch
        %575 = sbr.rel (%p572) target = $region96
      $region95: #{sas_perceiver_io_forward.13} parent=5 // pred_region
        %s576 = ssub.s32 %s33, 1
        %p577 = scmp.lt.s32.totalorder %s38, 1
        %s578 = scalar_select %p577, %s38, 1
        %s579 = smul.addr %s578, 2
        %s580 = smul.addr %s579, 8
        %s581 = scalar_lea.vmem %s0, %s580
        %p582 = pneg %p59
        %p583 = pneg %p56
        %p584 = pneg %p80
        %p585 = pneg %p77
        %p586 = pneg %p101
        %p587 = pneg %p98
        %p588 = pneg %p122
        %p589 = pneg %p119
        %p590 = pneg %p143
        %p591 = pneg %p140
        %p592 = pneg %p164
        %p593 = pneg %p161
        %p594 = pneg %p185
        %p595 = pneg %p182
        %p596 = pneg %p206
        %p597 = pneg %p203
        %p598 = pneg %p227
        %p599 = pneg %p224
        %p600 = pneg %p248
        %p601 = pneg %p245
        %p602 = pneg %p269
        %p603 = pneg %p266
        %p604 = pneg %p290
        %p605 = pneg %p287
        %p606 = pneg %p311
        %p607 = pneg %p308
        %p608 = pneg %p332
        %p609 = pneg %p329
        %p610 = pneg %p353
        %p611 = pneg %p350
        %p612 = pneg %p374
        %p613 = pneg %p371
        %p614 = pneg %p395
        %p615 = pneg %p392
        %p616 = pneg %p416
        %p617 = pneg %p413
        %p618 = pneg %p437
        %p619 = pneg %p434
        %p620 = pneg %p463
        %p621 = pneg %p460
        %s622 = sand.u32 %s450, 1
        %s623 = scalar_lea.sflag [#allocation3], %s622
        %s624 = sand.u32 %s450, 1
        %s625 = scalar_lea.vmem [#allocation2], %s624
        %p626 = pneg %p489
        %p627 = pneg %p486
        %s628 = sand.u32 %s476, 1
        %s629 = scalar_lea.sflag [#allocation5], %s628
        %s630 = sand.u32 %s476, 1
        %s631 = scalar_lea.vmem [#allocation4], %s630
        %p632 = scmp.lt.s32.totalorder %s38, 1
        %s633 = scalar_select %p632, %s38, 1
        %s634 = smul.addr %s633, 2
        %s635 = smul.addr %s634, 8
        %s636 = scalar_lea.vmem %s0, %s635
        %v638 = vld [vmem:[%s636] sm:$0xff]
        %v639 = vld [vmem:[%s636 + $0x8] sm:$0xff]
        %v640 = vld [vmem:[%s2] sm:$0x1]
        %v641 = vld [vmem:[%s3] sm:$0x1]
        %vm642 = vcmask 261120
        %v643 = vsel %vm642, %v638, 0.0
        %644 = vadd.xlane.f32.xlu0 %v643
        %v645 = vpop.xlane.xlu0 %644
        %v646 = vsel %vm642, %v639, 0.0
        %647 = vadd.xlane.f32.xlu0 %v646
        %v648 = vpop.xlane.xlu0 %647
        %v649 = vrcp.pop 32.0
        %v650 = vmul.f32 %v645, %v649
        %v651 = vmul.f32 %v648, %v649
        %v652 = vsub.f32 %v638, %v650
        %v653 = vsub.f32 %v639, %v651
        %v654 = vmul.f32 %v652, %v652
        %v655 = vmul.f32 %v653, %v653
        %v656 = vsel %vm642, %v654, 0.0
        %657 = vadd.xlane.f32.xlu0 %v656
        %v658 = vpop.xlane.xlu0 %657
        %v659 = vsel %vm642, %v655, 0.0
        %660 = vadd.xlane.f32.xlu0 %v659
        %v661 = vpop.xlane.xlu0 %660
        %v662 = vmul.f32 %v658, %v649
        %v663 = vmul.f32 %v661, %v649
        %v664 = vadd.f32 %v662, 1e-05
        %v665 = vadd.f32 %v663, 1e-05
        %v666 = vrsqrt.pop %v664
        %v667 = vrsqrt.pop %v665
        %v668 = vmul.f32 %v652, %v666
        %v669 = vmul.f32 %v653, %v667
        %v671 = vlaneseq
        %v672 = vshrl.u32 %v671, 7
        %v673 = vsub.s32 0, %v672
        %v674 = vrot.slane %v640, %v673
        %v676 = vmul.f32 %v668, %v674
        %v677 = vmul.f32 %v669, %v674
        %v679 = vlaneseq
        %v680 = vshrl.u32 %v679, 7
        %v681 = vsub.s32 0, %v680
        %v682 = vrot.slane %v641, %v681
        %v684 = vadd.f32 %v676, %v682
        %v685 = vadd.f32 %v677, %v682
        %v686 = vpack.c.bf16 %v685, %v684
        %v687 = vld [vmem:[%s4] sm:$0xf]
        %v688 = vld [vmem:[%s4 + $0x4] sm:$0xf]
        %v689 = vld [vmem:[%s4 + $0x8] sm:$0xf]
        %v690 = vld [vmem:[%s4 + $0xc] sm:$0xf]
        %v691 = vld [vmem:[%s5] sm:$0x1]
        %v693 = vlaneseq
        %v694 = vshrl.u32 %v693, 7
        %v695 = vsub.s32 0, %v694
        %v696 = vrot.slane %v691, %v695
        %v702 = vunpack.c.l.b16 %v687
        %v703 = vunpack.c.l.b16 %v688
        %v704 = vunpack.c.l.b16 %v689
        %v705 = vunpack.c.l.b16 %v690
        %v706 = vpack.c.b16 %v703, %v702
        %v707 = vpack.c.b16 %v705, %v704
        %v711 = vsel %vm642, %v686, 0
        %713 = vmatprep.subr.bf16.mxu0 0
        %714 = vmatpush1.bf16.msra.mxu0 0
        %715 = vmatprep.subr.bf16.mxu0 0
        %716 = vmatpush1.bf16.msra.mxu0 0
        %717 = vmatprep.subr.bf16.mxu0 0
        %718 = vmatpush1.bf16.msra.mxu0 0
        %719 = vmatprep.subr.bf16.mxu0 0
        %720 = vmatpush1.bf16.msra.mxu0 0
        %721 = vmatprep.subr.bf16.mxu0 0
        %722 = vmatpush1.bf16.msra.mxu0 0
        %723 = vmatprep.subr.bf16.mxu0 0
        %724 = vmatpush1.bf16.msra.mxu0 0
        %725 = vmatprep.subr.bf16.mxu0 0
        %726 = vmatpush1.bf16.msra.mxu0 %v707
        %727 = vmatprep.subr.bf16.mxu0 0
        %728 = vmatpush1.bf16.msra.mxu0 %v706
        %729 = vmatprep.subr.bf16.mxu0 0
        %730 = vmatpush2.bf16.msra.mxu0 0
        %731 = vmatprep.subr.bf16.mxu0 0
        %732 = vmatpush2.bf16.msra.mxu0 0
        %733 = vmatprep.subr.bf16.mxu0 0
        %734 = vmatpush2.bf16.msra.mxu0 0
        %735 = vmatprep.subr.bf16.mxu0 0
        %736 = vmatpush2.bf16.msra.mxu0 0
        %737 = vmatprep.subr.bf16.mxu0 0
        %738 = vmatpush2.bf16.msra.mxu0 0
        %739 = vmatprep.subr.bf16.mxu0 0
        %740 = vmatpush2.bf16.msra.mxu0 0
        %741 = vmatprep.subr.bf16.mxu0 0
        %742 = vmatpush2.bf16.msra.mxu0 0
        %743 = vmatprep.subr.bf16.mxu0 0
        %744 = vmatpush2.bf16.msra.mxu0 0
        %745 = vmatprep.mubr.bf16.mxu0 0
        %746 = vmatmul.mubr.bf16.gmra.mxu0 %v711
        %v747 = vpop.f32.mrf.mxu0
        %v748 = vadd.f32 %v696, %v747
        %v749 = vpop.f32.mrf.mxu0
        %v750 = vpop.f32.mrf.mxu0
        %v751 = vadd.f32 %v696, %v750
        %v752 = vpop.f32.mrf.mxu0
        %753 = vdwg.mxu0
        %v754 = vld [vmem:[%s1] sm:$0x1]
        %v755 = vpack.c.bf16 %v754, %v754
        %v756 = vpack.c.bf16 %v751, %v748
        %vm757 = vcmask 64512
        %v759 = vsel %vm757, %v755, 0
        %v762 = vsel %vm757, %v756, 0
        %764 = vmatprep.subr.bf16.mxu0 0
        %765 = vmatpush1.bf16.xpose.msra.mxu0 0
        %766 = vmatprep.subr.bf16.mxu0 0
        %767 = vmatpush1.bf16.xpose.msra.mxu0 0
        %768 = vmatprep.subr.bf16.mxu0 0
        %769 = vmatpush1.bf16.xpose.msra.mxu0 0
        %770 = vmatprep.subr.bf16.mxu0 0
        %771 = vmatpush1.bf16.xpose.msra.mxu0 0
        %772 = vmatprep.subr.bf16.mxu0 0
        %773 = vmatpush1.bf16.xpose.msra.mxu0 0
        %774 = vmatprep.subr.bf16.mxu0 0
        %775 = vmatpush1.bf16.xpose.msra.mxu0 0
        %776 = vmatprep.subr.bf16.mxu0 0
        %777 = vmatpush1.bf16.xpose.msra.mxu0 0
        %778 = vmatprep.subr.bf16.mxu0 0
        %779 = vmatpush1.bf16.xpose.msra.mxu0 %v762
        %780 = vmatprep.subr.bf16.mxu0 0
        %781 = vmatpush2.bf16.xpose.msra.mxu0 0
        %782 = vmatprep.subr.bf16.mxu0 0
        %783 = vmatpush2.bf16.xpose.msra.mxu0 0
        %784 = vmatprep.subr.bf16.mxu0 0
        %785 = vmatpush2.bf16.xpose.msra.mxu0 0
        %786 = vmatprep.subr.bf16.mxu0 0
        %787 = vmatpush2.bf16.xpose.msra.mxu0 0
        %788 = vmatprep.subr.bf16.mxu0 0
        %789 = vmatpush2.bf16.xpose.msra.mxu0 0
        %790 = vmatprep.subr.bf16.mxu0 0
        %791 = vmatpush2.bf16.xpose.msra.mxu0 0
        %792 = vmatprep.subr.bf16.mxu0 0
        %793 = vmatpush2.bf16.xpose.msra.mxu0 0
        %794 = vmatprep.subr.bf16.mxu0 0
        %795 = vmatpush2.bf16.xpose.msra.mxu0 0
        %796 = vmatprep.mubr.bf16.mxu0 0
        %797 = vmatmul.mubr.bf16.gmra.mxu0 %v759
        %v798 = vpop.f32.mrf.mxu0
        %v799 = vadd.f32 0.0, %v798
        %v800 = vpop.f32.mrf.mxu0
        %v801 = vpop.f32.mrf.mxu0
        %v802 = vpop.f32.mrf.mxu0
        %803 = vdwg.mxu0
        %vm804 = vcmask 122880
        %v805 = vsel %vm804, %v799, -inf
        %806 = vmax.xlane.f32.xlu0 %v805
        %v807 = vpop.xlane.xlu0 %806
        %v808 = vsub.f32 %v799, %v807
        %v809 = vmul.f32 %v808, 1.442695
        %v810 = vpow.pop %v809
        %v811 = vsel %vm804, %v810, 0.0
        %812 = vadd.xlane.f32.xlu0 %v811
        %v813 = vpop.xlane.xlu0 %812
        %v814 = vrcp.pop %v813
        %v815 = vmul.f32 %v810, %v814
        %v816 = vpack.c.bf16 %v815, %v815
        %818 = vrot.lane.b32.xlu0 %v756, 96
        %v819 = vpop.permute.xlu0 %818
        %vm821 = vcmask 130048
        %v823 = vsel %vm821, %v816, 0
        %825 = vmatprep.subr.bf16.mxu0 0
        %826 = vmatpush1.bf16.msra.mxu0 0
        %827 = vmatprep.subr.bf16.mxu0 0
        %828 = vmatpush1.bf16.msra.mxu0 0
        %829 = vmatprep.subr.bf16.mxu0 0
        %830 = vmatpush1.bf16.msra.mxu0 0
        %831 = vmatprep.subr.bf16.mxu0 0
        %832 = vmatpush1.bf16.msra.mxu0 0
        %833 = vmatprep.subr.bf16.mxu0 0
        %834 = vmatpush1.bf16.msra.mxu0 0
        %835 = vmatprep.subr.bf16.mxu0 0
        %836 = vmatpush1.bf16.msra.mxu0 0
        %837 = vmatprep.subr.bf16.mxu0 0
        %838 = vmatpush1.bf16.msra.mxu0 0
        %839 = vmatprep.subr.bf16.mxu0 0
        %840 = vmatpush1.bf16.msra.mxu0 %v819
        %841 = vmatprep.subr.bf16.mxu0 0
        %842 = vmatpush2.bf16.msra.mxu0 0
        %843 = vmatprep.subr.bf16.mxu0 0
        %844 = vmatpush2.bf16.msra.mxu0 0
        %845 = vmatprep.subr.bf16.mxu0 0
        %846 = vmatpush2.bf16.msra.mxu0 0
        %847 = vmatprep.subr.bf16.mxu0 0
        %848 = vmatpush2.bf16.msra.mxu0 0
        %849 = vmatprep.subr.bf16.mxu0 0
        %850 = vmatpush2.bf16.msra.mxu0 0
        %851 = vmatprep.subr.bf16.mxu0 0
        %852 = vmatpush2.bf16.msra.mxu0 0
        %853 = vmatprep.subr.bf16.mxu0 0
        %854 = vmatpush2.bf16.msra.mxu0 0
        %855 = vmatprep.subr.bf16.mxu0 0
        %856 = vmatpush2.bf16.msra.mxu0 0
        %857 = vmatprep.mubr.bf16.mxu0 0
        %858 = vmatmul.mubr.bf16.gmra.mxu0 %v823
        %v859 = vpop.f32.mrf.mxu0
        %v860 = vadd.f32 0.0, %v859
        %v861 = vpop.f32.mrf.mxu0
        %v862 = vpop.f32.mrf.mxu0
        %v863 = vpop.f32.mrf.mxu0
        %864 = vdwg.mxu0
        %866 = vrot.lane.b32.xlu0 %v755, 120
        %v867 = vpop.permute.xlu0 %866
        %868 = vrot.lane.b32.xlu0 %v756, 120
        %v869 = vpop.permute.xlu0 %868
        %v871 = vsel %vm757, %v867, 0
        %v874 = vsel %vm757, %v869, 0
        %876 = vmatprep.subr.bf16.mxu0 0
        %877 = vmatpush1.bf16.xpose.msra.mxu0 0
        %878 = vmatprep.subr.bf16.mxu0 0
        %879 = vmatpush1.bf16.xpose.msra.mxu0 0
        %880 = vmatprep.subr.bf16.mxu0 0
        %881 = vmatpush1.bf16.xpose.msra.mxu0 0
        %882 = vmatprep.subr.bf16.mxu0 0
        %883 = vmatpush1.bf16.xpose.msra.mxu0 0
        %884 = vmatprep.subr.bf16.mxu0 0
        %885 = vmatpush1.bf16.xpose.msra.mxu0 0
        %886 = vmatprep.subr.bf16.mxu0 0
        %887 = vmatpush1.bf16.xpose.msra.mxu0 0
        %888 = vmatprep.subr.bf16.mxu0 0
        %889 = vmatpush1.bf16.xpose.msra.mxu0 0
        %890 = vmatprep.subr.bf16.mxu0 0
        %891 = vmatpush1.bf16.xpose.msra.mxu0 %v874
        %892 = vmatprep.subr.bf16.mxu0 0
        %893 = vmatpush2.bf16.xpose.msra.mxu0 0
        %894 = vmatprep.subr.bf16.mxu0 0
        %895 = vmatpush2.bf16.xpose.msra.mxu0 0
        %896 = vmatprep.subr.bf16.mxu0 0
        %897 = vmatpush2.bf16.xpose.msra.mxu0 0
        %898 = vmatprep.subr.bf16.mxu0 0
        %899 = vmatpush2.bf16.xpose.msra.mxu0 0
        %900 = vmatprep.subr.bf16.mxu0 0
        %901 = vmatpush2.bf16.xpose.msra.mxu0 0
        %902 = vmatprep.subr.bf16.mxu0 0
        %903 = vmatpush2.bf16.xpose.msra.mxu0 0
        %904 = vmatprep.subr.bf16.mxu0 0
        %905 = vmatpush2.bf16.xpose.msra.mxu0 0
        %906 = vmatprep.subr.bf16.mxu0 0
        %907 = vmatpush2.bf16.xpose.msra.mxu0 0
        %908 = vmatprep.mubr.bf16.mxu0 0
        %909 = vmatmul.mubr.bf16.gmra.mxu0 %v871
        %v910 = vpop.f32.mrf.mxu0
        %v911 = vadd.f32 0.0, %v910
        %v912 = vpop.f32.mrf.mxu0
        %v913 = vpop.f32.mrf.mxu0
        %v914 = vpop.f32.mrf.mxu0
        %915 = vdwg.mxu0
        %v916 = vsel %vm804, %v911, -inf
        %917 = vmax.xlane.f32.xlu0 %v916
        %v918 = vpop.xlane.xlu0 %917
        %v919 = vsub.f32 %v911, %v918
        %v920 = vmul.f32 %v919, 1.442695
        %v921 = vpow.pop %v920
        %v922 = vsel %vm804, %v921, 0.0
        %923 = vadd.xlane.f32.xlu0 %v922
        %v924 = vpop.xlane.xlu0 %923
        %v925 = vrcp.pop %v924
        %v926 = vmul.f32 %v921, %v925
        %v927 = vpack.c.bf16 %v926, %v926
        %928 = vrot.lane.b32.xlu0 %v756, 88
        %v929 = vpop.permute.xlu0 %928
        %v932 = vsel %vm821, %v927, 0
        %934 = vmatprep.subr.bf16.mxu0 0
        %935 = vmatpush1.bf16.msra.mxu0 0
        %936 = vmatprep.subr.bf16.mxu0 0
        %937 = vmatpush1.bf16.msra.mxu0 0
        %938 = vmatprep.subr.bf16.mxu0 0
        %939 = vmatpush1.bf16.msra.mxu0 0
        %940 = vmatprep.subr.bf16.mxu0 0
        %941 = vmatpush1.bf16.msra.mxu0 0
        %942 = vmatprep.subr.bf16.mxu0 0
        %943 = vmatpush1.bf16.msra.mxu0 0
        %944 = vmatprep.subr.bf16.mxu0 0
        %945 = vmatpush1.bf16.msra.mxu0 0
        %946 = vmatprep.subr.bf16.mxu0 0
        %947 = vmatpush1.bf16.msra.mxu0 0
        %948 = vmatprep.subr.bf16.mxu0 0
        %949 = vmatpush1.bf16.msra.mxu0 %v929
        %950 = vmatprep.subr.bf16.mxu0 0
        %951 = vmatpush2.bf16.msra.mxu0 0
        %952 = vmatprep.subr.bf16.mxu0 0
        %953 = vmatpush2.bf16.msra.mxu0 0
        %954 = vmatprep.subr.bf16.mxu0 0
        %955 = vmatpush2.bf16.msra.mxu0 0
        %956 = vmatprep.subr.bf16.mxu0 0
        %957 = vmatpush2.bf16.msra.mxu0 0
        %958 = vmatprep.subr.bf16.mxu0 0
        %959 = vmatpush2.bf16.msra.mxu0 0
        %960 = vmatprep.subr.bf16.mxu0 0
        %961 = vmatpush2.bf16.msra.mxu0 0
        %962 = vmatprep.subr.bf16.mxu0 0
        %963 = vmatpush2.bf16.msra.mxu0 0
        %964 = vmatprep.subr.bf16.mxu0 0
        %965 = vmatpush2.bf16.msra.mxu0 0
        %966 = vmatprep.mubr.bf16.mxu0 0
        %967 = vmatmul.mubr.bf16.gmra.mxu0 %v932
        %v968 = vpop.f32.mrf.mxu0
        %v969 = vadd.f32 0.0, %v968
        %v970 = vpop.f32.mrf.mxu0
        %v971 = vpop.f32.mrf.mxu0
        %v972 = vpop.f32.mrf.mxu0
        %973 = vdwg.mxu0
        %974 = vrot.lane.b32.xlu0 %v755, 112
        %v975 = vpop.permute.xlu0 %974
        %976 = vrot.lane.b32.xlu0 %v756, 112
        %v977 = vpop.permute.xlu0 %976
        %v979 = vsel %vm757, %v975, 0
        %v982 = vsel %vm757, %v977, 0
        %984 = vmatprep.subr.bf16.mxu0 0
        %985 = vmatpush1.bf16.xpose.msra.mxu0 0
        %986 = vmatprep.subr.bf16.mxu0 0
        %987 = vmatpush1.bf16.xpose.msra.mxu0 0
        %988 = vmatprep.subr.bf16.mxu0 0
        %989 = vmatpush1.bf16.xpose.msra.mxu0 0
        %990 = vmatprep.subr.bf16.mxu0 0
        %991 = vmatpush1.bf16.xpose.msra.mxu0 0
        %992 = vmatprep.subr.bf16.mxu0 0
        %993 = vmatpush1.bf16.xpose.msra.mxu0 0
        %994 = vmatprep.subr.bf16.mxu0 0
        %995 = vmatpush1.bf16.xpose.msra.mxu0 0
        %996 = vmatprep.subr.bf16.mxu0 0
        %997 = vmatpush1.bf16.xpose.msra.mxu0 0
        %998 = vmatprep.subr.bf16.mxu0 0
        %999 = vmatpush1.bf16.xpose.msra.mxu0 %v982
        %1000 = vmatprep.subr.bf16.mxu0 0
        %1001 = vmatpush2.bf16.xpose.msra.mxu0 0
        %1002 = vmatprep.subr.bf16.mxu0 0
        %1003 = vmatpush2.bf16.xpose.msra.mxu0 0
        %1004 = vmatprep.subr.bf16.mxu0 0
        %1005 = vmatpush2.bf16.xpose.msra.mxu0 0
        %1006 = vmatprep.subr.bf16.mxu0 0
        %1007 = vmatpush2.bf16.xpose.msra.mxu0 0
        %1008 = vmatprep.subr.bf16.mxu0 0
        %1009 = vmatpush2.bf16.xpose.msra.mxu0 0
        %1010 = vmatprep.subr.bf16.mxu0 0
        %1011 = vmatpush2.bf16.xpose.msra.mxu0 0
        %1012 = vmatprep.subr.bf16.mxu0 0
        %1013 = vmatpush2.bf16.xpose.msra.mxu0 0
        %1014 = vmatprep.subr.bf16.mxu0 0
        %1015 = vmatpush2.bf16.xpose.msra.mxu0 0
        %1016 = vmatprep.mubr.bf16.mxu0 0
        %1017 = vmatmul.mubr.bf16.gmra.mxu0 %v979
        %v1018 = vpop.f32.mrf.mxu0
        %v1019 = vadd.f32 0.0, %v1018
        %v1020 = vpop.f32.mrf.mxu0
        %v1021 = vpop.f32.mrf.mxu0
        %v1022 = vpop.f32.mrf.mxu0
        %1023 = vdwg.mxu0
        %v1024 = vsel %vm804, %v1019, -inf
        %1025 = vmax.xlane.f32.xlu0 %v1024
        %v1026 = vpop.xlane.xlu0 %1025
        %v1027 = vsub.f32 %v1019, %v1026
        %v1028 = vmul.f32 %v1027, 1.442695
        %v1029 = vpow.pop %v1028
        %v1030 = vsel %vm804, %v1029, 0.0
        %1031 = vadd.xlane.f32.xlu0 %v1030
        %v1032 = vpop.xlane.xlu0 %1031
        %v1033 = vrcp.pop %v1032
        %v1034 = vmul.f32 %v1029, %v1033
        %v1035 = vpack.c.bf16 %v1034, %v1034
        %1036 = vrot.lane.b32.xlu0 %v756, 80
        %v1037 = vpop.permute.xlu0 %1036
        %v1040 = vsel %vm821, %v1035, 0
        %1042 = vmatprep.subr.bf16.mxu0 0
        %1043 = vmatpush1.bf16.msra.mxu0 0
        %1044 = vmatprep.subr.bf16.mxu0 0
        %1045 = vmatpush1.bf16.msra.mxu0 0
        %1046 = vmatprep.subr.bf16.mxu0 0
        %1047 = vmatpush1.bf16.msra.mxu0 0
        %1048 = vmatprep.subr.bf16.mxu0 0
        %1049 = vmatpush1.bf16.msra.mxu0 0
        %1050 = vmatprep.subr.bf16.mxu0 0
        %1051 = vmatpush1.bf16.msra.mxu0 0
        %1052 = vmatprep.subr.bf16.mxu0 0
        %1053 = vmatpush1.bf16.msra.mxu0 0
        %1054 = vmatprep.subr.bf16.mxu0 0
        %1055 = vmatpush1.bf16.msra.mxu0 0
        %1056 = vmatprep.subr.bf16.mxu0 0
        %1057 = vmatpush1.bf16.msra.mxu0 %v1037
        %1058 = vmatprep.subr.bf16.mxu0 0
        %1059 = vmatpush2.bf16.msra.mxu0 0
        %1060 = vmatprep.subr.bf16.mxu0 0
        %1061 = vmatpush2.bf16.msra.mxu0 0
        %1062 = vmatprep.subr.bf16.mxu0 0
        %1063 = vmatpush2.bf16.msra.mxu0 0
        %1064 = vmatprep.subr.bf16.mxu0 0
        %1065 = vmatpush2.bf16.msra.mxu0 0
        %1066 = vmatprep.subr.bf16.mxu0 0
        %1067 = vmatpush2.bf16.msra.mxu0 0
        %1068 = vmatprep.subr.bf16.mxu0 0
        %1069 = vmatpush2.bf16.msra.mxu0 0
        %1070 = vmatprep.subr.bf16.mxu0 0
        %1071 = vmatpush2.bf16.msra.mxu0 0
        %1072 = vmatprep.subr.bf16.mxu0 0
        %1073 = vmatpush2.bf16.msra.mxu0 0
        %1074 = vmatprep.mubr.bf16.mxu0 0
        %1075 = vmatmul.mubr.bf16.gmra.mxu0 %v1040
        %v1076 = vpop.f32.mrf.mxu0
        %v1077 = vadd.f32 0.0, %v1076
        %v1078 = vpop.f32.mrf.mxu0
        %v1079 = vpop.f32.mrf.mxu0
        %v1080 = vpop.f32.mrf.mxu0
        %1081 = vdwg.mxu0
        %1082 = vrot.lane.b32.xlu0 %v755, 104
        %v1083 = vpop.permute.xlu0 %1082
        %1084 = vrot.lane.b32.xlu0 %v756, 104
        %v1085 = vpop.permute.xlu0 %1084
        %v1087 = vsel %vm757, %v1083, 0
        %v1090 = vsel %vm757, %v1085, 0
        %1092 = vmatprep.subr.bf16.mxu0 0
        %1093 = vmatpush1.bf16.xpose.msra.mxu0 0
        %1094 = vmatprep.subr.bf16.mxu0 0
        %1095 = vmatpush1.bf16.xpose.msra.mxu0 0
        %1096 = vmatprep.subr.bf16.mxu0 0
        %1097 = vmatpush1.bf16.xpose.msra.mxu0 0
        %1098 = vmatprep.subr.bf16.mxu0 0
        %1099 = vmatpush1.bf16.xpose.msra.mxu0 0
        %1100 = vmatprep.subr.bf16.mxu0 0
        %1101 = vmatpush1.bf16.xpose.msra.mxu0 0
        %1102 = vmatprep.subr.bf16.mxu0 0
        %1103 = vmatpush1.bf16.xpose.msra.mxu0 0
        %1104 = vmatprep.subr.bf16.mxu0 0
        %1105 = vmatpush1.bf16.xpose.msra.mxu0 0
        %1106 = vmatprep.subr.bf16.mxu0 0
        %1107 = vmatpush1.bf16.xpose.msra.mxu0 %v1090
        %1108 = vmatprep.subr.bf16.mxu0 0
        %1109 = vmatpush2.bf16.xpose.msra.mxu0 0
        %1110 = vmatprep.subr.bf16.mxu0 0
        %1111 = vmatpush2.bf16.xpose.msra.mxu0 0
        %1112 = vmatprep.subr.bf16.mxu0 0
        %1113 = vmatpush2.bf16.xpose.msra.mxu0 0
        %1114 = vmatprep.subr.bf16.mxu0 0
        %1115 = vmatpush2.bf16.xpose.msra.mxu0 0
        %1116 = vmatprep.subr.bf16.mxu0 0
        %1117 = vmatpush2.bf16.xpose.msra.mxu0 0
        %1118 = vmatprep.subr.bf16.mxu0 0
        %1119 = vmatpush2.bf16.xpose.msra.mxu0 0
        %1120 = vmatprep.subr.bf16.mxu0 0
        %1121 = vmatpush2.bf16.xpose.msra.mxu0 0
        %1122 = vmatprep.subr.bf16.mxu0 0
        %1123 = vmatpush2.bf16.xpose.msra.mxu0 0
        %1124 = vmatprep.mubr.bf16.mxu0 0
        %1125 = vmatmul.mubr.bf16.gmra.mxu0 %v1087
        %v1126 = vpop.f32.mrf.mxu0
        %v1127 = vadd.f32 0.0, %v1126
        %v1128 = vpop.f32.mrf.mxu0
        %v1129 = vpop.f32.mrf.mxu0
        %v1130 = vpop.f32.mrf.mxu0
        %1131 = vdwg.mxu0
        %v1132 = vsel %vm804, %v1127, -inf
        %1133 = vmax.xlane.f32.xlu0 %v1132
        %v1134 = vpop.xlane.xlu0 %1133
        %v1135 = vsub.f32 %v1127, %v1134
        %v1136 = vmul.f32 %v1135, 1.442695
        %v1137 = vpow.pop %v1136
        %v1138 = vsel %vm804, %v1137, 0.0
        %1139 = vadd.xlane.f32.xlu0 %v1138
        %v1140 = vpop.xlane.xlu0 %1139
        %v1141 = vrcp.pop %v1140
        %v1142 = vmul.f32 %v1137, %v1141
        %v1143 = vpack.c.bf16 %v1142, %v1142
        %1144 = vrot.lane.b32.xlu0 %v756, 72
        %v1145 = vpop.permute.xlu0 %1144
        %v1148 = vsel %vm821, %v1143, 0
        %1150 = vmatprep.subr.bf16.mxu0 0
        %1151 = vmatpush1.bf16.msra.mxu0 0
        %1152 = vmatprep.subr.bf16.mxu0 0
        %1153 = vmatpush1.bf16.msra.mxu0 0
        %1154 = vmatprep.subr.bf16.mxu0 0
        %1155 = vmatpush1.bf16.msra.mxu0 0
        %1156 = vmatprep.subr.bf16.mxu0 0
        %1157 = vmatpush1.bf16.msra.mxu0 0
        %1158 = vmatprep.subr.bf16.mxu0 0
        %1159 = vmatpush1.bf16.msra.mxu0 0
        %1160 = vmatprep.subr.bf16.mxu0 0
        %1161 = vmatpush1.bf16.msra.mxu0 0
        %1162 = vmatprep.subr.bf16.mxu0 0
        %1163 = vmatpush1.bf16.msra.mxu0 0
        %1164 = vmatprep.subr.bf16.mxu0 0
        %1165 = vmatpush1.bf16.msra.mxu0 %v1145
        %1166 = vmatprep.subr.bf16.mxu0 0
        %1167 = vmatpush2.bf16.msra.mxu0 0
        %1168 = vmatprep.subr.bf16.mxu0 0
        %1169 = vmatpush2.bf16.msra.mxu0 0
        %1170 = vmatprep.subr.bf16.mxu0 0
        %1171 = vmatpush2.bf16.msra.mxu0 0
        %1172 = vmatprep.subr.bf16.mxu0 0
        %1173 = vmatpush2.bf16.msra.mxu0 0
        %1174 = vmatprep.subr.bf16.mxu0 0
        %1175 = vmatpush2.bf16.msra.mxu0 0
        %1176 = vmatprep.subr.bf16.mxu0 0
        %1177 = vmatpush2.bf16.msra.mxu0 0
        %1178 = vmatprep.subr.bf16.mxu0 0
        %1179 = vmatpush2.bf16.msra.mxu0 0
        %1180 = vmatprep.subr.bf16.mxu0 0
        %1181 = vmatpush2.bf16.msra.mxu0 0
        %1182 = vmatprep.mubr.bf16.mxu0 0
        %1183 = vmatmul.mubr.bf16.gmra.mxu0 %v1148
        %v1184 = vpop.f32.mrf.mxu0
        %v1185 = vadd.f32 0.0, %v1184
        %v1186 = vpop.f32.mrf.mxu0
        %v1187 = vpop.f32.mrf.mxu0
        %v1188 = vpop.f32.mrf.mxu0
        %1189 = vdwg.mxu0
        %1191 = vrot.lane.b32.xlu0 %v969, 8
        %v1192 = vpop.permute.xlu0 %1191
        %1195 = vrot.lane.b32.xlu0 %v1077, 16
        %v1196 = vpop.permute.xlu0 %1195
        %1199 = vrot.lane.b32.xlu0 %v1185, 24
        %v1200 = vpop.permute.xlu0 %1199
        %v1202 = vsel %vm757, %v860, %v1192
        %v1203 = vsel %vm821, %v1202, %v1196
        %vm1204 = vcmask 195584
        %v1205 = vsel %vm1204, %v1203, %v1200
        %v1206 = vpack.c.bf16 %v1205, %v1205
        %v1207 = vld [vmem:[%s6] sm:$0xf]
        %v1208 = vld [vmem:[%s6 + $0x4] sm:$0xf]
        %v1209 = vld [vmem:[%s6 + $0x8] sm:$0xf]
        %v1210 = vld [vmem:[%s6 + $0xc] sm:$0xf]
        %v1211 = vld [vmem:[%s7] sm:$0x1]
        %v1216 = vunpack.c.l.b16 %v1207
        %v1217 = vunpack.c.l.b16 %v1208
        %v1218 = vunpack.c.l.b16 %v1209
        %v1219 = vunpack.c.l.b16 %v1210
        %v1220 = vpack.c.b16 %v1217, %v1216
        %v1221 = vpack.c.b16 %v1219, %v1218
        %v1225 = vsel %vm642, %v1206, 0
        %1227 = vmatprep.subr.bf16.mxu0 0
        %1228 = vmatpush1.bf16.msra.mxu0 0
        %1229 = vmatprep.subr.bf16.mxu0 0
        %1230 = vmatpush1.bf16.msra.mxu0 0
        %1231 = vmatprep.subr.bf16.mxu0 0
        %1232 = vmatpush1.bf16.msra.mxu0 0
        %1233 = vmatprep.subr.bf16.mxu0 0
        %1234 = vmatpush1.bf16.msra.mxu0 0
        %1235 = vmatprep.subr.bf16.mxu0 0
        %1236 = vmatpush1.bf16.msra.mxu0 0
        %1237 = vmatprep.subr.bf16.mxu0 0
        %1238 = vmatpush1.bf16.msra.mxu0 0
        %1239 = vmatprep.subr.bf16.mxu0 0
        %1240 = vmatpush1.bf16.msra.mxu0 %v1221
        %1241 = vmatprep.subr.bf16.mxu0 0
        %1242 = vmatpush1.bf16.msra.mxu0 %v1220
        %1243 = vmatprep.subr.bf16.mxu0 0
        %1244 = vmatpush2.bf16.msra.mxu0 0
        %1245 = vmatprep.subr.bf16.mxu0 0
        %1246 = vmatpush2.bf16.msra.mxu0 0
        %1247 = vmatprep.subr.bf16.mxu0 0
        %1248 = vmatpush2.bf16.msra.mxu0 0
        %1249 = vmatprep.subr.bf16.mxu0 0
        %1250 = vmatpush2.bf16.msra.mxu0 0
        %1251 = vmatprep.subr.bf16.mxu0 0
        %1252 = vmatpush2.bf16.msra.mxu0 0
        %1253 = vmatprep.subr.bf16.mxu0 0
        %1254 = vmatpush2.bf16.msra.mxu0 0
        %1255 = vmatprep.subr.bf16.mxu0 0
        %1256 = vmatpush2.bf16.msra.mxu0 0
        %1257 = vmatprep.subr.bf16.mxu0 0
        %1258 = vmatpush2.bf16.msra.mxu0 0
        %1259 = vmatprep.mubr.bf16.mxu0 0
        %1260 = vmatmul.mubr.bf16.gmra.mxu0 %v1225
        %v1261 = vpop.f32.mrf.mxu0
        %v1262 = vadd.f32 %v1211, %v1261
        %v1263 = vpop.f32.mrf.mxu0
        %v1264 = vpop.f32.mrf.mxu0
        %v1265 = vpop.f32.mrf.mxu0
        %1266 = vdwg.mxu0
        %v1267 = vpack.c.bf16 %v1262, %v1262
        %v1268 = vld [vmem:[%s8] sm:$0xf]
        %v1269 = vld [vmem:[%s8 + $0x4] sm:$0xf]
        %v1270 = vld [vmem:[%s8 + $0x8] sm:$0xf]
        %v1271 = vld [vmem:[%s8 + $0xc] sm:$0xf]
        %v1272 = vld [vmem:[%s9] sm:$0x1]
        %v1277 = vunpack.c.l.b16 %v1268
        %v1278 = vunpack.c.l.b16 %v1269
        %v1279 = vunpack.c.l.b16 %v1270
        %v1280 = vunpack.c.l.b16 %v1271
        %v1281 = vpack.c.b16 %v1278, %v1277
        %v1282 = vpack.c.b16 %v1280, %v1279
        %v1286 = vsel %vm642, %v1267, 0
        %1288 = vmatprep.subr.bf16.mxu0 0
        %1289 = vmatpush1.bf16.msra.mxu0 0
        %1290 = vmatprep.subr.bf16.mxu0 0
        %1291 = vmatpush1.bf16.msra.mxu0 0
        %1292 = vmatprep.subr.bf16.mxu0 0
        %1293 = vmatpush1.bf16.msra.mxu0 0
        %1294 = vmatprep.subr.bf16.mxu0 0
        %1295 = vmatpush1.bf16.msra.mxu0 0
        %1296 = vmatprep.subr.bf16.mxu0 0
        %1297 = vmatpush1.bf16.msra.mxu0 0
        %1298 = vmatprep.subr.bf16.mxu0 0
        %1299 = vmatpush1.bf16.msra.mxu0 0
        %1300 = vmatprep.subr.bf16.mxu0 0
        %1301 = vmatpush1.bf16.msra.mxu0 %v1282
        %1302 = vmatprep.subr.bf16.mxu0 0
        %1303 = vmatpush1.bf16.msra.mxu0 %v1281
        %1304 = vmatprep.subr.bf16.mxu0 0
        %1305 = vmatpush2.bf16.msra.mxu0 0
        %1306 = vmatprep.subr.bf16.mxu0 0
        %1307 = vmatpush2.bf16.msra.mxu0 0
        %1308 = vmatprep.subr.bf16.mxu0 0
        %1309 = vmatpush2.bf16.msra.mxu0 0
        %1310 = vmatprep.subr.bf16.mxu0 0
        %1311 = vmatpush2.bf16.msra.mxu0 0
        %1312 = vmatprep.subr.bf16.mxu0 0
        %1313 = vmatpush2.bf16.msra.mxu0 0
        %1314 = vmatprep.subr.bf16.mxu0 0
        %1315 = vmatpush2.bf16.msra.mxu0 0
        %1316 = vmatprep.subr.bf16.mxu0 0
        %1317 = vmatpush2.bf16.msra.mxu0 0
        %1318 = vmatprep.subr.bf16.mxu0 0
        %1319 = vmatpush2.bf16.msra.mxu0 0
        %1320 = vmatprep.mubr.bf16.mxu0 0
        %1321 = vmatmul.mubr.bf16.gmra.mxu0 %v1286
        %v1322 = vpop.f32.mrf.mxu0
        %v1323 = vadd.f32 %v1272, %v1322
        %v1324 = vpop.f32.mrf.mxu0
        %v1325 = vpop.f32.mrf.mxu0
        %v1326 = vpop.f32.mrf.mxu0
        %1327 = vdwg.mxu0
        %vm1328 = vcmask 32768
        %1329 = vst.msk [vmem:[%s625] sm:$0x1] %vm1328, %v1323
        %v1330 = vld [vmem:[%s11] sm:$0x1]
        %v1331 = vld [vmem:[%s12] sm:$0x1]
        %v1333 = vlaneseq
        %v1334 = vshrl.u32 %v1333, 7
        %v1335 = vsub.s32 0, %v1334
        %v1336 = vrot.slane %v1330, %v1335
        %v1338 = vmul.f32 %v668, %v1336
        %v1339 = vmul.f32 %v669, %v1336
        %v1341 = vlaneseq
        %v1342 = vshrl.u32 %v1341, 7
        %v1343 = vsub.s32 0, %v1342
        %v1344 = vrot.slane %v1331, %v1343
        %v1346 = vadd.f32 %v1338, %v1344
        %v1347 = vadd.f32 %v1339, %v1344
        %v1348 = vpack.c.bf16 %v1347, %v1346
        %v1349 = vld [vmem:[%s13] sm:$0xf]
        %v1350 = vld [vmem:[%s13 + $0x4] sm:$0xf]
        %v1351 = vld [vmem:[%s13 + $0x8] sm:$0xf]
        %v1352 = vld [vmem:[%s13 + $0xc] sm:$0xf]
        %v1353 = vld [vmem:[%s14] sm:$0x1]
        %v1355 = vlaneseq
        %v1356 = vshrl.u32 %v1355, 7
        %v1357 = vsub.s32 0, %v1356
        %v1358 = vrot.slane %v1353, %v1357
        %v1364 = vunpack.c.l.b16 %v1349
        %v1365 = vunpack.c.l.b16 %v1350
        %v1366 = vunpack.c.l.b16 %v1351
        %v1367 = vunpack.c.l.b16 %v1352
        %v1368 = vpack.c.b16 %v1365, %v1364
        %v1369 = vpack.c.b16 %v1367, %v1366
        %v1373 = vsel %vm642, %v1348, 0
        %1375 = vmatprep.subr.bf16.mxu0 0
        %1376 = vmatpush1.bf16.msra.mxu0 0
        %1377 = vmatprep.subr.bf16.mxu0 0
        %1378 = vmatpush1.bf16.msra.mxu0 0
        %1379 = vmatprep.subr.bf16.mxu0 0
        %1380 = vmatpush1.bf16.msra.mxu0 0
        %1381 = vmatprep.subr.bf16.mxu0 0
        %1382 = vmatpush1.bf16.msra.mxu0 0
        %1383 = vmatprep.subr.bf16.mxu0 0
        %1384 = vmatpush1.bf16.msra.mxu0 0
        %1385 = vmatprep.subr.bf16.mxu0 0
        %1386 = vmatpush1.bf16.msra.mxu0 0
        %1387 = vmatprep.subr.bf16.mxu0 0
        %1388 = vmatpush1.bf16.msra.mxu0 %v1369
        %1389 = vmatprep.subr.bf16.mxu0 0
        %1390 = vmatpush1.bf16.msra.mxu0 %v1368
        %1391 = vmatprep.subr.bf16.mxu0 0
        %1392 = vmatpush2.bf16.msra.mxu0 0
        %1393 = vmatprep.subr.bf16.mxu0 0
        %1394 = vmatpush2.bf16.msra.mxu0 0
        %1395 = vmatprep.subr.bf16.mxu0 0
        %1396 = vmatpush2.bf16.msra.mxu0 0
        %1397 = vmatprep.subr.bf16.mxu0 0
        %1398 = vmatpush2.bf16.msra.mxu0 0
        %1399 = vmatprep.subr.bf16.mxu0 0
        %1400 = vmatpush2.bf16.msra.mxu0 0
        %1401 = vmatprep.subr.bf16.mxu0 0
        %1402 = vmatpush2.bf16.msra.mxu0 0
        %1403 = vmatprep.subr.bf16.mxu0 0
        %1404 = vmatpush2.bf16.msra.mxu0 0
        %1405 = vmatprep.subr.bf16.mxu0 0
        %1406 = vmatpush2.bf16.msra.mxu0 0
        %1407 = vmatprep.mubr.bf16.mxu0 0
        %1408 = vmatmul.mubr.bf16.gmra.mxu0 %v1373
        %v1409 = vpop.f32.mrf.mxu0
        %v1410 = vadd.f32 %v1358, %v1409
        %v1411 = vpop.f32.mrf.mxu0
        %v1412 = vpop.f32.mrf.mxu0
        %v1413 = vadd.f32 %v1358, %v1412
        %v1414 = vpop.f32.mrf.mxu0
        %1415 = vdwg.mxu0
        %v1416 = vld [vmem:[%s10] sm:$0x1]
        %v1417 = vpack.c.bf16 %v1416, %v1416
        %v1418 = vpack.c.bf16 %v1413, %v1410
        %v1420 = vsel %vm757, %v1417, 0
        %v1423 = vsel %vm757, %v1418, 0
        %1425 = vmatprep.subr.bf16.mxu0 0
        %1426 = vmatpush1.bf16.xpose.msra.mxu0 0
        %1427 = vmatprep.subr.bf16.mxu0 0
        %1428 = vmatpush1.bf16.xpose.msra.mxu0 0
        %1429 = vmatprep.subr.bf16.mxu0 0
        %1430 = vmatpush1.bf16.xpose.msra.mxu0 0
        %1431 = vmatprep.subr.bf16.mxu0 0
        %1432 = vmatpush1.bf16.xpose.msra.mxu0 0
        %1433 = vmatprep.subr.bf16.mxu0 0
        %1434 = vmatpush1.bf16.xpose.msra.mxu0 0
        %1435 = vmatprep.subr.bf16.mxu0 0
        %1436 = vmatpush1.bf16.xpose.msra.mxu0 0
        %1437 = vmatprep.subr.bf16.mxu0 0
        %1438 = vmatpush1.bf16.xpose.msra.mxu0 0
        %1439 = vmatprep.subr.bf16.mxu0 0
        %1440 = vmatpush1.bf16.xpose.msra.mxu0 %v1423
        %1441 = vmatprep.subr.bf16.mxu0 0
        %1442 = vmatpush2.bf16.xpose.msra.mxu0 0
        %1443 = vmatprep.subr.bf16.mxu0 0
        %1444 = vmatpush2.bf16.xpose.msra.mxu0 0
        %1445 = vmatprep.subr.bf16.mxu0 0
        %1446 = vmatpush2.bf16.xpose.msra.mxu0 0
        %1447 = vmatprep.subr.bf16.mxu0 0
        %1448 = vmatpush2.bf16.xpose.msra.mxu0 0
        %1449 = vmatprep.subr.bf16.mxu0 0
        %1450 = vmatpush2.bf16.xpose.msra.mxu0 0
        %1451 = vmatprep.subr.bf16.mxu0 0
        %1452 = vmatpush2.bf16.xpose.msra.mxu0 0
        %1453 = vmatprep.subr.bf16.mxu0 0
        %1454 = vmatpush2.bf16.xpose.msra.mxu0 0
        %1455 = vmatprep.subr.bf16.mxu0 0
        %1456 = vmatpush2.bf16.xpose.msra.mxu0 0
        %1457 = vmatprep.mubr.bf16.mxu0 0
        %1458 = vmatmul.mubr.bf16.gmra.mxu0 %v1420
        %v1459 = vpop.f32.mrf.mxu0
        %v1460 = vadd.f32 0.0, %v1459
        %v1461 = vpop.f32.mrf.mxu0
        %v1462 = vpop.f32.mrf.mxu0
        %v1463 = vpop.f32.mrf.mxu0
        %1464 = vdwg.mxu0
        %v1465 = vsel %vm804, %v1460, -inf
        %1466 = vmax.xlane.f32.xlu0 %v1465
        %v1467 = vpop.xlane.xlu0 %1466
        %v1468 = vsub.f32 %v1460, %v1467
        %v1469 = vmul.f32 %v1468, 1.442695
        %v1470 = vpow.pop %v1469
        %v1471 = vsel %vm804, %v1470, 0.0
        %1472 = vadd.xlane.f32.xlu0 %v1471
        %v1473 = vpop.xlane.xlu0 %1472
        %v1474 = vrcp.pop %v1473
        %v1475 = vmul.f32 %v1470, %v1474
        %v1476 = vpack.c.bf16 %v1475, %v1475
        %1478 = vrot.lane.b32.xlu0 %v1418, 96
        %v1479 = vpop.permute.xlu0 %1478
        %v1482 = vsel %vm821, %v1476, 0
        %1484 = vmatprep.subr.bf16.mxu0 0
        %1485 = vmatpush1.bf16.msra.mxu0 0
        %1486 = vmatprep.subr.bf16.mxu0 0
        %1487 = vmatpush1.bf16.msra.mxu0 0
        %1488 = vmatprep.subr.bf16.mxu0 0
        %1489 = vmatpush1.bf16.msra.mxu0 0
        %1490 = vmatprep.subr.bf16.mxu0 0
        %1491 = vmatpush1.bf16.msra.mxu0 0
        %1492 = vmatprep.subr.bf16.mxu0 0
        %1493 = vmatpush1.bf16.msra.mxu0 0
        %1494 = vmatprep.subr.bf16.mxu0 0
        %1495 = vmatpush1.bf16.msra.mxu0 0
        %1496 = vmatprep.subr.bf16.mxu0 0
        %1497 = vmatpush1.bf16.msra.mxu0 0
        %1498 = vmatprep.subr.bf16.mxu0 0
        %1499 = vmatpush1.bf16.msra.mxu0 %v1479
        %1500 = vmatprep.subr.bf16.mxu0 0
        %1501 = vmatpush2.bf16.msra.mxu0 0
        %1502 = vmatprep.subr.bf16.mxu0 0
        %1503 = vmatpush2.bf16.msra.mxu0 0
        %1504 = vmatprep.subr.bf16.mxu0 0
        %1505 = vmatpush2.bf16.msra.mxu0 0
        %1506 = vmatprep.subr.bf16.mxu0 0
        %1507 = vmatpush2.bf16.msra.mxu0 0
        %1508 = vmatprep.subr.bf16.mxu0 0
        %1509 = vmatpush2.bf16.msra.mxu0 0
        %1510 = vmatprep.subr.bf16.mxu0 0
        %1511 = vmatpush2.bf16.msra.mxu0 0
        %1512 = vmatprep.subr.bf16.mxu0 0
        %1513 = vmatpush2.bf16.msra.mxu0 0
        %1514 = vmatprep.subr.bf16.mxu0 0
        %1515 = vmatpush2.bf16.msra.mxu0 0
        %1516 = vmatprep.mubr.bf16.mxu0 0
        %1517 = vmatmul.mubr.bf16.gmra.mxu0 %v1482
        %v1518 = vpop.f32.mrf.mxu0
        %v1519 = vadd.f32 0.0, %v1518
        %v1520 = vpop.f32.mrf.mxu0
        %v1521 = vpop.f32.mrf.mxu0
        %v1522 = vpop.f32.mrf.mxu0
        %1523 = vdwg.mxu0
        %1525 = vrot.lane.b32.xlu0 %v1417, 120
        %v1526 = vpop.permute.xlu0 %1525
        %1527 = vrot.lane.b32.xlu0 %v1418, 120
        %v1528 = vpop.permute.xlu0 %1527
        %v1530 = vsel %vm757, %v1526, 0
        %v1533 = vsel %vm757, %v1528, 0
        %1535 = vmatprep.subr.bf16.mxu0 0
        %1536 = vmatpush1.bf16.xpose.msra.mxu0 0
        %1537 = vmatprep.subr.bf16.mxu0 0
        %1538 = vmatpush1.bf16.xpose.msra.mxu0 0
        %1539 = vmatprep.subr.bf16.mxu0 0
        %1540 = vmatpush1.bf16.xpose.msra.mxu0 0
        %1541 = vmatprep.subr.bf16.mxu0 0
        %1542 = vmatpush1.bf16.xpose.msra.mxu0 0
        %1543 = vmatprep.subr.bf16.mxu0 0
        %1544 = vmatpush1.bf16.xpose.msra.mxu0 0
        %1545 = vmatprep.subr.bf16.mxu0 0
        %1546 = vmatpush1.bf16.xpose.msra.mxu0 0
        %1547 = vmatprep.subr.bf16.mxu0 0
        %1548 = vmatpush1.bf16.xpose.msra.mxu0 0
        %1549 = vmatprep.subr.bf16.mxu0 0
        %1550 = vmatpush1.bf16.xpose.msra.mxu0 %v1533
        %1551 = vmatprep.subr.bf16.mxu0 0
        %1552 = vmatpush2.bf16.xpose.msra.mxu0 0
        %1553 = vmatprep.subr.bf16.mxu0 0
        %1554 = vmatpush2.bf16.xpose.msra.mxu0 0
        %1555 = vmatprep.subr.bf16.mxu0 0
        %1556 = vmatpush2.bf16.xpose.msra.mxu0 0
        %1557 = vmatprep.subr.bf16.mxu0 0
        %1558 = vmatpush2.bf16.xpose.msra.mxu0 0
        %1559 = vmatprep.subr.bf16.mxu0 0
        %1560 = vmatpush2.bf16.xpose.msra.mxu0 0
        %1561 = vmatprep.subr.bf16.mxu0 0
        %1562 = vmatpush2.bf16.xpose.msra.mxu0 0
        %1563 = vmatprep.subr.bf16.mxu0 0
        %1564 = vmatpush2.bf16.xpose.msra.mxu0 0
        %1565 = vmatprep.subr.bf16.mxu0 0
        %1566 = vmatpush2.bf16.xpose.msra.mxu0 0
        %1567 = vmatprep.mubr.bf16.mxu0 0
        %1568 = vmatmul.mubr.bf16.gmra.mxu0 %v1530
        %v1569 = vpop.f32.mrf.mxu0
        %v1570 = vadd.f32 0.0, %v1569
        %v1571 = vpop.f32.mrf.mxu0
        %v1572 = vpop.f32.mrf.mxu0
        %v1573 = vpop.f32.mrf.mxu0
        %1574 = vdwg.mxu0
        %v1575 = vsel %vm804, %v1570, -inf
        %1576 = vmax.xlane.f32.xlu0 %v1575
        %v1577 = vpop.xlane.xlu0 %1576
        %v1578 = vsub.f32 %v1570, %v1577
        %v1579 = vmul.f32 %v1578, 1.442695
        %v1580 = vpow.pop %v1579
        %v1581 = vsel %vm804, %v1580, 0.0
        %1582 = vadd.xlane.f32.xlu0 %v1581
        %v1583 = vpop.xlane.xlu0 %1582
        %v1584 = vrcp.pop %v1583
        %v1585 = vmul.f32 %v1580, %v1584
        %v1586 = vpack.c.bf16 %v1585, %v1585
        %1587 = vrot.lane.b32.xlu0 %v1418, 88
        %v1588 = vpop.permute.xlu0 %1587
        %v1591 = vsel %vm821, %v1586, 0
        %1593 = vmatprep.subr.bf16.mxu0 0
        %1594 = vmatpush1.bf16.msra.mxu0 0
        %1595 = vmatprep.subr.bf16.mxu0 0
        %1596 = vmatpush1.bf16.msra.mxu0 0
        %1597 = vmatprep.subr.bf16.mxu0 0
        %1598 = vmatpush1.bf16.msra.mxu0 0
        %1599 = vmatprep.subr.bf16.mxu0 0
        %1600 = vmatpush1.bf16.msra.mxu0 0
        %1601 = vmatprep.subr.bf16.mxu0 0
        %1602 = vmatpush1.bf16.msra.mxu0 0
        %1603 = vmatprep.subr.bf16.mxu0 0
        %1604 = vmatpush1.bf16.msra.mxu0 0
        %1605 = vmatprep.subr.bf16.mxu0 0
        %1606 = vmatpush1.bf16.msra.mxu0 0
        %1607 = vmatprep.subr.bf16.mxu0 0
        %1608 = vmatpush1.bf16.msra.mxu0 %v1588
        %1609 = vmatprep.subr.bf16.mxu0 0
        %1610 = vmatpush2.bf16.msra.mxu0 0
        %1611 = vmatprep.subr.bf16.mxu0 0
        %1612 = vmatpush2.bf16.msra.mxu0 0
        %1613 = vmatprep.subr.bf16.mxu0 0
        %1614 = vmatpush2.bf16.msra.mxu0 0
        %1615 = vmatprep.subr.bf16.mxu0 0
        %1616 = vmatpush2.bf16.msra.mxu0 0
        %1617 = vmatprep.subr.bf16.mxu0 0
        %1618 = vmatpush2.bf16.msra.mxu0 0
        %1619 = vmatprep.subr.bf16.mxu0 0
        %1620 = vmatpush2.bf16.msra.mxu0 0
        %1621 = vmatprep.subr.bf16.mxu0 0
        %1622 = vmatpush2.bf16.msra.mxu0 0
        %1623 = vmatprep.subr.bf16.mxu0 0
        %1624 = vmatpush2.bf16.msra.mxu0 0
        %1625 = vmatprep.mubr.bf16.mxu0 0
        %1626 = vmatmul.mubr.bf16.gmra.mxu0 %v1591
        %v1627 = vpop.f32.mrf.mxu0
        %v1628 = vadd.f32 0.0, %v1627
        %v1629 = vpop.f32.mrf.mxu0
        %v1630 = vpop.f32.mrf.mxu0
        %v1631 = vpop.f32.mrf.mxu0
        %1632 = vdwg.mxu0
        %1633 = vrot.lane.b32.xlu0 %v1417, 112
        %v1634 = vpop.permute.xlu0 %1633
        %1635 = vrot.lane.b32.xlu0 %v1418, 112
        %v1636 = vpop.permute.xlu0 %1635
        %v1638 = vsel %vm757, %v1634, 0
        %v1641 = vsel %vm757, %v1636, 0
        %1643 = vmatprep.subr.bf16.mxu0 0
        %1644 = vmatpush1.bf16.xpose.msra.mxu0 0
        %1645 = vmatprep.subr.bf16.mxu0 0
        %1646 = vmatpush1.bf16.xpose.msra.mxu0 0
        %1647 = vmatprep.subr.bf16.mxu0 0
        %1648 = vmatpush1.bf16.xpose.msra.mxu0 0
        %1649 = vmatprep.subr.bf16.mxu0 0
        %1650 = vmatpush1.bf16.xpose.msra.mxu0 0
        %1651 = vmatprep.subr.bf16.mxu0 0
        %1652 = vmatpush1.bf16.xpose.msra.mxu0 0
        %1653 = vmatprep.subr.bf16.mxu0 0
        %1654 = vmatpush1.bf16.xpose.msra.mxu0 0
        %1655 = vmatprep.subr.bf16.mxu0 0
        %1656 = vmatpush1.bf16.xpose.msra.mxu0 0
        %1657 = vmatprep.subr.bf16.mxu0 0
        %1658 = vmatpush1.bf16.xpose.msra.mxu0 %v1641
        %1659 = vmatprep.subr.bf16.mxu0 0
        %1660 = vmatpush2.bf16.xpose.msra.mxu0 0
        %1661 = vmatprep.subr.bf16.mxu0 0
        %1662 = vmatpush2.bf16.xpose.msra.mxu0 0
        %1663 = vmatprep.subr.bf16.mxu0 0
        %1664 = vmatpush2.bf16.xpose.msra.mxu0 0
        %1665 = vmatprep.subr.bf16.mxu0 0
        %1666 = vmatpush2.bf16.xpose.msra.mxu0 0
        %1667 = vmatprep.subr.bf16.mxu0 0
        %1668 = vmatpush2.bf16.xpose.msra.mxu0 0
        %1669 = vmatprep.subr.bf16.mxu0 0
        %1670 = vmatpush2.bf16.xpose.msra.mxu0 0
        %1671 = vmatprep.subr.bf16.mxu0 0
        %1672 = vmatpush2.bf16.xpose.msra.mxu0 0
        %1673 = vmatprep.subr.bf16.mxu0 0
        %1674 = vmatpush2.bf16.xpose.msra.mxu0 0
        %1675 = vmatprep.mubr.bf16.mxu0 0
        %1676 = vmatmul.mubr.bf16.gmra.mxu0 %v1638
        %v1677 = vpop.f32.mrf.mxu0
        %v1678 = vadd.f32 0.0, %v1677
        %v1679 = vpop.f32.mrf.mxu0
        %v1680 = vpop.f32.mrf.mxu0
        %v1681 = vpop.f32.mrf.mxu0
        %1682 = vdwg.mxu0
        %v1683 = vsel %vm804, %v1678, -inf
        %1684 = vmax.xlane.f32.xlu0 %v1683
        %v1685 = vpop.xlane.xlu0 %1684
        %v1686 = vsub.f32 %v1678, %v1685
        %v1687 = vmul.f32 %v1686, 1.442695
        %v1688 = vpow.pop %v1687
        %v1689 = vsel %vm804, %v1688, 0.0
        %1690 = vadd.xlane.f32.xlu0 %v1689
        %v1691 = vpop.xlane.xlu0 %1690
        %v1692 = vrcp.pop %v1691
        %v1693 = vmul.f32 %v1688, %v1692
        %v1694 = vpack.c.bf16 %v1693, %v1693
        %1695 = vrot.lane.b32.xlu0 %v1418, 80
        %v1696 = vpop.permute.xlu0 %1695
        %v1699 = vsel %vm821, %v1694, 0
        %1701 = vmatprep.subr.bf16.mxu0 0
        %1702 = vmatpush1.bf16.msra.mxu0 0
        %1703 = vmatprep.subr.bf16.mxu0 0
        %1704 = vmatpush1.bf16.msra.mxu0 0
        %1705 = vmatprep.subr.bf16.mxu0 0
        %1706 = vmatpush1.bf16.msra.mxu0 0
        %1707 = vmatprep.subr.bf16.mxu0 0
        %1708 = vmatpush1.bf16.msra.mxu0 0
        %1709 = vmatprep.subr.bf16.mxu0 0
        %1710 = vmatpush1.bf16.msra.mxu0 0
        %1711 = vmatprep.subr.bf16.mxu0 0
        %1712 = vmatpush1.bf16.msra.mxu0 0
        %1713 = vmatprep.subr.bf16.mxu0 0
        %1714 = vmatpush1.bf16.msra.mxu0 0
        %1715 = vmatprep.subr.bf16.mxu0 0
        %1716 = vmatpush1.bf16.msra.mxu0 %v1696
        %1717 = vmatprep.subr.bf16.mxu0 0
        %1718 = vmatpush2.bf16.msra.mxu0 0
        %1719 = vmatprep.subr.bf16.mxu0 0
        %1720 = vmatpush2.bf16.msra.mxu0 0
        %1721 = vmatprep.subr.bf16.mxu0 0
        %1722 = vmatpush2.bf16.msra.mxu0 0
        %1723 = vmatprep.subr.bf16.mxu0 0
        %1724 = vmatpush2.bf16.msra.mxu0 0
        %1725 = vmatprep.subr.bf16.mxu0 0
        %1726 = vmatpush2.bf16.msra.mxu0 0
        %1727 = vmatprep.subr.bf16.mxu0 0
        %1728 = vmatpush2.bf16.msra.mxu0 0
        %1729 = vmatprep.subr.bf16.mxu0 0
        %1730 = vmatpush2.bf16.msra.mxu0 0
        %1731 = vmatprep.subr.bf16.mxu0 0
        %1732 = vmatpush2.bf16.msra.mxu0 0
        %1733 = vmatprep.mubr.bf16.mxu0 0
        %1734 = vmatmul.mubr.bf16.gmra.mxu0 %v1699
        %v1735 = vpop.f32.mrf.mxu0
        %v1736 = vadd.f32 0.0, %v1735
        %v1737 = vpop.f32.mrf.mxu0
        %v1738 = vpop.f32.mrf.mxu0
        %v1739 = vpop.f32.mrf.mxu0
        %1740 = vdwg.mxu0
        %1741 = vrot.lane.b32.xlu0 %v1417, 104
        %v1742 = vpop.permute.xlu0 %1741
        %1743 = vrot.lane.b32.xlu0 %v1418, 104
        %v1744 = vpop.permute.xlu0 %1743
        %v1746 = vsel %vm757, %v1742, 0
        %v1749 = vsel %vm757, %v1744, 0
        %1751 = vmatprep.subr.bf16.mxu0 0
        %1752 = vmatpush1.bf16.xpose.msra.mxu0 0
        %1753 = vmatprep.subr.bf16.mxu0 0
        %1754 = vmatpush1.bf16.xpose.msra.mxu0 0
        %1755 = vmatprep.subr.bf16.mxu0 0
        %1756 = vmatpush1.bf16.xpose.msra.mxu0 0
        %1757 = vmatprep.subr.bf16.mxu0 0
        %1758 = vmatpush1.bf16.xpose.msra.mxu0 0
        %1759 = vmatprep.subr.bf16.mxu0 0
        %1760 = vmatpush1.bf16.xpose.msra.mxu0 0
        %1761 = vmatprep.subr.bf16.mxu0 0
        %1762 = vmatpush1.bf16.xpose.msra.mxu0 0
        %1763 = vmatprep.subr.bf16.mxu0 0
        %1764 = vmatpush1.bf16.xpose.msra.mxu0 0
        %1765 = vmatprep.subr.bf16.mxu0 0
        %1766 = vmatpush1.bf16.xpose.msra.mxu0 %v1749
        %1767 = vmatprep.subr.bf16.mxu0 0
        %1768 = vmatpush2.bf16.xpose.msra.mxu0 0
        %1769 = vmatprep.subr.bf16.mxu0 0
        %1770 = vmatpush2.bf16.xpose.msra.mxu0 0
        %1771 = vmatprep.subr.bf16.mxu0 0
        %1772 = vmatpush2.bf16.xpose.msra.mxu0 0
        %1773 = vmatprep.subr.bf16.mxu0 0
        %1774 = vmatpush2.bf16.xpose.msra.mxu0 0
        %1775 = vmatprep.subr.bf16.mxu0 0
        %1776 = vmatpush2.bf16.xpose.msra.mxu0 0
        %1777 = vmatprep.subr.bf16.mxu0 0
        %1778 = vmatpush2.bf16.xpose.msra.mxu0 0
        %1779 = vmatprep.subr.bf16.mxu0 0
        %1780 = vmatpush2.bf16.xpose.msra.mxu0 0
        %1781 = vmatprep.subr.bf16.mxu0 0
        %1782 = vmatpush2.bf16.xpose.msra.mxu0 0
        %1783 = vmatprep.mubr.bf16.mxu0 0
        %1784 = vmatmul.mubr.bf16.gmra.mxu0 %v1746
        %v1785 = vpop.f32.mrf.mxu0
        %v1786 = vadd.f32 0.0, %v1785
        %v1787 = vpop.f32.mrf.mxu0
        %v1788 = vpop.f32.mrf.mxu0
        %v1789 = vpop.f32.mrf.mxu0
        %1790 = vdwg.mxu0
        %v1791 = vsel %vm804, %v1786, -inf
        %1792 = vmax.xlane.f32.xlu0 %v1791
        %v1793 = vpop.xlane.xlu0 %1792
        %v1794 = vsub.f32 %v1786, %v1793
        %v1795 = vmul.f32 %v1794, 1.442695
        %v1796 = vpow.pop %v1795
        %v1797 = vsel %vm804, %v1796, 0.0
        %1798 = vadd.xlane.f32.xlu0 %v1797
        %v1799 = vpop.xlane.xlu0 %1798
        %v1800 = vrcp.pop %v1799
        %v1801 = vmul.f32 %v1796, %v1800
        %v1802 = vpack.c.bf16 %v1801, %v1801
        %1803 = vrot.lane.b32.xlu0 %v1418, 72
        %v1804 = vpop.permute.xlu0 %1803
        %v1807 = vsel %vm821, %v1802, 0
        %1809 = vmatprep.subr.bf16.mxu0 0
        %1810 = vmatpush1.bf16.msra.mxu0 0
        %1811 = vmatprep.subr.bf16.mxu0 0
        %1812 = vmatpush1.bf16.msra.mxu0 0
        %1813 = vmatprep.subr.bf16.mxu0 0
        %1814 = vmatpush1.bf16.msra.mxu0 0
        %1815 = vmatprep.subr.bf16.mxu0 0
        %1816 = vmatpush1.bf16.msra.mxu0 0
        %1817 = vmatprep.subr.bf16.mxu0 0
        %1818 = vmatpush1.bf16.msra.mxu0 0
        %1819 = vmatprep.subr.bf16.mxu0 0
        %1820 = vmatpush1.bf16.msra.mxu0 0
        %1821 = vmatprep.subr.bf16.mxu0 0
        %1822 = vmatpush1.bf16.msra.mxu0 0
        %1823 = vmatprep.subr.bf16.mxu0 0
        %1824 = vmatpush1.bf16.msra.mxu0 %v1804
        %1825 = vmatprep.subr.bf16.mxu0 0
        %1826 = vmatpush2.bf16.msra.mxu0 0
        %1827 = vmatprep.subr.bf16.mxu0 0
        %1828 = vmatpush2.bf16.msra.mxu0 0
        %1829 = vmatprep.subr.bf16.mxu0 0
        %1830 = vmatpush2.bf16.msra.mxu0 0
        %1831 = vmatprep.subr.bf16.mxu0 0
        %1832 = vmatpush2.bf16.msra.mxu0 0
        %1833 = vmatprep.subr.bf16.mxu0 0
        %1834 = vmatpush2.bf16.msra.mxu0 0
        %1835 = vmatprep.subr.bf16.mxu0 0
        %1836 = vmatpush2.bf16.msra.mxu0 0
        %1837 = vmatprep.subr.bf16.mxu0 0
        %1838 = vmatpush2.bf16.msra.mxu0 0
        %1839 = vmatprep.subr.bf16.mxu0 0
        %1840 = vmatpush2.bf16.msra.mxu0 0
        %1841 = vmatprep.mubr.bf16.mxu0 0
        %1842 = vmatmul.mubr.bf16.gmra.mxu0 %v1807
        %v1843 = vpop.f32.mrf.mxu0
        %v1844 = vadd.f32 0.0, %v1843
        %v1845 = vpop.f32.mrf.mxu0
        %v1846 = vpop.f32.mrf.mxu0
        %v1847 = vpop.f32.mrf.mxu0
        %1848 = vdwg.mxu0
        %1850 = vrot.lane.b32.xlu0 %v1628, 8
        %v1851 = vpop.permute.xlu0 %1850
        %1854 = vrot.lane.b32.xlu0 %v1736, 16
        %v1855 = vpop.permute.xlu0 %1854
        %1858 = vrot.lane.b32.xlu0 %v1844, 24
        %v1859 = vpop.permute.xlu0 %1858
        %v1861 = vsel %vm757, %v1519, %v1851
        %v1862 = vsel %vm821, %v1861, %v1855
        %v1863 = vsel %vm1204, %v1862, %v1859
        %v1864 = vpack.c.bf16 %v1863, %v1863
        %v1865 = vld [vmem:[%s15] sm:$0xf]
        %v1866 = vld [vmem:[%s15 + $0x4] sm:$0xf]
        %v1867 = vld [vmem:[%s15 + $0x8] sm:$0xf]
        %v1868 = vld [vmem:[%s15 + $0xc] sm:$0xf]
        %v1869 = vld [vmem:[%s16] sm:$0x1]
        %v1874 = vunpack.c.l.b16 %v1865
        %v1875 = vunpack.c.l.b16 %v1866
        %v1876 = vunpack.c.l.b16 %v1867
        %v1877 = vunpack.c.l.b16 %v1868
        %v1878 = vpack.c.b16 %v1875, %v1874
        %v1879 = vpack.c.b16 %v1877, %v1876
        %v1883 = vsel %vm642, %v1864, 0
        %1885 = vmatprep.subr.bf16.mxu0 0
        %1886 = vmatpush1.bf16.msra.mxu0 0
        %1887 = vmatprep.subr.bf16.mxu0 0
        %1888 = vmatpush1.bf16.msra.mxu0 0
        %1889 = vmatprep.subr.bf16.mxu0 0
        %1890 = vmatpush1.bf16.msra.mxu0 0
        %1891 = vmatprep.subr.bf16.mxu0 0
        %1892 = vmatpush1.bf16.msra.mxu0 0
        %1893 = vmatprep.subr.bf16.mxu0 0
        %1894 = vmatpush1.bf16.msra.mxu0 0
        %1895 = vmatprep.subr.bf16.mxu0 0
        %1896 = vmatpush1.bf16.msra.mxu0 0
        %1897 = vmatprep.subr.bf16.mxu0 0
        %1898 = vmatpush1.bf16.msra.mxu0 %v1879
        %1899 = vmatprep.subr.bf16.mxu0 0
        %1900 = vmatpush1.bf16.msra.mxu0 %v1878
        %1901 = vmatprep.subr.bf16.mxu0 0
        %1902 = vmatpush2.bf16.msra.mxu0 0
        %1903 = vmatprep.subr.bf16.mxu0 0
        %1904 = vmatpush2.bf16.msra.mxu0 0
        %1905 = vmatprep.subr.bf16.mxu0 0
        %1906 = vmatpush2.bf16.msra.mxu0 0
        %1907 = vmatprep.subr.bf16.mxu0 0
        %1908 = vmatpush2.bf16.msra.mxu0 0
        %1909 = vmatprep.subr.bf16.mxu0 0
        %1910 = vmatpush2.bf16.msra.mxu0 0
        %1911 = vmatprep.subr.bf16.mxu0 0
        %1912 = vmatpush2.bf16.msra.mxu0 0
        %1913 = vmatprep.subr.bf16.mxu0 0
        %1914 = vmatpush2.bf16.msra.mxu0 0
        %1915 = vmatprep.subr.bf16.mxu0 0
        %1916 = vmatpush2.bf16.msra.mxu0 0
        %1917 = vmatprep.mubr.bf16.mxu0 0
        %1918 = vmatmul.mubr.bf16.gmra.mxu0 %v1883
        %v1919 = vpop.f32.mrf.mxu0
        %v1920 = vadd.f32 %v1869, %v1919
        %v1921 = vpop.f32.mrf.mxu0
        %v1922 = vpop.f32.mrf.mxu0
        %v1923 = vpop.f32.mrf.mxu0
        %1924 = vdwg.mxu0
        %v1925 = vpack.c.bf16 %v1920, %v1920
        %v1926 = vld [vmem:[%s17] sm:$0xf]
        %v1927 = vld [vmem:[%s17 + $0x4] sm:$0xf]
        %v1928 = vld [vmem:[%s17 + $0x8] sm:$0xf]
        %v1929 = vld [vmem:[%s17 + $0xc] sm:$0xf]
        %v1930 = vld [vmem:[%s18] sm:$0x1]
        %v1935 = vunpack.c.l.b16 %v1926
        %v1936 = vunpack.c.l.b16 %v1927
        %v1937 = vunpack.c.l.b16 %v1928
        %v1938 = vunpack.c.l.b16 %v1929
        %v1939 = vpack.c.b16 %v1936, %v1935
        %v1940 = vpack.c.b16 %v1938, %v1937
        %v1944 = vsel %vm642, %v1925, 0
        %1946 = vmatprep.subr.bf16.mxu0 0
        %1947 = vmatpush1.bf16.msra.mxu0 0
        %1948 = vmatprep.subr.bf16.mxu0 0
        %1949 = vmatpush1.bf16.msra.mxu0 0
        %1950 = vmatprep.subr.bf16.mxu0 0
        %1951 = vmatpush1.bf16.msra.mxu0 0
        %1952 = vmatprep.subr.bf16.mxu0 0
        %1953 = vmatpush1.bf16.msra.mxu0 0
        %1954 = vmatprep.subr.bf16.mxu0 0
        %1955 = vmatpush1.bf16.msra.mxu0 0
        %1956 = vmatprep.subr.bf16.mxu0 0
        %1957 = vmatpush1.bf16.msra.mxu0 0
        %1958 = vmatprep.subr.bf16.mxu0 0
        %1959 = vmatpush1.bf16.msra.mxu0 %v1940
        %1960 = vmatprep.subr.bf16.mxu0 0
        %1961 = vmatpush1.bf16.msra.mxu0 %v1939
        %1962 = vmatprep.subr.bf16.mxu0 0
        %1963 = vmatpush2.bf16.msra.mxu0 0
        %1964 = vmatprep.subr.bf16.mxu0 0
        %1965 = vmatpush2.bf16.msra.mxu0 0
        %1966 = vmatprep.subr.bf16.mxu0 0
        %1967 = vmatpush2.bf16.msra.mxu0 0
        %1968 = vmatprep.subr.bf16.mxu0 0
        %1969 = vmatpush2.bf16.msra.mxu0 0
        %1970 = vmatprep.subr.bf16.mxu0 0
        %1971 = vmatpush2.bf16.msra.mxu0 0
        %1972 = vmatprep.subr.bf16.mxu0 0
        %1973 = vmatpush2.bf16.msra.mxu0 0
        %1974 = vmatprep.subr.bf16.mxu0 0
        %1975 = vmatpush2.bf16.msra.mxu0 0
        %1976 = vmatprep.subr.bf16.mxu0 0
        %1977 = vmatpush2.bf16.msra.mxu0 0
        %1978 = vmatprep.mubr.bf16.mxu0 0
        %1979 = vmatmul.mubr.bf16.gmra.mxu0 %v1944
        %v1980 = vpop.f32.mrf.mxu0
        %v1981 = vadd.f32 %v1930, %v1980
        %v1982 = vpop.f32.mrf.mxu0
        %v1983 = vpop.f32.mrf.mxu0
        %v1984 = vpop.f32.mrf.mxu0
        %1985 = vdwg.mxu0
        %vm1986 = vcmask 40960
        %1987 = vst.msk [vmem:[%s631] sm:$0x1] %vm1986, %v1981
        %s1988 = sand.u32 %s450, 1
        %s1989 = scalar_lea.sflag [#allocation3], %s1988
        %s1990 = sand.u32 %s450, 1
        %s1991 = scalar_lea.vmem [#allocation2], %s1990
        %s1992 = sand.u32 %s476, 1
        %s1993 = scalar_lea.sflag [#allocation5], %s1992
        %s1994 = sand.u32 %s476, 1
        %s1995 = scalar_lea.vmem [#allocation4], %s1994
        // Predicated region
        $region97: #{sas_perceiver_io_forward.13} parent=95 // pred_check
          %p1996 = pneg %p460
        $region98: #{sas_perceiver_io_forward.13} parent=95 // pred_check_branch
          %1998 = sbr.rel (%p1996) target = $region100
        $region99: #{sas_perceiver_io_forward.13} parent=95 // pred_region
          %s2000 = ssub.s32 16, 16
          %2001 = vsyncadd %s1989, %s2000
          %s2002 = smul.addr %s38, 16
          %s2003 = scalar_lea.hbm %s19, %s2002
          %s2005 = sshll.u32 %s1991, 4
          %s2006 = int_to_ptr.vmem [resolvable:$true] %s2005
          %2008 = dma.vmem_to_hbm [thread:$0]  %s2006, 16, %s2003, %s1989
        $region100: #{sas_perceiver_io_forward.13} parent=95 // pred_fallthru
          _
        // Predicated region
        $region101: #{sas_perceiver_io_forward.13} parent=95 // pred_check
          %p2009 = pneg %p486
        $region102: #{sas_perceiver_io_forward.13} parent=95 // pred_check_branch
          %2011 = sbr.rel (%p2009) target = $region104
        $region103: #{sas_perceiver_io_forward.13} parent=95 // pred_region
          %s2013 = ssub.s32 16, 16
          %2014 = vsyncadd %s1993, %s2013
          %s2015 = smul.addr %s38, 16
          %s2016 = scalar_lea.hbm %s20, %s2015
          %s2018 = sshll.u32 %s1995, 4
          %s2019 = int_to_ptr.vmem [resolvable:$true] %s2018
          %2021 = dma.vmem_to_hbm [thread:$0]  %s2019, 16, %s2016, %s1993
        $region104: #{sas_perceiver_io_forward.13} parent=95 // pred_fallthru
          _
      $region96: #{sas_perceiver_io_forward.13} parent=5 // pred_fallthru
        _
      %p2022 = scmp.le.s32.totalorder 2, %s33
      // Predicated region
      $region105: #{sas_perceiver_io_forward.13} parent=5 // pred_check
        %p2023 = pneg %p2022
      $region106: #{sas_perceiver_io_forward.13} parent=5 // pred_check_branch
        %2025 = sbr.rel (%p2023) target = $region108
      $region107: #{sas_perceiver_io_forward.13} parent=5 // pred_region
        %s2026 = ssub.s32 %s33, 2
        // Predicated region
        $region109: #{sas_perceiver_io_forward.13} parent=107 // pred_check
          %p2027 = pneg %p466
        $region110: #{sas_perceiver_io_forward.13} parent=107 // pred_check_branch
          %2029 = sbr.rel (%p2027) target = $region112
        $region111: #{sas_perceiver_io_forward.13} parent=107 // pred_region
          %s2030 = sand.u32 %s451, 1
          %s2031 = scalar_lea.sflag [#allocation3], %s2030
          %s2032 = sand.u32 %s451, 1
          %s2033 = scalar_lea.vmem [#allocation2], %s2032
          %2034 = dma.done %s2031, 16
        $region112: #{sas_perceiver_io_forward.13} parent=107 // pred_fallthru
          _
        // Predicated region
        $region113: #{sas_perceiver_io_forward.13} parent=107 // pred_check
          %p2035 = pneg %p492
        $region114: #{sas_perceiver_io_forward.13} parent=107 // pred_check_branch
          %2037 = sbr.rel (%p2035) target = $region116
        $region115: #{sas_perceiver_io_forward.13} parent=107 // pred_region
          %s2038 = sand.u32 %s477, 1
          %s2039 = scalar_lea.sflag [#allocation5], %s2038
          %s2040 = sand.u32 %s477, 1
          %s2041 = scalar_lea.vmem [#allocation4], %s2040
          %2042 = dma.done %s2039, 16
        $region116: #{sas_perceiver_io_forward.13} parent=107 // pred_fallthru
          _
      $region108: #{sas_perceiver_io_forward.13} parent=5 // pred_fallthru
        _
    $region6: #{sas_perceiver_io_forward.13} parent=1 // loop_footer
      %s37 = sadd.s32 1, %s33
    $region7: #{sas_perceiver_io_forward.13} parent=1 // loop_footer_branch
      %32 = sbr.rel target = $region3
    $region8: #{sas_perceiver_io_forward.13} parent=1 // loop_exit
      _
    %2043 = vsyncpa [#allocation3], 1
    %s2044 = scalar_lea.sflag [#allocation3], 1
    %2045 = vsyncpa %s2044, 1
    %2046 = vsyncpa [#allocation5], 1
    %s2047 = scalar_lea.sflag [#allocation5], 1
    %2048 = vsyncpa %s2047, 1

</llo_original>
